<compile_context>
chip_gen: v6e
topology: v6e:2x2x1
jax: 0.10.0
libtpu: 0.0.40
codegen_flags: <defaults>
</compile_context>

<pallas_src>
import functools
import math

import jax
import jax.numpy as jnp
from jax import lax
from jax.experimental import pallas as pl
from jax.experimental.pallas import tpu as pltpu


def _upsample_conv_kernel(x_ref, b_ref, a_ref, bias_ref, o_ref, *, C, H, W, Co):
    """One batch element: fused nearest-2x upsample + 3x3 conv (padding=1).

    x_ref    : (1, C, H, W)      input image (VMEM)
    b_ref    : (C, W, 3*Co*W2)   folded {weight, kw shift, 2x col-dup, pad} (resident)
    a_ref    : (3, H2, H)        0/1 {kh shift, 2x row-dup, pad} matrices   (resident)
    bias_ref : (1, Co*W2)        bias broadcast along lanes                 (resident)
    o_ref    : (1, H2, Co*W2)    lane-dense output slab
    """
    f32 = jnp.float32
    hi = lax.Precision.HIGHEST
    H2, W2 = 2 * H, 2 * W
    K = Co * W2

    # Stage 1: contract input channels & columns with the folded matrix.
    #   P[i, (kh, co, s)] = sum_{c,j} x[c,i,j] * B[c][j,(kh,co,s)]
    p = jnp.dot(x_ref[0, 0].astype(f32), b_ref[0],
                preferred_element_type=f32, precision=hi)
    for c in range(1, C):
        p = p + jnp.dot(x_ref[0, c].astype(f32), b_ref[c],
                        preferred_element_type=f32, precision=hi)

    # Stage 2: vertical taps + nearest-2x row duplication, one 0/1 matmul per kh.
    #   out[r, (co, s)] = sum_kh sum_i A[kh][r,i] * P[i, (kh,co,s)]
    # Lane slices of p land on multiples of K (=128 here): no relayout.
    acc = jnp.dot(a_ref[0], p[:, 0:K], preferred_element_type=f32, precision=hi)
    for kh in range(1, 3):
        acc = acc + jnp.dot(a_ref[kh], p[:, kh * K:(kh + 1) * K],
                            preferred_element_type=f32, precision=hi)

    # Single wide (H2, Co*W2) store, unmasked when Co*W2 is a multiple of 128.
    o_ref[0] = (acc + bias_ref[...]).astype(o_ref.dtype)


def upsample_forward(x_nchw, weight_oihw=None, bias=None, *, use_conv=True, dims=2):
    """Matches PyTorch Upsample.forward semantics for dims=2 (NCHW in/out)."""
    assert dims == 2, "only dims=2 implemented"
    N, C, H, W = x_nchw.shape
    H2, W2 = 2 * H, 2 * W

    if not use_conv:
        # Pure nearest-neighbour 2x upsample: a memory-layout op, leave to XLA.
        return jnp.repeat(jnp.repeat(x_nchw, 2, axis=2), 2, axis=3)

    Co = weight_oihw.shape[0]
    assert weight_oihw.shape == (Co, C, 3, 3)
    K = Co * W2
    f32 = jnp.float32
    w = weight_oihw.astype(f32)

    # ---- small constant matrices, built once in the wrapper, DMA'd once -----
    # Ucol[kw][j, s] = 1 iff input column j feeds padded-upsampled column s+kw,
    # i.e. s+kw in {2j+1, 2j+2}  (folds kw shift + 2x col dup + zero pad).
    s_i = jnp.arange(W2)[None, None, :]
    j_i = jnp.arange(W)[None, :, None]
    k_i = jnp.arange(3)[:, None, None]
    ucol = ((s_i + k_i == 2 * j_i + 1) | (s_i + k_i == 2 * j_i + 2)).astype(f32)  # (3,W,W2)
    # B[c][j, (kh, co, s)] = sum_kw w[co,c,kh,kw] * Ucol[kw][j,s]
    bmat = jnp.einsum("ocak,kjs->cjaos", w, ucol).reshape(C, W, 3 * K)
    # A[kh][r, i] = 1 iff input row i feeds padded-upsampled row r+kh.
    r_i = jnp.arange(H2)[None, :, None]
    i_i = jnp.arange(H)[None, None, :]
    a_i = jnp.arange(3)[:, None, None]
    amat = ((r_i + a_i == 2 * i_i + 1) | (r_i + a_i == 2 * i_i + 2)).astype(f32)  # (3,H2,H)
    bias_row = jnp.repeat(bias.astype(f32).reshape(Co), W2)[None, :]              # (1,K)

    kernel = functools.partial(_upsample_conv_kernel, C=C, H=H, W=W, Co=Co)

    itemsize = jnp.dtype(x_nchw.dtype).itemsize
    const_bytes = (C * W * 3 * K + 3 * H2 * H + K) * 4
    flops = N * (2 * C * H * W * 3 * K + 2 * 3 * H2 * H * K)
    cost = pl.CostEstimate(
        flops=int(flops), transcendentals=0,
        bytes_accessed=int((N * C * H * W + N * H2 * K) * itemsize + const_bytes))

    # VMEM: double-buffered x / out blocks + resident constants + temporaries.
    vmem_need = (2 * C * H * W * itemsize + 2 * H2 * K * itemsize
                 + const_bytes + (H * 3 * K + H2 * K) * 4)
    vmem_limit = int(min(64 * 2 ** 20, max(32 * 2 ** 20, 2 * vmem_need)))

    out_slab = pl.pallas_call(
        kernel,
        out_shape=jax.ShapeDtypeStruct((N, H2, K), x_nchw.dtype),
        grid_spec=pltpu.PrefetchScalarGridSpec(
            num_scalar_prefetch=0,
            grid=(N,),
            in_specs=[
                # One full image per batch element / grid step.
                pl.BlockSpec((1, C, H, W), lambda n: (n, 0, 0, 0)),
                # Grid-invariant constants: constant index_map -> resident in VMEM.
                pl.BlockSpec((C, W, 3 * K), lambda n: (0, 0, 0)),
                pl.BlockSpec((3, H2, H), lambda n: (0, 0, 0)),
                pl.BlockSpec((1, K), lambda n: (0, 0)),
            ],
            out_specs=pl.BlockSpec((1, H2, K), lambda n: (n, 0, 0)),
        ),
        compiler_params=pltpu.CompilerParams(
            dimension_semantics=("parallel",),
            vmem_limit_bytes=vmem_limit),
        cost_estimate=cost,
    )(x_nchw, bmat, amat, bias_row)

    # Lane-dense slab (N, H2, Co*W2) -> NCHW: pure layout plumbing in the wrapper.
    return out_slab.reshape(N, H2, Co, W2).transpose(0, 2, 1, 3)


if __name__ == "__main__":
    # Module config: channels=4, use_conv=True, dims=2, out_channels=4
    N, C, H, W = 2, 4, 16, 16
    Co = 4

    key = jax.random.PRNGKey(0)
    kx, kw_, kb = jax.random.split(key, 3)

    x = jax.random.normal(kx, (N, C, H, W), dtype=jnp.float32)

    # Deterministic init mimicking nn.Conv2d default (uniform, bound = 1/sqrt(fan_in)).
    fan_in = C * 3 * 3
    bound = 1.0 / math.sqrt(fan_in)
    weight = jax.random.uniform(kw_, (Co, C, 3, 3), jnp.float32, -bound, bound)
    bias = jax.random.uniform(kb, (Co,), jnp.float32, -bound, bound)

    out = jax.block_until_ready(upsample_forward(x, weight, bias))
    assert out.shape == (N, Co, 2 * H, 2 * W), out.shape

    # Reference: nearest 2x upsample + lax conv (NCHW / OIHW) + bias, full f32.
    x_up = jnp.repeat(jnp.repeat(x, 2, axis=2), 2, axis=3)
    ref = jax.lax.conv_general_dilated(
        x_up, weight, window_strides=(1, 1), padding=((1, 1), (1, 1)),
        dimension_numbers=("NCHW", "OIHW", "NCHW"),
        precision=lax.Precision.HIGHEST)
    ref = ref + bias.reshape(1, Co, 1, 1)

    err = float(jnp.max(jnp.abs(out - ref)))
    assert jnp.allclose(out, ref, rtol=1e-4, atol=1e-4), err
    print("KERNEL_OK")
</pallas_src>

<mosaic_0001>
module attributes {stable_mosaic.version = 11 : i64} {
  func.func @_upsample_conv_kernel(%arg0: i32, %arg1: memref<1x4x16x16xf32, #tpu.memory_space<vmem>>, %arg2: memref<4x16x384xf32, #tpu.memory_space<vmem>>, %arg3: memref<3x32x16xf32, #tpu.memory_space<vmem>>, %arg4: memref<1x128xf32, #tpu.memory_space<vmem>>, %arg5: memref<1x32x128xf32, #tpu.memory_space<vmem>>) attributes {dimension_semantics = [#tpu.dimension_semantics<parallel>], iteration_bounds = array<i64: 2>, scalar_prefetch = 0 : i64, scratch_operands = 0 : i64, tpu.core_type = #tpu.core_type<tc>, window_params = [{transform_indices = @transform_0, window_bounds = array<i64: 1, 4, 16, 16>}, {pipeline_mode = #tpu.pipeline_mode<synchronous>, transform_indices = @transform_1, window_bounds = array<i64: 4, 16, 384>}, {pipeline_mode = #tpu.pipeline_mode<synchronous>, transform_indices = @transform_2, window_bounds = array<i64: 3, 32, 16>}, {pipeline_mode = #tpu.pipeline_mode<synchronous>, transform_indices = @transform_3, window_bounds = array<i64: 1, 128>}, {transform_indices = @transform_4, window_bounds = array<i64: 1, 32, 128>}]} {
    %c0 = arith.constant 0 : index
    %c0_0 = arith.constant 0 : index
    %c0_1 = arith.constant 0 : index
    %c0_2 = arith.constant 0 : index
    %0 = vector.load %arg1[%c0, %c0_0, %c0_1, %c0_2] : memref<1x4x16x16xf32, #tpu.memory_space<vmem>>, vector<1x1x16x16xf32>
    %1 = vector.shape_cast %0 : vector<1x1x16x16xf32> to vector<16x16xf32>
    %c0_3 = arith.constant 0 : index
    %c0_4 = arith.constant 0 : index
    %c0_5 = arith.constant 0 : index
    %2 = vector.load %arg2[%c0_3, %c0_4, %c0_5] : memref<4x16x384xf32, #tpu.memory_space<vmem>>, vector<1x16x384xf32>
    %3 = vector.shape_cast %2 : vector<1x16x384xf32> to vector<16x384xf32>
    %cst = arith.constant dense<0.000000e+00> : vector<16x384xf32>
    %4 = tpu.matmul %1, %3, %cst {dimension_numbers = #tpu.dot_dimension_numbers<[1], [0], [0], [1], [0, 0, 1, 1], [], []>, precision = #tpu.contract_precision<fp32>} : vector<16x16xf32>, vector<16x384xf32>, vector<16x384xf32> -> vector<16x384xf32>
    %c0_6 = arith.constant 0 : index
    %c1 = arith.constant 1 : index
    %c0_7 = arith.constant 0 : index
    %c0_8 = arith.constant 0 : index
    %5 = vector.load %arg1[%c0_6, %c1, %c0_7, %c0_8] : memref<1x4x16x16xf32, #tpu.memory_space<vmem>>, vector<1x1x16x16xf32>
    %6 = vector.shape_cast %5 : vector<1x1x16x16xf32> to vector<16x16xf32>
    %c1_9 = arith.constant 1 : index
    %c0_10 = arith.constant 0 : index
    %c0_11 = arith.constant 0 : index
    %7 = vector.load %arg2[%c1_9, %c0_10, %c0_11] : memref<4x16x384xf32, #tpu.memory_space<vmem>>, vector<1x16x384xf32>
    %8 = vector.shape_cast %7 : vector<1x16x384xf32> to vector<16x384xf32>
    %cst_12 = arith.constant dense<0.000000e+00> : vector<16x384xf32>
    %9 = tpu.matmul %6, %8, %cst_12 {dimension_numbers = #tpu.dot_dimension_numbers<[1], [0], [0], [1], [0, 0, 1, 1], [], []>, precision = #tpu.contract_precision<fp32>} : vector<16x16xf32>, vector<16x384xf32>, vector<16x384xf32> -> vector<16x384xf32>
    %10 = arith.addf %4, %9 : vector<16x384xf32>
    %c0_13 = arith.constant 0 : index
    %c2 = arith.constant 2 : index
    %c0_14 = arith.constant 0 : index
    %c0_15 = arith.constant 0 : index
    %11 = vector.load %arg1[%c0_13, %c2, %c0_14, %c0_15] : memref<1x4x16x16xf32, #tpu.memory_space<vmem>>, vector<1x1x16x16xf32>
    %12 = vector.shape_cast %11 : vector<1x1x16x16xf32> to vector<16x16xf32>
    %c2_16 = arith.constant 2 : index
    %c0_17 = arith.constant 0 : index
    %c0_18 = arith.constant 0 : index
    %13 = vector.load %arg2[%c2_16, %c0_17, %c0_18] : memref<4x16x384xf32, #tpu.memory_space<vmem>>, vector<1x16x384xf32>
    %14 = vector.shape_cast %13 : vector<1x16x384xf32> to vector<16x384xf32>
    %cst_19 = arith.constant dense<0.000000e+00> : vector<16x384xf32>
    %15 = tpu.matmul %12, %14, %cst_19 {dimension_numbers = #tpu.dot_dimension_numbers<[1], [0], [0], [1], [0, 0, 1, 1], [], []>, precision = #tpu.contract_precision<fp32>} : vector<16x16xf32>, vector<16x384xf32>, vector<16x384xf32> -> vector<16x384xf32>
    %16 = arith.addf %10, %15 : vector<16x384xf32>
    %c0_20 = arith.constant 0 : index
    %c3 = arith.constant 3 : index
    %c0_21 = arith.constant 0 : index
    %c0_22 = arith.constant 0 : index
    %17 = vector.load %arg1[%c0_20, %c3, %c0_21, %c0_22] : memref<1x4x16x16xf32, #tpu.memory_space<vmem>>, vector<1x1x16x16xf32>
    %18 = vector.shape_cast %17 : vector<1x1x16x16xf32> to vector<16x16xf32>
    %c3_23 = arith.constant 3 : index
    %c0_24 = arith.constant 0 : index
    %c0_25 = arith.constant 0 : index
    %19 = vector.load %arg2[%c3_23, %c0_24, %c0_25] : memref<4x16x384xf32, #tpu.memory_space<vmem>>, vector<1x16x384xf32>
    %20 = vector.shape_cast %19 : vector<1x16x384xf32> to vector<16x384xf32>
    %cst_26 = arith.constant dense<0.000000e+00> : vector<16x384xf32>
    %21 = tpu.matmul %18, %20, %cst_26 {dimension_numbers = #tpu.dot_dimension_numbers<[1], [0], [0], [1], [0, 0, 1, 1], [], []>, precision = #tpu.contract_precision<fp32>} : vector<16x16xf32>, vector<16x384xf32>, vector<16x384xf32> -> vector<16x384xf32>
    %22 = arith.addf %16, %21 : vector<16x384xf32>
    %c0_27 = arith.constant 0 : index
    %c0_28 = arith.constant 0 : index
    %c0_29 = arith.constant 0 : index
    %23 = vector.load %arg3[%c0_27, %c0_28, %c0_29] : memref<3x32x16xf32, #tpu.memory_space<vmem>>, vector<1x32x16xf32>
    %24 = vector.shape_cast %23 : vector<1x32x16xf32> to vector<32x16xf32>
    %25 = vector.extract_strided_slice %22 {offsets = [0, 0], sizes = [16, 128], strides = [1, 1]} : vector<16x384xf32> to vector<16x128xf32>
    %cst_30 = arith.constant dense<0.000000e+00> : vector<32x128xf32>
    %26 = tpu.matmul %24, %25, %cst_30 {dimension_numbers = #tpu.dot_dimension_numbers<[1], [0], [0], [1], [0, 0, 1, 1], [], []>, precision = #tpu.contract_precision<fp32>} : vector<32x16xf32>, vector<16x128xf32>, vector<32x128xf32> -> vector<32x128xf32>
    %c1_31 = arith.constant 1 : index
    %c0_32 = arith.constant 0 : index
    %c0_33 = arith.constant 0 : index
    %27 = vector.load %arg3[%c1_31, %c0_32, %c0_33] : memref<3x32x16xf32, #tpu.memory_space<vmem>>, vector<1x32x16xf32>
    %28 = vector.shape_cast %27 : vector<1x32x16xf32> to vector<32x16xf32>
    %29 = vector.extract_strided_slice %22 {offsets = [0, 128], sizes = [16, 128], strides = [1, 1]} : vector<16x384xf32> to vector<16x128xf32>
    %cst_34 = arith.constant dense<0.000000e+00> : vector<32x128xf32>
    %30 = tpu.matmul %28, %29, %cst_34 {dimension_numbers = #tpu.dot_dimension_numbers<[1], [0], [0], [1], [0, 0, 1, 1], [], []>, precision = #tpu.contract_precision<fp32>} : vector<32x16xf32>, vector<16x128xf32>, vector<32x128xf32> -> vector<32x128xf32>
    %31 = arith.addf %26, %30 : vector<32x128xf32>
    %c2_35 = arith.constant 2 : index
    %c0_36 = arith.constant 0 : index
    %c0_37 = arith.constant 0 : index
    %32 = vector.load %arg3[%c2_35, %c0_36, %c0_37] : memref<3x32x16xf32, #tpu.memory_space<vmem>>, vector<1x32x16xf32>
    %33 = vector.shape_cast %32 : vector<1x32x16xf32> to vector<32x16xf32>
    %34 = vector.extract_strided_slice %22 {offsets = [0, 256], sizes = [16, 128], strides = [1, 1]} : vector<16x384xf32> to vector<16x128xf32>
    %cst_38 = arith.constant dense<0.000000e+00> : vector<32x128xf32>
    %35 = tpu.matmul %33, %34, %cst_38 {dimension_numbers = #tpu.dot_dimension_numbers<[1], [0], [0], [1], [0, 0, 1, 1], [], []>, precision = #tpu.contract_precision<fp32>} : vector<32x16xf32>, vector<16x128xf32>, vector<32x128xf32> -> vector<32x128xf32>
    %36 = arith.addf %31, %35 : vector<32x128xf32>
    %c0_39 = arith.constant 0 : index
    %c0_40 = arith.constant 0 : index
    %37 = vector.load %arg4[%c0_39, %c0_40] : memref<1x128xf32, #tpu.memory_space<vmem>>, vector<1x128xf32>
    %38 = vector.broadcast %37 : vector<1x128xf32> to vector<32x128xf32>
    %39 = arith.addf %36, %38 : vector<32x128xf32>
    %c0_41 = arith.constant 0 : index
    %c0_42 = arith.constant 0 : index
    %c0_43 = arith.constant 0 : index
    %40 = vector.load %arg5[%c0_41, %c0_42, %c0_43] : memref<1x32x128xf32, #tpu.memory_space<vmem>>, vector<1x32x128xf32>
    %41 = vector.shape_cast %40 : vector<1x32x128xf32> to vector<32x128xf32>
    %42 = vector.shape_cast %39 : vector<32x128xf32> to vector<1x32x128xf32>
    tpu.vector_store %arg5[%c0_41, %c0_42, %c0_43], %42 {strides = array<i32>} : memref<1x32x128xf32, #tpu.memory_space<vmem>>, vector<1x32x128xf32>,
    return
  }
  func.func @transform_0(%arg0: i32) -> (i32, i32, i32, i32) {
    %c0_i32 = arith.constant 0 : i32
    %c0_i32_0 = arith.constant 0 : i32
    %c0_i32_1 = arith.constant 0 : i32
    %c0_i32_2 = arith.constant 0 : i32
    return %arg0, %c0_i32, %c0_i32_0, %c0_i32_1 : i32, i32, i32, i32
  }
  func.func @transform_1(%arg0: i32) -> (i32, i32, i32) {
    %c0_i32 = arith.constant 0 : i32
    %c0_i32_0 = arith.constant 0 : i32
    %c0_i32_1 = arith.constant 0 : i32
    %c0_i32_2 = arith.constant 0 : i32
    return %c0_i32, %c0_i32_0, %c0_i32_1 : i32, i32, i32
  }
  func.func @transform_2(%arg0: i32) -> (i32, i32, i32) {
    %c0_i32 = arith.constant 0 : i32
    %c0_i32_0 = arith.constant 0 : i32
    %c0_i32_1 = arith.constant 0 : i32
    %c0_i32_2 = arith.constant 0 : i32
    return %c0_i32, %c0_i32_0, %c0_i32_1 : i32, i32, i32
  }
  func.func @transform_3(%arg0: i32) -> (i32, i32) {
    %c0_i32 = arith.constant 0 : i32
    %c0_i32_0 = arith.constant 0 : i32
    %c0_i32_1 = arith.constant 0 : i32
    return %c0_i32, %c0_i32_0 : i32, i32
  }
  func.func @transform_4(%arg0: i32) -> (i32, i32, i32) {
    %c0_i32 = arith.constant 0 : i32
    %c0_i32_0 = arith.constant 0 : i32
    %c0_i32_1 = arith.constant 0 : i32
    return %arg0, %c0_i32, %c0_i32_0 : i32, i32, i32
  }
}

</mosaic_0001>

<llo_original>
// kernel: tpu_custom_call.1
$region0: #{tpu_custom_call.1}
  #allocation0 [shape = 'u32[]', space=smem, size = 0x4, offset = 0x4, fixed_abs, tag = 'smem constant byte address 0x4 - core index']
  #allocation1 [shape = 'u32[144,128]{1,0:T(1,128)}', space=vmem, size = 0x12000, scoped, tag = 'internal scratch']
  %s0 = inlined_call_operand.vmem [shape: f32[2,4,16,16], index: 0, kind: input, shape index: {}]
  %s1 = inlined_call_operand.hbm [shape: f32[4,16,384], index: 1, kind: input, shape index: {}]
  %s2 = inlined_call_operand.vmem [shape: f32[3,32,16], index: 2, kind: input, shape index: {}]
  %s3 = inlined_call_operand.vmem [shape: f32[1,128], index: 3, kind: input, shape index: {}]
  %s4 = inlined_call_operand.hbm [shape: f32[2,32,128], index: 4, kind: output, shape index: {}]
  %s5 = sld [smem:[#allocation0]]
  $region53: #{tpu_custom_call.1} parent=0
    _
  %s7 = ssub.s32 1, %s5
  %s8 = scalar_select 0, %s7, %s5
  $region1: #{tpu_custom_call.1} parent=0
    #allocation2 [shape = 'u8[98304]{0}', space=vmem, size = 0x18000, scoped, tag = 'input window, operand 1, single buffered']
    #allocation3 [shape = 's32[2]{0}', space=sflag, size = 0x8, scoped, tag = 'scoped memory for tpu_custom_call.1']
    #allocation4 [shape = 's32[2]{0}', space=sflag, size = 0x8, scoped, tag = 'scoped memory for tpu_custom_call.1']
    #allocation5 [shape = 'u8[32768]{0}', space=vmem, size = 0x8000, scoped, tag = 'output window, operand 0']
    %9 = vsyncpa [#allocation3], 0
    %10 = vsyncpa [#allocation4], 0
    %s11 = scalar_lea.sflag [#allocation4], 1
    %12 = vsyncpa %s11, 0
    loop: start=0, step=1, limit=4
    $region2: #{tpu_custom_call.1} parent=1 // loop_pre_header
      _
    $region3: #{tpu_custom_call.1} parent=1 // loop_header
      %s14 = sphi 0, %s18
      %p15 = scmp.ge.s32.totalorder %s14, 4
      %s24 = sphi 0, %s26
      %s27 = sphi 0, %s24
      %s28 = sphi 0, %s27
      %s44 = sphi 0, %s28
      %s48 = sphi 0, %s48
      %s50 = sphi 0, %s48
      %s51 = sphi 0, %s50
      %s65 = sphi 0, %s51
      %s69 = sphi 0, %s69
      %s71 = sphi 0, %s69
      %s72 = sphi 0, %s71
      %s86 = sphi 0, %s72
      %s90 = sphi 0, %s90
      %s92 = sphi 0, %s90
      %s93 = sphi 0, %s92
      %s107 = sphi 0, %s93
      %s113 = sphi 0, %s115
      %s116 = sphi 0, %s113
      %s117 = sphi 0, %s116
      %s133 = sphi 0, %s117
    $region4: #{tpu_custom_call.1} parent=1 // loop_header_branch
      %17 = sbr.rel (%p15) target = $region8
    $region5: #{tpu_custom_call.1} parent=1 // loop_body
      %s19 = ssub.s32 %s14, 1
      %s20 = ssub.s32 %s14, 2
      %s21 = sadd.s32 %s14, 1
      %s22 = ssub.s32 %s14, %s21
      %p23 = scmp.eq.s32.totalorder %s22, 0
      %s25 = sadd.s32 %s24, 1
      %s26 = scalar_select %p23, %s24, %s25
      %p29 = pneg %p23
      %p30 = scmp.eq.s32.totalorder %s14, 1
      %p31 = por %p29, %p30
      %p32 = scmp.ne.s32.totalorder %s24, %s27
      %p33 = scmp.eq.s32.totalorder %s14, 0
      %p34 = por %p32, %p33
      %p35 = scmp.ne.s32.totalorder %s24, %s27
      %p36 = scmp.eq.s32.totalorder %s19, 1
      %p37 = por %p35, %p36
      %p38 = scmp.ne.s32.totalorder %s27, %s28
      %p39 = scmp.eq.s32.totalorder %s19, 0
      %p40 = por %p38, %p39
      %p41 = scmp.ne.s32.totalorder %s27, %s28
      %p42 = scmp.eq.s32.totalorder %s20, 1
      %p43 = por %p41, %p42
      %p45 = scmp.ne.s32.totalorder %s28, %s44
      %p46 = scmp.eq.s32.totalorder %s20, 0
      %p47 = por %p45, %p46
      %s49 = sadd.s32 %s48, 1
      %p52 = scmp.eq.s32.totalorder %s14, 1
      %p53 = scmp.ne.s32.totalorder %s48, %s50
      %p54 = scmp.eq.s32.totalorder %s14, 0
      %p55 = por %p53, %p54
      %p56 = scmp.ne.s32.totalorder %s48, %s50
      %p57 = scmp.eq.s32.totalorder %s19, 1
      %p58 = por %p56, %p57
      %p59 = scmp.ne.s32.totalorder %s50, %s51
      %p60 = scmp.eq.s32.totalorder %s19, 0
      %p61 = por %p59, %p60
      %p62 = scmp.ne.s32.totalorder %s50, %s51
      %p63 = scmp.eq.s32.totalorder %s20, 1
      %p64 = por %p62, %p63
      %p66 = scmp.ne.s32.totalorder %s51, %s65
      %p67 = scmp.eq.s32.totalorder %s20, 0
      %p68 = por %p66, %p67
      %s70 = sadd.s32 %s69, 1
      %p73 = scmp.eq.s32.totalorder %s14, 1
      %p74 = scmp.ne.s32.totalorder %s69, %s71
      %p75 = scmp.eq.s32.totalorder %s14, 0
      %p76 = por %p74, %p75
      %p77 = scmp.ne.s32.totalorder %s69, %s71
      %p78 = scmp.eq.s32.totalorder %s19, 1
      %p79 = por %p77, %p78
      %p80 = scmp.ne.s32.totalorder %s71, %s72
      %p81 = scmp.eq.s32.totalorder %s19, 0
      %p82 = por %p80, %p81
      %p83 = scmp.ne.s32.totalorder %s71, %s72
      %p84 = scmp.eq.s32.totalorder %s20, 1
      %p85 = por %p83, %p84
      %p87 = scmp.ne.s32.totalorder %s72, %s86
      %p88 = scmp.eq.s32.totalorder %s20, 0
      %p89 = por %p87, %p88
      %s91 = sadd.s32 %s90, 1
      %p94 = scmp.eq.s32.totalorder %s14, 1
      %p95 = scmp.ne.s32.totalorder %s90, %s92
      %p96 = scmp.eq.s32.totalorder %s14, 0
      %p97 = por %p95, %p96
      %p98 = scmp.ne.s32.totalorder %s90, %s92
      %p99 = scmp.eq.s32.totalorder %s19, 1
      %p100 = por %p98, %p99
      %p101 = scmp.ne.s32.totalorder %s92, %s93
      %p102 = scmp.eq.s32.totalorder %s19, 0
      %p103 = por %p101, %p102
      %p104 = scmp.ne.s32.totalorder %s92, %s93
      %p105 = scmp.eq.s32.totalorder %s20, 1
      %p106 = por %p104, %p105
      %p108 = scmp.ne.s32.totalorder %s93, %s107
      %p109 = scmp.eq.s32.totalorder %s20, 0
      %p110 = por %p108, %p109
      %s111 = ssub.s32 %s14, %s21
      %p112 = scmp.eq.s32.totalorder %s111, 0
      %s114 = sadd.s32 %s113, 1
      %s115 = scalar_select %p112, %s113, %s114
      %p118 = pneg %p112
      %p119 = scmp.eq.s32.totalorder %s14, 1
      %p120 = por %p118, %p119
      %p121 = scmp.ne.s32.totalorder %s113, %s116
      %p122 = scmp.eq.s32.totalorder %s14, 0
      %p123 = por %p121, %p122
      %p124 = scmp.ne.s32.totalorder %s113, %s116
      %p125 = scmp.eq.s32.totalorder %s19, 1
      %p126 = por %p124, %p125
      %p127 = scmp.ne.s32.totalorder %s116, %s117
      %p128 = scmp.eq.s32.totalorder %s19, 0
      %p129 = por %p127, %p128
      %p130 = scmp.ne.s32.totalorder %s116, %s117
      %p131 = scmp.eq.s32.totalorder %s20, 1
      %p132 = por %p130, %p131
      %p134 = scmp.ne.s32.totalorder %s117, %s133
      %p135 = scmp.eq.s32.totalorder %s20, 0
      %p136 = por %p134, %p135
      %p137 = scmp.le.s32.totalorder 1, %s14
      %p138 = scmp.lt.s32.totalorder %s14, 3
      %p139 = pnand %p137, %p138
      %p140 = pneg %p139
      // Predicated region
      $region9: #{tpu_custom_call.1} parent=5 // pred_check
        _
      $region10: #{tpu_custom_call.1} parent=5 // pred_check_branch
        %142 = sbr.rel (%p139) target = $region12
      $region11: #{tpu_custom_call.1} parent=5 // pred_region
        %s143 = ssub.s32 %s14, 1
        // Predicated region
        $region13: #{tpu_custom_call.1} parent=11 // pred_check
          %p144 = pneg %p61
        $region14: #{tpu_custom_call.1} parent=11 // pred_check_branch
          %146 = sbr.rel (%p144) target = $region16
        $region15: #{tpu_custom_call.1} parent=11 // pred_region
          %s148 = ssub.s32 3072, 3072
          %149 = vsyncadd [#allocation3], %s148
          %s150 = sshll.u32 [#allocation2], 4
          %s151 = int_to_ptr.vmem [resolvable:$true] %s150
          %156 = dma.hbm_to_vmem [thread:$0]  %s1, 3072, %s151, [#allocation3], 384, 384, 24
        $region16: #{tpu_custom_call.1} parent=11 // pred_fallthru
          _
        // Predicated region
        $region17: #{tpu_custom_call.1} parent=11 // pred_check
          %p157 = pneg %p82
        $region18: #{tpu_custom_call.1} parent=11 // pred_check_branch
          %159 = sbr.rel (%p157) target = $region20
        $region19: #{tpu_custom_call.1} parent=11 // pred_region
          _
        $region20: #{tpu_custom_call.1} parent=11 // pred_fallthru
          _
        // Predicated region
        $region21: #{tpu_custom_call.1} parent=11 // pred_check
          %p160 = pneg %p103
        $region22: #{tpu_custom_call.1} parent=11 // pred_check_branch
          %162 = sbr.rel (%p160) target = $region24
        $region23: #{tpu_custom_call.1} parent=11 // pred_region
          _
        $region24: #{tpu_custom_call.1} parent=11 // pred_fallthru
          _
      $region12: #{tpu_custom_call.1} parent=5 // pred_fallthru
        _
      %p163 = scmp.lt.s32.totalorder %s14, 2
      // Predicated region
      $region25: #{tpu_custom_call.1} parent=5 // pred_check
        %p164 = pneg %p163
      $region26: #{tpu_custom_call.1} parent=5 // pred_check_branch
        %166 = sbr.rel (%p164) target = $region28
      $region27: #{tpu_custom_call.1} parent=5 // pred_region
        // Predicated region
        $region29: #{tpu_custom_call.1} parent=27 // pred_check
          %p167 = pneg %p34
        $region30: #{tpu_custom_call.1} parent=27 // pred_check_branch
          %169 = sbr.rel (%p167) target = $region32
        $region31: #{tpu_custom_call.1} parent=27 // pred_region
          %p170 = scmp.lt.s32.totalorder %s14, 1
          %s171 = scalar_select %p170, %s14, 1
          %s172 = smul.addr %s171, 8
          %s173 = smul.addr %s172, 8
          %s174 = scalar_lea.vmem %s0, %s173
        $region32: #{tpu_custom_call.1} parent=27 // pred_fallthru
          _
      $region28: #{tpu_custom_call.1} parent=5 // pred_fallthru
        _
      %p175 = scmp.le.s32.totalorder 1, %s14
      %p176 = scmp.lt.s32.totalorder %s14, 3
      %p177 = pnand %p175, %p176
      %p178 = pneg %p177
      // Predicated region
      $region33: #{tpu_custom_call.1} parent=5 // pred_check
        _
      $region34: #{tpu_custom_call.1} parent=5 // pred_check_branch
        %180 = sbr.rel (%p177) target = $region36
      $region35: #{tpu_custom_call.1} parent=5 // pred_region
        %s181 = ssub.s32 %s14, 1
        // Predicated region
        $region37: #{tpu_custom_call.1} parent=35 // pred_check
          %p182 = pneg %p61
        $region38: #{tpu_custom_call.1} parent=35 // pred_check_branch
          %184 = sbr.rel (%p182) target = $region40
        $region39: #{tpu_custom_call.1} parent=35 // pred_region
          %185 = dma.done [#allocation3], 3072
        $region40: #{tpu_custom_call.1} parent=35 // pred_fallthru
          _
        %p186 = scmp.lt.s32.totalorder %s19, 1
        %s187 = scalar_select %p186, %s19, 1
        %s188 = smul.addr %s187, 8
        %s189 = smul.addr %s188, 8
        %s190 = scalar_lea.vmem %s0, %s189
        %p191 = pneg %p40
        %p192 = pneg %p37
        %p193 = pneg %p61
        %p194 = pneg %p58
        %p195 = pneg %p82
        %p196 = pneg %p79
        %p197 = pneg %p103
        %p198 = pneg %p100
        %p199 = pneg %p129
        %p200 = pneg %p126
        %s201 = sand.u32 %s116, 1
        %s202 = scalar_lea.sflag [#allocation4], %s201
        %s203 = sand.u32 %s116, 1
        %s204 = smul.addr %s203, 32
        %s205 = scalar_lea.vmem [#allocation5], %s204
        %p206 = scmp.lt.s32.totalorder %s19, 1
        %s207 = scalar_select %p206, %s19, 1
        %s208 = smul.addr %s207, 8
        %s209 = smul.addr %s208, 8
        %s210 = scalar_lea.vmem %s0, %s209
        %v211 = vld [vmem:[%s210] sm:$0xff]
        %v212 = vld [vmem:[%s210 + $0x8] sm:$0xff]
        %v213 = vld [vmem:[#allocation2] sm:$0xff]
        %v214 = vld [vmem:[#allocation2 + $0x8] sm:$0xff]
        %v215 = vld [vmem:[#allocation2 + $0x10] sm:$0xff]
        %v216 = vld [vmem:[#allocation2 + $0x18] sm:$0xff]
        %v217 = vld [vmem:[#allocation2 + $0x20] sm:$0xff]
        %v218 = vld [vmem:[#allocation2 + $0x28] sm:$0xff]
        %s219 = scalar_lea.vmem %s210, 16
        %v220 = vld [vmem:[%s219] sm:$0xff]
        %v221 = vld [vmem:[%s219 + $0x8] sm:$0xff]
        %s222 = scalar_lea.vmem [#allocation2], 48
        %v223 = vld [vmem:[%s222] sm:$0xff]
        %v224 = vld [vmem:[%s222 + $0x8] sm:$0xff]
        %v225 = vld [vmem:[%s222 + $0x10] sm:$0xff]
        %v226 = vld [vmem:[%s222 + $0x18] sm:$0xff]
        %v227 = vld [vmem:[%s222 + $0x20] sm:$0xff]
        %v228 = vld [vmem:[%s222 + $0x28] sm:$0xff]
        %vm229 = vcmask 130048
        %v231 = vsel %vm229, %v220, 0
        %v234 = vsel %vm229, %v221, 0
        %236 = vmatprep.subr.mxu0 0.0
        %237 = vmatpush1.msra.mxu0 0.0
        %238 = vmatprep.subr.mxu0 0.0
        %239 = vmatpush1.msra.mxu0 0.0
        %240 = vmatprep.subr.mxu0 0.0
        %241 = vmatpush1.msra.mxu0 0.0
        %242 = vmatprep.subr.mxu0 0.0
        %243 = vmatpush1.msra.mxu0 0.0
        %244 = vmatprep.subr.mxu0 0.0
        %245 = vmatpush1.msra.mxu0 0.0
        %246 = vmatprep.subr.mxu0 0.0
        %247 = vmatpush1.msra.mxu0 0.0
        %248 = vmatprep.subr.mxu0 0.0
        %249 = vmatpush1.msra.mxu0 0.0
        %250 = vmatprep.subr.mxu0 0.0
        %251 = vmatpush1.msra.mxu0 0.0
        %252 = vmatprep.subr.mxu0 0.0
        %253 = vmatpush1.msra.mxu0 0.0
        %254 = vmatprep.subr.mxu0 0.0
        %255 = vmatpush1.msra.mxu0 0.0
        %256 = vmatprep.subr.mxu0 0.0
        %257 = vmatpush1.msra.mxu0 0.0
        %258 = vmatprep.subr.mxu0 0.0
        %259 = vmatpush1.msra.mxu0 0.0
        %260 = vmatprep.subr.mxu0 0.0
        %261 = vmatpush1.msra.mxu0 0.0
        %262 = vmatprep.subr.mxu0 0.0
        %263 = vmatpush1.msra.mxu0 0.0
        %v264 = vand.u32 %v227, 4294901760
        %265 = vmatprep.subr.mxu0 %v264
        %v266 = vand.u32 %v226, 4294901760
        %267 = vmatpush1.msra.mxu0 %v266
        %v268 = vand.u32 %v224, 4294901760
        %269 = vmatprep.subr.mxu0 %v268
        %v270 = vand.u32 %v223, 4294901760
        %271 = vmatpush1.msra.mxu0 %v270
        %272 = vmatprep.subr.mxu0 0.0
        %273 = vmatpush2.msra.mxu0 0.0
        %274 = vmatprep.subr.mxu0 0.0
        %275 = vmatpush2.msra.mxu0 0.0
        %276 = vmatprep.subr.mxu0 0.0
        %277 = vmatpush2.msra.mxu0 0.0
        %278 = vmatprep.subr.mxu0 0.0
        %279 = vmatpush2.msra.mxu0 0.0
        %280 = vmatprep.subr.mxu0 0.0
        %281 = vmatpush2.msra.mxu0 0.0
        %282 = vmatprep.subr.mxu0 0.0
        %283 = vmatpush2.msra.mxu0 0.0
        %284 = vmatprep.subr.mxu0 0.0
        %285 = vmatpush2.msra.mxu0 0.0
        %286 = vmatprep.subr.mxu0 0.0
        %287 = vmatpush2.msra.mxu0 0.0
        %288 = vmatprep.subr.mxu0 0.0
        %289 = vmatpush2.msra.mxu0 0.0
        %290 = vmatprep.subr.mxu0 0.0
        %291 = vmatpush2.msra.mxu0 0.0
        %292 = vmatprep.subr.mxu0 0.0
        %293 = vmatpush2.msra.mxu0 0.0
        %294 = vmatprep.subr.mxu0 0.0
        %295 = vmatpush2.msra.mxu0 0.0
        %296 = vmatprep.subr.mxu0 0.0
        %297 = vmatpush2.msra.mxu0 0.0
        %298 = vmatprep.subr.mxu0 0.0
        %299 = vmatpush2.msra.mxu0 0.0
        %300 = vmatprep.subr.mxu0 0.0
        %301 = vmatpush2.msra.mxu0 0.0
        %302 = vmatprep.subr.mxu0 0.0
        %303 = vmatpush2.msra.mxu0 0.0
        %304 = vmatprep.mubr.f32.mxu0 0.0
        %v305 = vand.u32 %v231, 4294901760
        %v306 = vsub.f32 %v231, %v305
        %v307 = vand.u32 %v306, 4294901760
        %v308 = vsub.f32 %v306, %v307
        %v309 = vand.u32 %v308, 4294901760
        %310 = vmatmul.mubr.f32.gmra.mxu0 %v309
        %v311 = vpop.f32.mrf.mxu0
        %v312 = vadd.f32 0.0, %v311
        %v313 = vpop.f32.mrf.mxu0
        %v314 = vadd.f32 0.0, %v313
        %315 = vmatprep.mubr.f32.mxu0 0.0
        %v316 = vand.u32 %v234, 4294901760
        %v317 = vsub.f32 %v234, %v316
        %v318 = vand.u32 %v317, 4294901760
        %v319 = vsub.f32 %v317, %v318
        %v320 = vand.u32 %v319, 4294901760
        %321 = vmatmul.mubr.f32.gmra.mxu0 %v320
        %v322 = vpop.f32.mrf.mxu0
        %v323 = vadd.f32 0.0, %v322
        %v324 = vpop.f32.mrf.mxu0
        %v325 = vadd.f32 0.0, %v324
        %326 = vdwg.mxu0
        %327 = vmatprep.subr.mxu0 0.0
        %328 = vmatpush1.msra.mxu0 0.0
        %329 = vmatprep.subr.mxu0 0.0
        %330 = vmatpush1.msra.mxu0 0.0
        %331 = vmatprep.subr.mxu0 0.0
        %332 = vmatpush1.msra.mxu0 0.0
        %333 = vmatprep.subr.mxu0 0.0
        %334 = vmatpush1.msra.mxu0 0.0
        %335 = vmatprep.subr.mxu0 0.0
        %336 = vmatpush1.msra.mxu0 0.0
        %337 = vmatprep.subr.mxu0 0.0
        %338 = vmatpush1.msra.mxu0 0.0
        %339 = vmatprep.subr.mxu0 0.0
        %340 = vmatpush1.msra.mxu0 0.0
        %341 = vmatprep.subr.mxu0 0.0
        %342 = vmatpush1.msra.mxu0 0.0
        %343 = vmatprep.subr.mxu0 0.0
        %344 = vmatpush1.msra.mxu0 0.0
        %345 = vmatprep.subr.mxu0 0.0
        %346 = vmatpush1.msra.mxu0 0.0
        %347 = vmatprep.subr.mxu0 0.0
        %348 = vmatpush1.msra.mxu0 0.0
        %349 = vmatprep.subr.mxu0 0.0
        %350 = vmatpush1.msra.mxu0 0.0
        %351 = vmatprep.subr.mxu0 0.0
        %352 = vmatpush1.msra.mxu0 0.0
        %353 = vmatprep.subr.mxu0 0.0
        %354 = vmatpush1.msra.mxu0 0.0
        %v355 = vand.u32 %v227, 4294901760
        %v356 = vsub.f32 %v227, %v355
        %v357 = vand.u32 %v356, 4294901760
        %v358 = vsub.f32 %v356, %v357
        %v359 = vand.u32 %v358, 4294901760
        %360 = vmatprep.subr.mxu0 %v359
        %v361 = vand.u32 %v226, 4294901760
        %v362 = vsub.f32 %v226, %v361
        %v363 = vand.u32 %v362, 4294901760
        %v364 = vsub.f32 %v362, %v363
        %v365 = vand.u32 %v364, 4294901760
        %366 = vmatpush1.msra.mxu0 %v365
        %v367 = vand.u32 %v224, 4294901760
        %v368 = vsub.f32 %v224, %v367
        %v369 = vand.u32 %v368, 4294901760
        %v370 = vsub.f32 %v368, %v369
        %v371 = vand.u32 %v370, 4294901760
        %372 = vmatprep.subr.mxu0 %v371
        %v373 = vand.u32 %v223, 4294901760
        %v374 = vsub.f32 %v223, %v373
        %v375 = vand.u32 %v374, 4294901760
        %v376 = vsub.f32 %v374, %v375
        %v377 = vand.u32 %v376, 4294901760
        %378 = vmatpush1.msra.mxu0 %v377
        %379 = vmatprep.subr.mxu0 0.0
        %380 = vmatpush2.msra.mxu0 0.0
        %381 = vmatprep.subr.mxu0 0.0
        %382 = vmatpush2.msra.mxu0 0.0
        %383 = vmatprep.subr.mxu0 0.0
        %384 = vmatpush2.msra.mxu0 0.0
        %385 = vmatprep.subr.mxu0 0.0
        %386 = vmatpush2.msra.mxu0 0.0
        %387 = vmatprep.subr.mxu0 0.0
        %388 = vmatpush2.msra.mxu0 0.0
        %389 = vmatprep.subr.mxu0 0.0
        %390 = vmatpush2.msra.mxu0 0.0
        %391 = vmatprep.subr.mxu0 0.0
        %392 = vmatpush2.msra.mxu0 0.0
        %393 = vmatprep.subr.mxu0 0.0
        %394 = vmatpush2.msra.mxu0 0.0
        %395 = vmatprep.subr.mxu0 0.0
        %396 = vmatpush2.msra.mxu0 0.0
        %397 = vmatprep.subr.mxu0 0.0
        %398 = vmatpush2.msra.mxu0 0.0
        %399 = vmatprep.subr.mxu0 0.0
        %400 = vmatpush2.msra.mxu0 0.0
        %401 = vmatprep.subr.mxu0 0.0
        %402 = vmatpush2.msra.mxu0 0.0
        %403 = vmatprep.subr.mxu0 0.0
        %404 = vmatpush2.msra.mxu0 0.0
        %405 = vmatprep.subr.mxu0 0.0
        %406 = vmatpush2.msra.mxu0 0.0
        %407 = vmatprep.subr.mxu0 0.0
        %408 = vmatpush2.msra.mxu0 0.0
        %409 = vmatprep.subr.mxu0 0.0
        %410 = vmatpush2.msra.mxu0 0.0
        %411 = vmatprep.mubr.f32.mxu0 0.0
        %v412 = vand.u32 %v231, 4294901760
        %413 = vmatmul.mubr.f32.gmra.mxu0 %v412
        %v414 = vpop.f32.mrf.mxu0
        %v415 = vadd.f32 %v312, %v414
        %v416 = vpop.f32.mrf.mxu0
        %v417 = vadd.f32 %v314, %v416
        %418 = vmatprep.mubr.f32.mxu0 0.0
        %v419 = vand.u32 %v234, 4294901760
        %420 = vmatmul.mubr.f32.gmra.mxu0 %v419
        %v421 = vpop.f32.mrf.mxu0
        %v422 = vadd.f32 %v323, %v421
        %v423 = vpop.f32.mrf.mxu0
        %v424 = vadd.f32 %v325, %v423
        %425 = vdwg.mxu0
        %426 = vmatprep.subr.mxu0 0.0
        %427 = vmatpush1.msra.mxu0 0.0
        %428 = vmatprep.subr.mxu0 0.0
        %429 = vmatpush1.msra.mxu0 0.0
        %430 = vmatprep.subr.mxu0 0.0
        %431 = vmatpush1.msra.mxu0 0.0
        %432 = vmatprep.subr.mxu0 0.0
        %433 = vmatpush1.msra.mxu0 0.0
        %434 = vmatprep.subr.mxu0 0.0
        %435 = vmatpush1.msra.mxu0 0.0
        %436 = vmatprep.subr.mxu0 0.0
        %437 = vmatpush1.msra.mxu0 0.0
        %438 = vmatprep.subr.mxu0 0.0
        %439 = vmatpush1.msra.mxu0 0.0
        %440 = vmatprep.subr.mxu0 0.0
        %441 = vmatpush1.msra.mxu0 0.0
        %442 = vmatprep.subr.mxu0 0.0
        %443 = vmatpush1.msra.mxu0 0.0
        %444 = vmatprep.subr.mxu0 0.0
        %445 = vmatpush1.msra.mxu0 0.0
        %446 = vmatprep.subr.mxu0 0.0
        %447 = vmatpush1.msra.mxu0 0.0
        %448 = vmatprep.subr.mxu0 0.0
        %449 = vmatpush1.msra.mxu0 0.0
        %450 = vmatprep.subr.mxu0 0.0
        %451 = vmatpush1.msra.mxu0 0.0
        %452 = vmatprep.subr.mxu0 0.0
        %453 = vmatpush1.msra.mxu0 0.0
        %v454 = vand.u32 %v227, 4294901760
        %v455 = vsub.f32 %v227, %v454
        %456 = vmatprep.subr.mxu0 %v455
        %v457 = vand.u32 %v226, 4294901760
        %v458 = vsub.f32 %v226, %v457
        %459 = vmatpush1.msra.mxu0 %v458
        %v460 = vand.u32 %v224, 4294901760
        %v461 = vsub.f32 %v224, %v460
        %462 = vmatprep.subr.mxu0 %v461
        %v463 = vand.u32 %v223, 4294901760
        %v464 = vsub.f32 %v223, %v463
        %465 = vmatpush1.msra.mxu0 %v464
        %466 = vmatprep.subr.mxu0 0.0
        %467 = vmatpush2.msra.mxu0 0.0
        %468 = vmatprep.subr.mxu0 0.0
        %469 = vmatpush2.msra.mxu0 0.0
        %470 = vmatprep.subr.mxu0 0.0
        %471 = vmatpush2.msra.mxu0 0.0
        %472 = vmatprep.subr.mxu0 0.0
        %473 = vmatpush2.msra.mxu0 0.0
        %474 = vmatprep.subr.mxu0 0.0
        %475 = vmatpush2.msra.mxu0 0.0
        %476 = vmatprep.subr.mxu0 0.0
        %477 = vmatpush2.msra.mxu0 0.0
        %478 = vmatprep.subr.mxu0 0.0
        %479 = vmatpush2.msra.mxu0 0.0
        %480 = vmatprep.subr.mxu0 0.0
        %481 = vmatpush2.msra.mxu0 0.0
        %482 = vmatprep.subr.mxu0 0.0
        %483 = vmatpush2.msra.mxu0 0.0
        %484 = vmatprep.subr.mxu0 0.0
        %485 = vmatpush2.msra.mxu0 0.0
        %486 = vmatprep.subr.mxu0 0.0
        %487 = vmatpush2.msra.mxu0 0.0
        %488 = vmatprep.subr.mxu0 0.0
        %489 = vmatpush2.msra.mxu0 0.0
        %490 = vmatprep.subr.mxu0 0.0
        %491 = vmatpush2.msra.mxu0 0.0
        %492 = vmatprep.subr.mxu0 0.0
        %493 = vmatpush2.msra.mxu0 0.0
        %494 = vmatprep.subr.mxu0 0.0
        %495 = vmatpush2.msra.mxu0 0.0
        %496 = vmatprep.subr.mxu0 0.0
        %497 = vmatpush2.msra.mxu0 0.0
        %498 = vmatprep.mubr.f32.mxu0 0.0
        %v499 = vand.u32 %v231, 4294901760
        %v500 = vsub.f32 %v231, %v499
        %501 = vmatmul.mubr.f32.gmra.mxu0 %v500
        %v502 = vpop.f32.mrf.mxu0
        %v503 = vadd.f32 %v415, %v502
        %v504 = vpop.f32.mrf.mxu0
        %v505 = vadd.f32 %v417, %v504
        %506 = vmatprep.mubr.f32.mxu0 0.0
        %v507 = vand.u32 %v234, 4294901760
        %v508 = vsub.f32 %v234, %v507
        %509 = vmatmul.mubr.f32.gmra.mxu0 %v508
        %v510 = vpop.f32.mrf.mxu0
        %v511 = vadd.f32 %v422, %v510
        %v512 = vpop.f32.mrf.mxu0
        %v513 = vadd.f32 %v424, %v512
        %514 = vdwg.mxu0
        %515 = vmatprep.subr.mxu0 0.0
        %516 = vmatpush1.msra.mxu0 0.0
        %517 = vmatprep.subr.mxu0 0.0
        %518 = vmatpush1.msra.mxu0 0.0
        %519 = vmatprep.subr.mxu0 0.0
        %520 = vmatpush1.msra.mxu0 0.0
        %521 = vmatprep.subr.mxu0 0.0
        %522 = vmatpush1.msra.mxu0 0.0
        %523 = vmatprep.subr.mxu0 0.0
        %524 = vmatpush1.msra.mxu0 0.0
        %525 = vmatprep.subr.mxu0 0.0
        %526 = vmatpush1.msra.mxu0 0.0
        %527 = vmatprep.subr.mxu0 0.0
        %528 = vmatpush1.msra.mxu0 0.0
        %529 = vmatprep.subr.mxu0 0.0
        %530 = vmatpush1.msra.mxu0 0.0
        %531 = vmatprep.subr.mxu0 0.0
        %532 = vmatpush1.msra.mxu0 0.0
        %533 = vmatprep.subr.mxu0 0.0
        %534 = vmatpush1.msra.mxu0 0.0
        %535 = vmatprep.subr.mxu0 0.0
        %536 = vmatpush1.msra.mxu0 0.0
        %537 = vmatprep.subr.mxu0 0.0
        %538 = vmatpush1.msra.mxu0 0.0
        %539 = vmatprep.subr.mxu0 0.0
        %540 = vmatpush1.msra.mxu0 0.0
        %541 = vmatprep.subr.mxu0 0.0
        %542 = vmatpush1.msra.mxu0 0.0
        %v543 = vand.u32 %v227, 4294901760
        %544 = vmatprep.subr.mxu0 %v543
        %v545 = vand.u32 %v226, 4294901760
        %546 = vmatpush1.msra.mxu0 %v545
        %v547 = vand.u32 %v224, 4294901760
        %548 = vmatprep.subr.mxu0 %v547
        %v549 = vand.u32 %v223, 4294901760
        %550 = vmatpush1.msra.mxu0 %v549
        %551 = vmatprep.subr.mxu0 0.0
        %552 = vmatpush2.msra.mxu0 0.0
        %553 = vmatprep.subr.mxu0 0.0
        %554 = vmatpush2.msra.mxu0 0.0
        %555 = vmatprep.subr.mxu0 0.0
        %556 = vmatpush2.msra.mxu0 0.0
        %557 = vmatprep.subr.mxu0 0.0
        %558 = vmatpush2.msra.mxu0 0.0
        %559 = vmatprep.subr.mxu0 0.0
        %560 = vmatpush2.msra.mxu0 0.0
        %561 = vmatprep.subr.mxu0 0.0
        %562 = vmatpush2.msra.mxu0 0.0
        %563 = vmatprep.subr.mxu0 0.0
        %564 = vmatpush2.msra.mxu0 0.0
        %565 = vmatprep.subr.mxu0 0.0
        %566 = vmatpush2.msra.mxu0 0.0
        %567 = vmatprep.subr.mxu0 0.0
        %568 = vmatpush2.msra.mxu0 0.0
        %569 = vmatprep.subr.mxu0 0.0
        %570 = vmatpush2.msra.mxu0 0.0
        %571 = vmatprep.subr.mxu0 0.0
        %572 = vmatpush2.msra.mxu0 0.0
        %573 = vmatprep.subr.mxu0 0.0
        %574 = vmatpush2.msra.mxu0 0.0
        %575 = vmatprep.subr.mxu0 0.0
        %576 = vmatpush2.msra.mxu0 0.0
        %577 = vmatprep.subr.mxu0 0.0
        %578 = vmatpush2.msra.mxu0 0.0
        %579 = vmatprep.subr.mxu0 0.0
        %580 = vmatpush2.msra.mxu0 0.0
        %581 = vmatprep.subr.mxu0 0.0
        %582 = vmatpush2.msra.mxu0 0.0
        %583 = vmatprep.mubr.f32.mxu0 0.0
        %v584 = vand.u32 %v231, 4294901760
        %v585 = vsub.f32 %v231, %v584
        %v586 = vand.u32 %v585, 4294901760
        %587 = vmatmul.mubr.f32.gmra.mxu0 %v586
        %v588 = vpop.f32.mrf.mxu0
        %v589 = vadd.f32 %v503, %v588
        %v590 = vpop.f32.mrf.mxu0
        %v591 = vadd.f32 %v505, %v590
        %592 = vmatprep.mubr.f32.mxu0 0.0
        %v593 = vand.u32 %v234, 4294901760
        %v594 = vsub.f32 %v234, %v593
        %v595 = vand.u32 %v594, 4294901760
        %596 = vmatmul.mubr.f32.gmra.mxu0 %v595
        %v597 = vpop.f32.mrf.mxu0
        %v598 = vadd.f32 %v511, %v597
        %v599 = vpop.f32.mrf.mxu0
        %v600 = vadd.f32 %v513, %v599
        %601 = vdwg.mxu0
        %602 = vmatprep.subr.mxu0 0.0
        %603 = vmatpush1.msra.mxu0 0.0
        %604 = vmatprep.subr.mxu0 0.0
        %605 = vmatpush1.msra.mxu0 0.0
        %606 = vmatprep.subr.mxu0 0.0
        %607 = vmatpush1.msra.mxu0 0.0
        %608 = vmatprep.subr.mxu0 0.0
        %609 = vmatpush1.msra.mxu0 0.0
        %610 = vmatprep.subr.mxu0 0.0
        %611 = vmatpush1.msra.mxu0 0.0
        %612 = vmatprep.subr.mxu0 0.0
        %613 = vmatpush1.msra.mxu0 0.0
        %614 = vmatprep.subr.mxu0 0.0
        %615 = vmatpush1.msra.mxu0 0.0
        %616 = vmatprep.subr.mxu0 0.0
        %617 = vmatpush1.msra.mxu0 0.0
        %618 = vmatprep.subr.mxu0 0.0
        %619 = vmatpush1.msra.mxu0 0.0
        %620 = vmatprep.subr.mxu0 0.0
        %621 = vmatpush1.msra.mxu0 0.0
        %622 = vmatprep.subr.mxu0 0.0
        %623 = vmatpush1.msra.mxu0 0.0
        %624 = vmatprep.subr.mxu0 0.0
        %625 = vmatpush1.msra.mxu0 0.0
        %626 = vmatprep.subr.mxu0 0.0
        %627 = vmatpush1.msra.mxu0 0.0
        %628 = vmatprep.subr.mxu0 0.0
        %629 = vmatpush1.msra.mxu0 0.0
        %v630 = vand.u32 %v227, 4294901760
        %v631 = vsub.f32 %v227, %v630
        %v632 = vand.u32 %v631, 4294901760
        %633 = vmatprep.subr.mxu0 %v632
        %v634 = vand.u32 %v226, 4294901760
        %v635 = vsub.f32 %v226, %v634
        %v636 = vand.u32 %v635, 4294901760
        %637 = vmatpush1.msra.mxu0 %v636
        %v638 = vand.u32 %v224, 4294901760
        %v639 = vsub.f32 %v224, %v638
        %v640 = vand.u32 %v639, 4294901760
        %641 = vmatprep.subr.mxu0 %v640
        %v642 = vand.u32 %v223, 4294901760
        %v643 = vsub.f32 %v223, %v642
        %v644 = vand.u32 %v643, 4294901760
        %645 = vmatpush1.msra.mxu0 %v644
        %646 = vmatprep.subr.mxu0 0.0
        %647 = vmatpush2.msra.mxu0 0.0
        %648 = vmatprep.subr.mxu0 0.0
        %649 = vmatpush2.msra.mxu0 0.0
        %650 = vmatprep.subr.mxu0 0.0
        %651 = vmatpush2.msra.mxu0 0.0
        %652 = vmatprep.subr.mxu0 0.0
        %653 = vmatpush2.msra.mxu0 0.0
        %654 = vmatprep.subr.mxu0 0.0
        %655 = vmatpush2.msra.mxu0 0.0
        %656 = vmatprep.subr.mxu0 0.0
        %657 = vmatpush2.msra.mxu0 0.0
        %658 = vmatprep.subr.mxu0 0.0
        %659 = vmatpush2.msra.mxu0 0.0
        %660 = vmatprep.subr.mxu0 0.0
        %661 = vmatpush2.msra.mxu0 0.0
        %662 = vmatprep.subr.mxu0 0.0
        %663 = vmatpush2.msra.mxu0 0.0
        %664 = vmatprep.subr.mxu0 0.0
        %665 = vmatpush2.msra.mxu0 0.0
        %666 = vmatprep.subr.mxu0 0.0
        %667 = vmatpush2.msra.mxu0 0.0
        %668 = vmatprep.subr.mxu0 0.0
        %669 = vmatpush2.msra.mxu0 0.0
        %670 = vmatprep.subr.mxu0 0.0
        %671 = vmatpush2.msra.mxu0 0.0
        %672 = vmatprep.subr.mxu0 0.0
        %673 = vmatpush2.msra.mxu0 0.0
        %674 = vmatprep.subr.mxu0 0.0
        %675 = vmatpush2.msra.mxu0 0.0
        %676 = vmatprep.subr.mxu0 0.0
        %677 = vmatpush2.msra.mxu0 0.0
        %678 = vmatprep.mubr.f32.mxu0 0.0
        %v679 = vand.u32 %v231, 4294901760
        %680 = vmatmul.mubr.f32.gmra.mxu0 %v679
        %v681 = vpop.f32.mrf.mxu0
        %v682 = vadd.f32 %v589, %v681
        %v683 = vpop.f32.mrf.mxu0
        %v684 = vadd.f32 %v591, %v683
        %685 = vmatprep.mubr.f32.mxu0 0.0
        %v686 = vand.u32 %v234, 4294901760
        %687 = vmatmul.mubr.f32.gmra.mxu0 %v686
        %v688 = vpop.f32.mrf.mxu0
        %v689 = vadd.f32 %v598, %v688
        %v690 = vpop.f32.mrf.mxu0
        %v691 = vadd.f32 %v600, %v690
        %692 = vdwg.mxu0
        %693 = vmatprep.subr.mxu0 0.0
        %694 = vmatpush1.msra.mxu0 0.0
        %695 = vmatprep.subr.mxu0 0.0
        %696 = vmatpush1.msra.mxu0 0.0
        %697 = vmatprep.subr.mxu0 0.0
        %698 = vmatpush1.msra.mxu0 0.0
        %699 = vmatprep.subr.mxu0 0.0
        %700 = vmatpush1.msra.mxu0 0.0
        %701 = vmatprep.subr.mxu0 0.0
        %702 = vmatpush1.msra.mxu0 0.0
        %703 = vmatprep.subr.mxu0 0.0
        %704 = vmatpush1.msra.mxu0 0.0
        %705 = vmatprep.subr.mxu0 0.0
        %706 = vmatpush1.msra.mxu0 0.0
        %707 = vmatprep.subr.mxu0 0.0
        %708 = vmatpush1.msra.mxu0 0.0
        %709 = vmatprep.subr.mxu0 0.0
        %710 = vmatpush1.msra.mxu0 0.0
        %711 = vmatprep.subr.mxu0 0.0
        %712 = vmatpush1.msra.mxu0 0.0
        %713 = vmatprep.subr.mxu0 0.0
        %714 = vmatpush1.msra.mxu0 0.0
        %715 = vmatprep.subr.mxu0 0.0
        %716 = vmatpush1.msra.mxu0 0.0
        %717 = vmatprep.subr.mxu0 0.0
        %718 = vmatpush1.msra.mxu0 0.0
        %719 = vmatprep.subr.mxu0 0.0
        %720 = vmatpush1.msra.mxu0 0.0
        %v721 = vand.u32 %v227, 4294901760
        %722 = vmatprep.subr.mxu0 %v721
        %v723 = vand.u32 %v226, 4294901760
        %724 = vmatpush1.msra.mxu0 %v723
        %v725 = vand.u32 %v224, 4294901760
        %726 = vmatprep.subr.mxu0 %v725
        %v727 = vand.u32 %v223, 4294901760
        %728 = vmatpush1.msra.mxu0 %v727
        %729 = vmatprep.subr.mxu0 0.0
        %730 = vmatpush2.msra.mxu0 0.0
        %731 = vmatprep.subr.mxu0 0.0
        %732 = vmatpush2.msra.mxu0 0.0
        %733 = vmatprep.subr.mxu0 0.0
        %734 = vmatpush2.msra.mxu0 0.0
        %735 = vmatprep.subr.mxu0 0.0
        %736 = vmatpush2.msra.mxu0 0.0
        %737 = vmatprep.subr.mxu0 0.0
        %738 = vmatpush2.msra.mxu0 0.0
        %739 = vmatprep.subr.mxu0 0.0
        %740 = vmatpush2.msra.mxu0 0.0
        %741 = vmatprep.subr.mxu0 0.0
        %742 = vmatpush2.msra.mxu0 0.0
        %743 = vmatprep.subr.mxu0 0.0
        %744 = vmatpush2.msra.mxu0 0.0
        %745 = vmatprep.subr.mxu0 0.0
        %746 = vmatpush2.msra.mxu0 0.0
        %747 = vmatprep.subr.mxu0 0.0
        %748 = vmatpush2.msra.mxu0 0.0
        %749 = vmatprep.subr.mxu0 0.0
        %750 = vmatpush2.msra.mxu0 0.0
        %751 = vmatprep.subr.mxu0 0.0
        %752 = vmatpush2.msra.mxu0 0.0
        %753 = vmatprep.subr.mxu0 0.0
        %754 = vmatpush2.msra.mxu0 0.0
        %755 = vmatprep.subr.mxu0 0.0
        %756 = vmatpush2.msra.mxu0 0.0
        %757 = vmatprep.subr.mxu0 0.0
        %758 = vmatpush2.msra.mxu0 0.0
        %759 = vmatprep.subr.mxu0 0.0
        %760 = vmatpush2.msra.mxu0 0.0
        %761 = vmatprep.mubr.f32.mxu0 0.0
        %v762 = vand.u32 %v231, 4294901760
        %763 = vmatmul.mubr.f32.gmra.mxu0 %v762
        %v764 = vpop.f32.mrf.mxu0
        %v765 = vadd.f32 %v682, %v764
        %v766 = vpop.f32.mrf.mxu0
        %v767 = vadd.f32 %v684, %v766
        %768 = vmatprep.mubr.f32.mxu0 0.0
        %v769 = vand.u32 %v234, 4294901760
        %770 = vmatmul.mubr.f32.gmra.mxu0 %v769
        %v771 = vpop.f32.mrf.mxu0
        %v772 = vadd.f32 %v689, %v771
        %v773 = vpop.f32.mrf.mxu0
        %v774 = vadd.f32 %v691, %v773
        %775 = vdwg.mxu0
        %776 = vmatprep.subr.mxu0 0.0
        %777 = vmatpush1.msra.mxu0 0.0
        %778 = vmatprep.subr.mxu0 0.0
        %779 = vmatpush1.msra.mxu0 0.0
        %780 = vmatprep.subr.mxu0 0.0
        %781 = vmatpush1.msra.mxu0 0.0
        %782 = vmatprep.subr.mxu0 0.0
        %783 = vmatpush1.msra.mxu0 0.0
        %784 = vmatprep.subr.mxu0 0.0
        %785 = vmatpush1.msra.mxu0 0.0
        %786 = vmatprep.subr.mxu0 0.0
        %787 = vmatpush1.msra.mxu0 0.0
        %788 = vmatprep.subr.mxu0 0.0
        %789 = vmatpush1.msra.mxu0 0.0
        %790 = vmatprep.subr.mxu0 0.0
        %791 = vmatpush1.msra.mxu0 0.0
        %792 = vmatprep.subr.mxu0 0.0
        %793 = vmatpush1.msra.mxu0 0.0
        %794 = vmatprep.subr.mxu0 0.0
        %795 = vmatpush1.msra.mxu0 0.0
        %796 = vmatprep.subr.mxu0 0.0
        %797 = vmatpush1.msra.mxu0 0.0
        %798 = vmatprep.subr.mxu0 0.0
        %799 = vmatpush1.msra.mxu0 0.0
        %800 = vmatprep.subr.mxu0 0.0
        %801 = vmatpush1.msra.mxu0 0.0
        %802 = vmatprep.subr.mxu0 0.0
        %803 = vmatpush1.msra.mxu0 0.0
        %804 = vmatprep.subr.mxu0 0.0
        %v805 = vand.u32 %v228, 4294901760
        %806 = vmatpush1.msra.mxu0 %v805
        %807 = vmatprep.subr.mxu0 0.0
        %v808 = vand.u32 %v225, 4294901760
        %809 = vmatpush1.msra.mxu0 %v808
        %810 = vmatprep.subr.mxu0 0.0
        %811 = vmatpush2.msra.mxu0 0.0
        %812 = vmatprep.subr.mxu0 0.0
        %813 = vmatpush2.msra.mxu0 0.0
        %814 = vmatprep.subr.mxu0 0.0
        %815 = vmatpush2.msra.mxu0 0.0
        %816 = vmatprep.subr.mxu0 0.0
        %817 = vmatpush2.msra.mxu0 0.0
        %818 = vmatprep.subr.mxu0 0.0
        %819 = vmatpush2.msra.mxu0 0.0
        %820 = vmatprep.subr.mxu0 0.0
        %821 = vmatpush2.msra.mxu0 0.0
        %822 = vmatprep.subr.mxu0 0.0
        %823 = vmatpush2.msra.mxu0 0.0
        %824 = vmatprep.subr.mxu0 0.0
        %825 = vmatpush2.msra.mxu0 0.0
        %826 = vmatprep.subr.mxu0 0.0
        %827 = vmatpush2.msra.mxu0 0.0
        %828 = vmatprep.subr.mxu0 0.0
        %829 = vmatpush2.msra.mxu0 0.0
        %830 = vmatprep.subr.mxu0 0.0
        %831 = vmatpush2.msra.mxu0 0.0
        %832 = vmatprep.subr.mxu0 0.0
        %833 = vmatpush2.msra.mxu0 0.0
        %834 = vmatprep.subr.mxu0 0.0
        %835 = vmatpush2.msra.mxu0 0.0
        %836 = vmatprep.subr.mxu0 0.0
        %837 = vmatpush2.msra.mxu0 0.0
        %838 = vmatprep.subr.mxu0 0.0
        %839 = vmatpush2.msra.mxu0 0.0
        %840 = vmatprep.subr.mxu0 0.0
        %841 = vmatpush2.msra.mxu0 0.0
        %842 = vmatprep.mubr.f32.mxu0 0.0
        %v843 = vand.u32 %v231, 4294901760
        %v844 = vsub.f32 %v231, %v843
        %v845 = vand.u32 %v844, 4294901760
        %v846 = vsub.f32 %v844, %v845
        %v847 = vand.u32 %v846, 4294901760
        %848 = vmatmul.mubr.f32.gmra.mxu0 %v847
        %v849 = vpop.f32.mrf.mxu0
        %v850 = vadd.f32 0.0, %v849
        %v851 = vpop.f32.mrf.mxu0
        %852 = vmatprep.mubr.f32.mxu0 0.0
        %v853 = vand.u32 %v234, 4294901760
        %v854 = vsub.f32 %v234, %v853
        %v855 = vand.u32 %v854, 4294901760
        %v856 = vsub.f32 %v854, %v855
        %v857 = vand.u32 %v856, 4294901760
        %858 = vmatmul.mubr.f32.gmra.mxu0 %v857
        %v859 = vpop.f32.mrf.mxu0
        %v860 = vadd.f32 0.0, %v859
        %v861 = vpop.f32.mrf.mxu0
        %862 = vdwg.mxu0
        %863 = vmatprep.subr.mxu0 0.0
        %864 = vmatpush1.msra.mxu0 0.0
        %865 = vmatprep.subr.mxu0 0.0
        %866 = vmatpush1.msra.mxu0 0.0
        %867 = vmatprep.subr.mxu0 0.0
        %868 = vmatpush1.msra.mxu0 0.0
        %869 = vmatprep.subr.mxu0 0.0
        %870 = vmatpush1.msra.mxu0 0.0
        %871 = vmatprep.subr.mxu0 0.0
        %872 = vmatpush1.msra.mxu0 0.0
        %873 = vmatprep.subr.mxu0 0.0
        %874 = vmatpush1.msra.mxu0 0.0
        %875 = vmatprep.subr.mxu0 0.0
        %876 = vmatpush1.msra.mxu0 0.0
        %877 = vmatprep.subr.mxu0 0.0
        %878 = vmatpush1.msra.mxu0 0.0
        %879 = vmatprep.subr.mxu0 0.0
        %880 = vmatpush1.msra.mxu0 0.0
        %881 = vmatprep.subr.mxu0 0.0
        %882 = vmatpush1.msra.mxu0 0.0
        %883 = vmatprep.subr.mxu0 0.0
        %884 = vmatpush1.msra.mxu0 0.0
        %885 = vmatprep.subr.mxu0 0.0
        %886 = vmatpush1.msra.mxu0 0.0
        %887 = vmatprep.subr.mxu0 0.0
        %888 = vmatpush1.msra.mxu0 0.0
        %889 = vmatprep.subr.mxu0 0.0
        %890 = vmatpush1.msra.mxu0 0.0
        %891 = vmatprep.subr.mxu0 0.0
        %v892 = vand.u32 %v228, 4294901760
        %v893 = vsub.f32 %v228, %v892
        %v894 = vand.u32 %v893, 4294901760
        %v895 = vsub.f32 %v893, %v894
        %v896 = vand.u32 %v895, 4294901760
        %897 = vmatpush1.msra.mxu0 %v896
        %898 = vmatprep.subr.mxu0 0.0
        %v899 = vand.u32 %v225, 4294901760
        %v900 = vsub.f32 %v225, %v899
        %v901 = vand.u32 %v900, 4294901760
        %v902 = vsub.f32 %v900, %v901
        %v903 = vand.u32 %v902, 4294901760
        %904 = vmatpush1.msra.mxu0 %v903
        %905 = vmatprep.subr.mxu0 0.0
        %906 = vmatpush2.msra.mxu0 0.0
        %907 = vmatprep.subr.mxu0 0.0
        %908 = vmatpush2.msra.mxu0 0.0
        %909 = vmatprep.subr.mxu0 0.0
        %910 = vmatpush2.msra.mxu0 0.0
        %911 = vmatprep.subr.mxu0 0.0
        %912 = vmatpush2.msra.mxu0 0.0
        %913 = vmatprep.subr.mxu0 0.0
        %914 = vmatpush2.msra.mxu0 0.0
        %915 = vmatprep.subr.mxu0 0.0
        %916 = vmatpush2.msra.mxu0 0.0
        %917 = vmatprep.subr.mxu0 0.0
        %918 = vmatpush2.msra.mxu0 0.0
        %919 = vmatprep.subr.mxu0 0.0
        %920 = vmatpush2.msra.mxu0 0.0
        %921 = vmatprep.subr.mxu0 0.0
        %922 = vmatpush2.msra.mxu0 0.0
        %923 = vmatprep.subr.mxu0 0.0
        %924 = vmatpush2.msra.mxu0 0.0
        %925 = vmatprep.subr.mxu0 0.0
        %926 = vmatpush2.msra.mxu0 0.0
        %927 = vmatprep.subr.mxu0 0.0
        %928 = vmatpush2.msra.mxu0 0.0
        %929 = vmatprep.subr.mxu0 0.0
        %930 = vmatpush2.msra.mxu0 0.0
        %931 = vmatprep.subr.mxu0 0.0
        %932 = vmatpush2.msra.mxu0 0.0
        %933 = vmatprep.subr.mxu0 0.0
        %934 = vmatpush2.msra.mxu0 0.0
        %935 = vmatprep.subr.mxu0 0.0
        %936 = vmatpush2.msra.mxu0 0.0
        %937 = vmatprep.mubr.f32.mxu0 0.0
        %v938 = vand.u32 %v231, 4294901760
        %939 = vmatmul.mubr.f32.gmra.mxu0 %v938
        %v940 = vpop.f32.mrf.mxu0
        %v941 = vadd.f32 %v850, %v940
        %v942 = vpop.f32.mrf.mxu0
        %943 = vmatprep.mubr.f32.mxu0 0.0
        %v944 = vand.u32 %v234, 4294901760
        %945 = vmatmul.mubr.f32.gmra.mxu0 %v944
        %v946 = vpop.f32.mrf.mxu0
        %v947 = vadd.f32 %v860, %v946
        %v948 = vpop.f32.mrf.mxu0
        %949 = vdwg.mxu0
        %950 = vmatprep.subr.mxu0 0.0
        %951 = vmatpush1.msra.mxu0 0.0
        %952 = vmatprep.subr.mxu0 0.0
        %953 = vmatpush1.msra.mxu0 0.0
        %954 = vmatprep.subr.mxu0 0.0
        %955 = vmatpush1.msra.mxu0 0.0
        %956 = vmatprep.subr.mxu0 0.0
        %957 = vmatpush1.msra.mxu0 0.0
        %958 = vmatprep.subr.mxu0 0.0
        %959 = vmatpush1.msra.mxu0 0.0
        %960 = vmatprep.subr.mxu0 0.0
        %961 = vmatpush1.msra.mxu0 0.0
        %962 = vmatprep.subr.mxu0 0.0
        %963 = vmatpush1.msra.mxu0 0.0
        %964 = vmatprep.subr.mxu0 0.0
        %965 = vmatpush1.msra.mxu0 0.0
        %966 = vmatprep.subr.mxu0 0.0
        %967 = vmatpush1.msra.mxu0 0.0
        %968 = vmatprep.subr.mxu0 0.0
        %969 = vmatpush1.msra.mxu0 0.0
        %970 = vmatprep.subr.mxu0 0.0
        %971 = vmatpush1.msra.mxu0 0.0
        %972 = vmatprep.subr.mxu0 0.0
        %973 = vmatpush1.msra.mxu0 0.0
        %974 = vmatprep.subr.mxu0 0.0
        %975 = vmatpush1.msra.mxu0 0.0
        %976 = vmatprep.subr.mxu0 0.0
        %977 = vmatpush1.msra.mxu0 0.0
        %978 = vmatprep.subr.mxu0 0.0
        %v979 = vand.u32 %v228, 4294901760
        %v980 = vsub.f32 %v228, %v979
        %981 = vmatpush1.msra.mxu0 %v980
        %982 = vmatprep.subr.mxu0 0.0
        %v983 = vand.u32 %v225, 4294901760
        %v984 = vsub.f32 %v225, %v983
        %985 = vmatpush1.msra.mxu0 %v984
        %986 = vmatprep.subr.mxu0 0.0
        %987 = vmatpush2.msra.mxu0 0.0
        %988 = vmatprep.subr.mxu0 0.0
        %989 = vmatpush2.msra.mxu0 0.0
        %990 = vmatprep.subr.mxu0 0.0
        %991 = vmatpush2.msra.mxu0 0.0
        %992 = vmatprep.subr.mxu0 0.0
        %993 = vmatpush2.msra.mxu0 0.0
        %994 = vmatprep.subr.mxu0 0.0
        %995 = vmatpush2.msra.mxu0 0.0
        %996 = vmatprep.subr.mxu0 0.0
        %997 = vmatpush2.msra.mxu0 0.0
        %998 = vmatprep.subr.mxu0 0.0
        %999 = vmatpush2.msra.mxu0 0.0
        %1000 = vmatprep.subr.mxu0 0.0
        %1001 = vmatpush2.msra.mxu0 0.0
        %1002 = vmatprep.subr.mxu0 0.0
        %1003 = vmatpush2.msra.mxu0 0.0
        %1004 = vmatprep.subr.mxu0 0.0
        %1005 = vmatpush2.msra.mxu0 0.0
        %1006 = vmatprep.subr.mxu0 0.0
        %1007 = vmatpush2.msra.mxu0 0.0
        %1008 = vmatprep.subr.mxu0 0.0
        %1009 = vmatpush2.msra.mxu0 0.0
        %1010 = vmatprep.subr.mxu0 0.0
        %1011 = vmatpush2.msra.mxu0 0.0
        %1012 = vmatprep.subr.mxu0 0.0
        %1013 = vmatpush2.msra.mxu0 0.0
        %1014 = vmatprep.subr.mxu0 0.0
        %1015 = vmatpush2.msra.mxu0 0.0
        %1016 = vmatprep.subr.mxu0 0.0
        %1017 = vmatpush2.msra.mxu0 0.0
        %1018 = vmatprep.mubr.f32.mxu0 0.0
        %v1019 = vand.u32 %v231, 4294901760
        %v1020 = vsub.f32 %v231, %v1019
        %1021 = vmatmul.mubr.f32.gmra.mxu0 %v1020
        %v1022 = vpop.f32.mrf.mxu0
        %v1023 = vadd.f32 %v941, %v1022
        %v1024 = vpop.f32.mrf.mxu0
        %1025 = vmatprep.mubr.f32.mxu0 0.0
        %v1026 = vand.u32 %v234, 4294901760
        %v1027 = vsub.f32 %v234, %v1026
        %1028 = vmatmul.mubr.f32.gmra.mxu0 %v1027
        %v1029 = vpop.f32.mrf.mxu0
        %v1030 = vadd.f32 %v947, %v1029
        %v1031 = vpop.f32.mrf.mxu0
        %1032 = vdwg.mxu0
        %1033 = vmatprep.subr.mxu0 0.0
        %1034 = vmatpush1.msra.mxu0 0.0
        %1035 = vmatprep.subr.mxu0 0.0
        %1036 = vmatpush1.msra.mxu0 0.0
        %1037 = vmatprep.subr.mxu0 0.0
        %1038 = vmatpush1.msra.mxu0 0.0
        %1039 = vmatprep.subr.mxu0 0.0
        %1040 = vmatpush1.msra.mxu0 0.0
        %1041 = vmatprep.subr.mxu0 0.0
        %1042 = vmatpush1.msra.mxu0 0.0
        %1043 = vmatprep.subr.mxu0 0.0
        %1044 = vmatpush1.msra.mxu0 0.0
        %1045 = vmatprep.subr.mxu0 0.0
        %1046 = vmatpush1.msra.mxu0 0.0
        %1047 = vmatprep.subr.mxu0 0.0
        %1048 = vmatpush1.msra.mxu0 0.0
        %1049 = vmatprep.subr.mxu0 0.0
        %1050 = vmatpush1.msra.mxu0 0.0
        %1051 = vmatprep.subr.mxu0 0.0
        %1052 = vmatpush1.msra.mxu0 0.0
        %1053 = vmatprep.subr.mxu0 0.0
        %1054 = vmatpush1.msra.mxu0 0.0
        %1055 = vmatprep.subr.mxu0 0.0
        %1056 = vmatpush1.msra.mxu0 0.0
        %1057 = vmatprep.subr.mxu0 0.0
        %1058 = vmatpush1.msra.mxu0 0.0
        %1059 = vmatprep.subr.mxu0 0.0
        %1060 = vmatpush1.msra.mxu0 0.0
        %1061 = vmatprep.subr.mxu0 0.0
        %v1062 = vand.u32 %v228, 4294901760
        %1063 = vmatpush1.msra.mxu0 %v1062
        %1064 = vmatprep.subr.mxu0 0.0
        %v1065 = vand.u32 %v225, 4294901760
        %1066 = vmatpush1.msra.mxu0 %v1065
        %1067 = vmatprep.subr.mxu0 0.0
        %1068 = vmatpush2.msra.mxu0 0.0
        %1069 = vmatprep.subr.mxu0 0.0
        %1070 = vmatpush2.msra.mxu0 0.0
        %1071 = vmatprep.subr.mxu0 0.0
        %1072 = vmatpush2.msra.mxu0 0.0
        %1073 = vmatprep.subr.mxu0 0.0
        %1074 = vmatpush2.msra.mxu0 0.0
        %1075 = vmatprep.subr.mxu0 0.0
        %1076 = vmatpush2.msra.mxu0 0.0
        %1077 = vmatprep.subr.mxu0 0.0
        %1078 = vmatpush2.msra.mxu0 0.0
        %1079 = vmatprep.subr.mxu0 0.0
        %1080 = vmatpush2.msra.mxu0 0.0
        %1081 = vmatprep.subr.mxu0 0.0
        %1082 = vmatpush2.msra.mxu0 0.0
        %1083 = vmatprep.subr.mxu0 0.0
        %1084 = vmatpush2.msra.mxu0 0.0
        %1085 = vmatprep.subr.mxu0 0.0
        %1086 = vmatpush2.msra.mxu0 0.0
        %1087 = vmatprep.subr.mxu0 0.0
        %1088 = vmatpush2.msra.mxu0 0.0
        %1089 = vmatprep.subr.mxu0 0.0
        %1090 = vmatpush2.msra.mxu0 0.0
        %1091 = vmatprep.subr.mxu0 0.0
        %1092 = vmatpush2.msra.mxu0 0.0
        %1093 = vmatprep.subr.mxu0 0.0
        %1094 = vmatpush2.msra.mxu0 0.0
        %1095 = vmatprep.subr.mxu0 0.0
        %1096 = vmatpush2.msra.mxu0 0.0
        %1097 = vmatprep.subr.mxu0 0.0
        %1098 = vmatpush2.msra.mxu0 0.0
        %1099 = vmatprep.mubr.f32.mxu0 0.0
        %v1100 = vand.u32 %v231, 4294901760
        %v1101 = vsub.f32 %v231, %v1100
        %v1102 = vand.u32 %v1101, 4294901760
        %1103 = vmatmul.mubr.f32.gmra.mxu0 %v1102
        %v1104 = vpop.f32.mrf.mxu0
        %v1105 = vadd.f32 %v1023, %v1104
        %v1106 = vpop.f32.mrf.mxu0
        %1107 = vmatprep.mubr.f32.mxu0 0.0
        %v1108 = vand.u32 %v234, 4294901760
        %v1109 = vsub.f32 %v234, %v1108
        %v1110 = vand.u32 %v1109, 4294901760
        %1111 = vmatmul.mubr.f32.gmra.mxu0 %v1110
        %v1112 = vpop.f32.mrf.mxu0
        %v1113 = vadd.f32 %v1030, %v1112
        %v1114 = vpop.f32.mrf.mxu0
        %1115 = vdwg.mxu0
        %1116 = vmatprep.subr.mxu0 0.0
        %1117 = vmatpush1.msra.mxu0 0.0
        %1118 = vmatprep.subr.mxu0 0.0
        %1119 = vmatpush1.msra.mxu0 0.0
        %1120 = vmatprep.subr.mxu0 0.0
        %1121 = vmatpush1.msra.mxu0 0.0
        %1122 = vmatprep.subr.mxu0 0.0
        %1123 = vmatpush1.msra.mxu0 0.0
        %1124 = vmatprep.subr.mxu0 0.0
        %1125 = vmatpush1.msra.mxu0 0.0
        %1126 = vmatprep.subr.mxu0 0.0
        %1127 = vmatpush1.msra.mxu0 0.0
        %1128 = vmatprep.subr.mxu0 0.0
        %1129 = vmatpush1.msra.mxu0 0.0
        %1130 = vmatprep.subr.mxu0 0.0
        %1131 = vmatpush1.msra.mxu0 0.0
        %1132 = vmatprep.subr.mxu0 0.0
        %1133 = vmatpush1.msra.mxu0 0.0
        %1134 = vmatprep.subr.mxu0 0.0
        %1135 = vmatpush1.msra.mxu0 0.0
        %1136 = vmatprep.subr.mxu0 0.0
        %1137 = vmatpush1.msra.mxu0 0.0
        %1138 = vmatprep.subr.mxu0 0.0
        %1139 = vmatpush1.msra.mxu0 0.0
        %1140 = vmatprep.subr.mxu0 0.0
        %1141 = vmatpush1.msra.mxu0 0.0
        %1142 = vmatprep.subr.mxu0 0.0
        %1143 = vmatpush1.msra.mxu0 0.0
        %1144 = vmatprep.subr.mxu0 0.0
        %v1145 = vand.u32 %v228, 4294901760
        %v1146 = vsub.f32 %v228, %v1145
        %v1147 = vand.u32 %v1146, 4294901760
        %1148 = vmatpush1.msra.mxu0 %v1147
        %1149 = vmatprep.subr.mxu0 0.0
        %v1150 = vand.u32 %v225, 4294901760
        %v1151 = vsub.f32 %v225, %v1150
        %v1152 = vand.u32 %v1151, 4294901760
        %1153 = vmatpush1.msra.mxu0 %v1152
        %1154 = vmatprep.subr.mxu0 0.0
        %1155 = vmatpush2.msra.mxu0 0.0
        %1156 = vmatprep.subr.mxu0 0.0
        %1157 = vmatpush2.msra.mxu0 0.0
        %1158 = vmatprep.subr.mxu0 0.0
        %1159 = vmatpush2.msra.mxu0 0.0
        %1160 = vmatprep.subr.mxu0 0.0
        %1161 = vmatpush2.msra.mxu0 0.0
        %1162 = vmatprep.subr.mxu0 0.0
        %1163 = vmatpush2.msra.mxu0 0.0
        %1164 = vmatprep.subr.mxu0 0.0
        %1165 = vmatpush2.msra.mxu0 0.0
        %1166 = vmatprep.subr.mxu0 0.0
        %1167 = vmatpush2.msra.mxu0 0.0
        %1168 = vmatprep.subr.mxu0 0.0
        %1169 = vmatpush2.msra.mxu0 0.0
        %1170 = vmatprep.subr.mxu0 0.0
        %1171 = vmatpush2.msra.mxu0 0.0
        %1172 = vmatprep.subr.mxu0 0.0
        %1173 = vmatpush2.msra.mxu0 0.0
        %1174 = vmatprep.subr.mxu0 0.0
        %1175 = vmatpush2.msra.mxu0 0.0
        %1176 = vmatprep.subr.mxu0 0.0
        %1177 = vmatpush2.msra.mxu0 0.0
        %1178 = vmatprep.subr.mxu0 0.0
        %1179 = vmatpush2.msra.mxu0 0.0
        %1180 = vmatprep.subr.mxu0 0.0
        %1181 = vmatpush2.msra.mxu0 0.0
        %1182 = vmatprep.subr.mxu0 0.0
        %1183 = vmatpush2.msra.mxu0 0.0
        %1184 = vmatprep.subr.mxu0 0.0
        %1185 = vmatpush2.msra.mxu0 0.0
        %1186 = vmatprep.mubr.f32.mxu0 0.0
        %v1187 = vand.u32 %v231, 4294901760
        %1188 = vmatmul.mubr.f32.gmra.mxu0 %v1187
        %v1189 = vpop.f32.mrf.mxu0
        %v1190 = vadd.f32 %v1105, %v1189
        %v1191 = vpop.f32.mrf.mxu0
        %1192 = vmatprep.mubr.f32.mxu0 0.0
        %v1193 = vand.u32 %v234, 4294901760
        %1194 = vmatmul.mubr.f32.gmra.mxu0 %v1193
        %v1195 = vpop.f32.mrf.mxu0
        %v1196 = vadd.f32 %v1113, %v1195
        %v1197 = vpop.f32.mrf.mxu0
        %1198 = vdwg.mxu0
        %1199 = vmatprep.subr.mxu0 0.0
        %1200 = vmatpush1.msra.mxu0 0.0
        %1201 = vmatprep.subr.mxu0 0.0
        %1202 = vmatpush1.msra.mxu0 0.0
        %1203 = vmatprep.subr.mxu0 0.0
        %1204 = vmatpush1.msra.mxu0 0.0
        %1205 = vmatprep.subr.mxu0 0.0
        %1206 = vmatpush1.msra.mxu0 0.0
        %1207 = vmatprep.subr.mxu0 0.0
        %1208 = vmatpush1.msra.mxu0 0.0
        %1209 = vmatprep.subr.mxu0 0.0
        %1210 = vmatpush1.msra.mxu0 0.0
        %1211 = vmatprep.subr.mxu0 0.0
        %1212 = vmatpush1.msra.mxu0 0.0
        %1213 = vmatprep.subr.mxu0 0.0
        %1214 = vmatpush1.msra.mxu0 0.0
        %1215 = vmatprep.subr.mxu0 0.0
        %1216 = vmatpush1.msra.mxu0 0.0
        %1217 = vmatprep.subr.mxu0 0.0
        %1218 = vmatpush1.msra.mxu0 0.0
        %1219 = vmatprep.subr.mxu0 0.0
        %1220 = vmatpush1.msra.mxu0 0.0
        %1221 = vmatprep.subr.mxu0 0.0
        %1222 = vmatpush1.msra.mxu0 0.0
        %1223 = vmatprep.subr.mxu0 0.0
        %1224 = vmatpush1.msra.mxu0 0.0
        %1225 = vmatprep.subr.mxu0 0.0
        %1226 = vmatpush1.msra.mxu0 0.0
        %1227 = vmatprep.subr.mxu0 0.0
        %v1228 = vand.u32 %v228, 4294901760
        %1229 = vmatpush1.msra.mxu0 %v1228
        %1230 = vmatprep.subr.mxu0 0.0
        %v1231 = vand.u32 %v225, 4294901760
        %1232 = vmatpush1.msra.mxu0 %v1231
        %1233 = vmatprep.subr.mxu0 0.0
        %1234 = vmatpush2.msra.mxu0 0.0
        %1235 = vmatprep.subr.mxu0 0.0
        %1236 = vmatpush2.msra.mxu0 0.0
        %1237 = vmatprep.subr.mxu0 0.0
        %1238 = vmatpush2.msra.mxu0 0.0
        %1239 = vmatprep.subr.mxu0 0.0
        %1240 = vmatpush2.msra.mxu0 0.0
        %1241 = vmatprep.subr.mxu0 0.0
        %1242 = vmatpush2.msra.mxu0 0.0
        %1243 = vmatprep.subr.mxu0 0.0
        %1244 = vmatpush2.msra.mxu0 0.0
        %1245 = vmatprep.subr.mxu0 0.0
        %1246 = vmatpush2.msra.mxu0 0.0
        %1247 = vmatprep.subr.mxu0 0.0
        %1248 = vmatpush2.msra.mxu0 0.0
        %1249 = vmatprep.subr.mxu0 0.0
        %1250 = vmatpush2.msra.mxu0 0.0
        %1251 = vmatprep.subr.mxu0 0.0
        %1252 = vmatpush2.msra.mxu0 0.0
        %1253 = vmatprep.subr.mxu0 0.0
        %1254 = vmatpush2.msra.mxu0 0.0
        %1255 = vmatprep.subr.mxu0 0.0
        %1256 = vmatpush2.msra.mxu0 0.0
        %1257 = vmatprep.subr.mxu0 0.0
        %1258 = vmatpush2.msra.mxu0 0.0
        %1259 = vmatprep.subr.mxu0 0.0
        %1260 = vmatpush2.msra.mxu0 0.0
        %1261 = vmatprep.subr.mxu0 0.0
        %1262 = vmatpush2.msra.mxu0 0.0
        %1263 = vmatprep.subr.mxu0 0.0
        %1264 = vmatpush2.msra.mxu0 0.0
        %1265 = vmatprep.mubr.f32.mxu0 0.0
        %v1266 = vand.u32 %v231, 4294901760
        %1267 = vmatmul.mubr.f32.gmra.mxu0 %v1266
        %v1268 = vpop.f32.mrf.mxu0
        %v1269 = vadd.f32 %v1190, %v1268
        %v1270 = vpop.f32.mrf.mxu0
        %1271 = vmatprep.mubr.f32.mxu0 0.0
        %v1272 = vand.u32 %v234, 4294901760
        %1273 = vmatmul.mubr.f32.gmra.mxu0 %v1272
        %v1274 = vpop.f32.mrf.mxu0
        %v1275 = vadd.f32 %v1196, %v1274
        %v1276 = vpop.f32.mrf.mxu0
        %1277 = vdwg.mxu0
        %v1279 = vsel %vm229, %v211, 0
        %v1282 = vsel %vm229, %v212, 0
        %1284 = vmatprep.subr.mxu0 0.0
        %1285 = vmatpush1.msra.mxu0 0.0
        %1286 = vmatprep.subr.mxu0 0.0
        %1287 = vmatpush1.msra.mxu0 0.0
        %1288 = vmatprep.subr.mxu0 0.0
        %1289 = vmatpush1.msra.mxu0 0.0
        %1290 = vmatprep.subr.mxu0 0.0
        %1291 = vmatpush1.msra.mxu0 0.0
        %1292 = vmatprep.subr.mxu0 0.0
        %1293 = vmatpush1.msra.mxu0 0.0
        %1294 = vmatprep.subr.mxu0 0.0
        %1295 = vmatpush1.msra.mxu0 0.0
        %1296 = vmatprep.subr.mxu0 0.0
        %1297 = vmatpush1.msra.mxu0 0.0
        %1298 = vmatprep.subr.mxu0 0.0
        %1299 = vmatpush1.msra.mxu0 0.0
        %1300 = vmatprep.subr.mxu0 0.0
        %1301 = vmatpush1.msra.mxu0 0.0
        %1302 = vmatprep.subr.mxu0 0.0
        %1303 = vmatpush1.msra.mxu0 0.0
        %1304 = vmatprep.subr.mxu0 0.0
        %1305 = vmatpush1.msra.mxu0 0.0
        %1306 = vmatprep.subr.mxu0 0.0
        %1307 = vmatpush1.msra.mxu0 0.0
        %1308 = vmatprep.subr.mxu0 0.0
        %1309 = vmatpush1.msra.mxu0 0.0
        %1310 = vmatprep.subr.mxu0 0.0
        %1311 = vmatpush1.msra.mxu0 0.0
        %v1312 = vand.u32 %v217, 4294901760
        %1313 = vmatprep.subr.mxu0 %v1312
        %v1314 = vand.u32 %v216, 4294901760
        %1315 = vmatpush1.msra.mxu0 %v1314
        %v1316 = vand.u32 %v214, 4294901760
        %1317 = vmatprep.subr.mxu0 %v1316
        %v1318 = vand.u32 %v213, 4294901760
        %1319 = vmatpush1.msra.mxu0 %v1318
        %1320 = vmatprep.subr.mxu0 0.0
        %1321 = vmatpush2.msra.mxu0 0.0
        %1322 = vmatprep.subr.mxu0 0.0
        %1323 = vmatpush2.msra.mxu0 0.0
        %1324 = vmatprep.subr.mxu0 0.0
        %1325 = vmatpush2.msra.mxu0 0.0
        %1326 = vmatprep.subr.mxu0 0.0
        %1327 = vmatpush2.msra.mxu0 0.0
        %1328 = vmatprep.subr.mxu0 0.0
        %1329 = vmatpush2.msra.mxu0 0.0
        %1330 = vmatprep.subr.mxu0 0.0
        %1331 = vmatpush2.msra.mxu0 0.0
        %1332 = vmatprep.subr.mxu0 0.0
        %1333 = vmatpush2.msra.mxu0 0.0
        %1334 = vmatprep.subr.mxu0 0.0
        %1335 = vmatpush2.msra.mxu0 0.0
        %1336 = vmatprep.subr.mxu0 0.0
        %1337 = vmatpush2.msra.mxu0 0.0
        %1338 = vmatprep.subr.mxu0 0.0
        %1339 = vmatpush2.msra.mxu0 0.0
        %1340 = vmatprep.subr.mxu0 0.0
        %1341 = vmatpush2.msra.mxu0 0.0
        %1342 = vmatprep.subr.mxu0 0.0
        %1343 = vmatpush2.msra.mxu0 0.0
        %1344 = vmatprep.subr.mxu0 0.0
        %1345 = vmatpush2.msra.mxu0 0.0
        %1346 = vmatprep.subr.mxu0 0.0
        %1347 = vmatpush2.msra.mxu0 0.0
        %1348 = vmatprep.subr.mxu0 0.0
        %1349 = vmatpush2.msra.mxu0 0.0
        %1350 = vmatprep.subr.mxu0 0.0
        %1351 = vmatpush2.msra.mxu0 0.0
        %1352 = vmatprep.mubr.f32.mxu0 0.0
        %v1353 = vand.u32 %v1279, 4294901760
        %v1354 = vsub.f32 %v1279, %v1353
        %v1355 = vand.u32 %v1354, 4294901760
        %v1356 = vsub.f32 %v1354, %v1355
        %v1357 = vand.u32 %v1356, 4294901760
        %1358 = vmatmul.mubr.f32.gmra.mxu0 %v1357
        %v1359 = vpop.f32.mrf.mxu0
        %v1360 = vadd.f32 %v765, %v1359
        %v1361 = vpop.f32.mrf.mxu0
        %v1362 = vadd.f32 %v767, %v1361
        %1363 = vmatprep.mubr.f32.mxu0 0.0
        %v1364 = vand.u32 %v1282, 4294901760
        %v1365 = vsub.f32 %v1282, %v1364
        %v1366 = vand.u32 %v1365, 4294901760
        %v1367 = vsub.f32 %v1365, %v1366
        %v1368 = vand.u32 %v1367, 4294901760
        %1369 = vmatmul.mubr.f32.gmra.mxu0 %v1368
        %v1370 = vpop.f32.mrf.mxu0
        %v1371 = vadd.f32 %v772, %v1370
        %v1372 = vpop.f32.mrf.mxu0
        %v1373 = vadd.f32 %v774, %v1372
        %1374 = vdwg.mxu0
        %1375 = vmatprep.subr.mxu0 0.0
        %1376 = vmatpush1.msra.mxu0 0.0
        %1377 = vmatprep.subr.mxu0 0.0
        %1378 = vmatpush1.msra.mxu0 0.0
        %1379 = vmatprep.subr.mxu0 0.0
        %1380 = vmatpush1.msra.mxu0 0.0
        %1381 = vmatprep.subr.mxu0 0.0
        %1382 = vmatpush1.msra.mxu0 0.0
        %1383 = vmatprep.subr.mxu0 0.0
        %1384 = vmatpush1.msra.mxu0 0.0
        %1385 = vmatprep.subr.mxu0 0.0
        %1386 = vmatpush1.msra.mxu0 0.0
        %1387 = vmatprep.subr.mxu0 0.0
        %1388 = vmatpush1.msra.mxu0 0.0
        %1389 = vmatprep.subr.mxu0 0.0
        %1390 = vmatpush1.msra.mxu0 0.0
        %1391 = vmatprep.subr.mxu0 0.0
        %1392 = vmatpush1.msra.mxu0 0.0
        %1393 = vmatprep.subr.mxu0 0.0
        %1394 = vmatpush1.msra.mxu0 0.0
        %1395 = vmatprep.subr.mxu0 0.0
        %1396 = vmatpush1.msra.mxu0 0.0
        %1397 = vmatprep.subr.mxu0 0.0
        %1398 = vmatpush1.msra.mxu0 0.0
        %1399 = vmatprep.subr.mxu0 0.0
        %1400 = vmatpush1.msra.mxu0 0.0
        %1401 = vmatprep.subr.mxu0 0.0
        %1402 = vmatpush1.msra.mxu0 0.0
        %v1403 = vand.u32 %v217, 4294901760
        %v1404 = vsub.f32 %v217, %v1403
        %v1405 = vand.u32 %v1404, 4294901760
        %v1406 = vsub.f32 %v1404, %v1405
        %v1407 = vand.u32 %v1406, 4294901760
        %1408 = vmatprep.subr.mxu0 %v1407
        %v1409 = vand.u32 %v216, 4294901760
        %v1410 = vsub.f32 %v216, %v1409
        %v1411 = vand.u32 %v1410, 4294901760
        %v1412 = vsub.f32 %v1410, %v1411
        %v1413 = vand.u32 %v1412, 4294901760
        %1414 = vmatpush1.msra.mxu0 %v1413
        %v1415 = vand.u32 %v214, 4294901760
        %v1416 = vsub.f32 %v214, %v1415
        %v1417 = vand.u32 %v1416, 4294901760
        %v1418 = vsub.f32 %v1416, %v1417
        %v1419 = vand.u32 %v1418, 4294901760
        %1420 = vmatprep.subr.mxu0 %v1419
        %v1421 = vand.u32 %v213, 4294901760
        %v1422 = vsub.f32 %v213, %v1421
        %v1423 = vand.u32 %v1422, 4294901760
        %v1424 = vsub.f32 %v1422, %v1423
        %v1425 = vand.u32 %v1424, 4294901760
        %1426 = vmatpush1.msra.mxu0 %v1425
        %1427 = vmatprep.subr.mxu0 0.0
        %1428 = vmatpush2.msra.mxu0 0.0
        %1429 = vmatprep.subr.mxu0 0.0
        %1430 = vmatpush2.msra.mxu0 0.0
        %1431 = vmatprep.subr.mxu0 0.0
        %1432 = vmatpush2.msra.mxu0 0.0
        %1433 = vmatprep.subr.mxu0 0.0
        %1434 = vmatpush2.msra.mxu0 0.0
        %1435 = vmatprep.subr.mxu0 0.0
        %1436 = vmatpush2.msra.mxu0 0.0
        %1437 = vmatprep.subr.mxu0 0.0
        %1438 = vmatpush2.msra.mxu0 0.0
        %1439 = vmatprep.subr.mxu0 0.0
        %1440 = vmatpush2.msra.mxu0 0.0
        %1441 = vmatprep.subr.mxu0 0.0
        %1442 = vmatpush2.msra.mxu0 0.0
        %1443 = vmatprep.subr.mxu0 0.0
        %1444 = vmatpush2.msra.mxu0 0.0
        %1445 = vmatprep.subr.mxu0 0.0
        %1446 = vmatpush2.msra.mxu0 0.0
        %1447 = vmatprep.subr.mxu0 0.0
        %1448 = vmatpush2.msra.mxu0 0.0
        %1449 = vmatprep.subr.mxu0 0.0
        %1450 = vmatpush2.msra.mxu0 0.0
        %1451 = vmatprep.subr.mxu0 0.0
        %1452 = vmatpush2.msra.mxu0 0.0
        %1453 = vmatprep.subr.mxu0 0.0
        %1454 = vmatpush2.msra.mxu0 0.0
        %1455 = vmatprep.subr.mxu0 0.0
        %1456 = vmatpush2.msra.mxu0 0.0
        %1457 = vmatprep.subr.mxu0 0.0
        %1458 = vmatpush2.msra.mxu0 0.0
        %1459 = vmatprep.mubr.f32.mxu0 0.0
        %v1460 = vand.u32 %v1279, 4294901760
        %1461 = vmatmul.mubr.f32.gmra.mxu0 %v1460
        %v1462 = vpop.f32.mrf.mxu0
        %v1463 = vadd.f32 %v1360, %v1462
        %v1464 = vpop.f32.mrf.mxu0
        %v1465 = vadd.f32 %v1362, %v1464
        %1466 = vmatprep.mubr.f32.mxu0 0.0
        %v1467 = vand.u32 %v1282, 4294901760
        %1468 = vmatmul.mubr.f32.gmra.mxu0 %v1467
        %v1469 = vpop.f32.mrf.mxu0
        %v1470 = vadd.f32 %v1371, %v1469
        %v1471 = vpop.f32.mrf.mxu0
        %v1472 = vadd.f32 %v1373, %v1471
        %1473 = vdwg.mxu0
        %1474 = vmatprep.subr.mxu0 0.0
        %1475 = vmatpush1.msra.mxu0 0.0
        %1476 = vmatprep.subr.mxu0 0.0
        %1477 = vmatpush1.msra.mxu0 0.0
        %1478 = vmatprep.subr.mxu0 0.0
        %1479 = vmatpush1.msra.mxu0 0.0
        %1480 = vmatprep.subr.mxu0 0.0
        %1481 = vmatpush1.msra.mxu0 0.0
        %1482 = vmatprep.subr.mxu0 0.0
        %1483 = vmatpush1.msra.mxu0 0.0
        %1484 = vmatprep.subr.mxu0 0.0
        %1485 = vmatpush1.msra.mxu0 0.0
        %1486 = vmatprep.subr.mxu0 0.0
        %1487 = vmatpush1.msra.mxu0 0.0
        %1488 = vmatprep.subr.mxu0 0.0
        %1489 = vmatpush1.msra.mxu0 0.0
        %1490 = vmatprep.subr.mxu0 0.0
        %1491 = vmatpush1.msra.mxu0 0.0
        %1492 = vmatprep.subr.mxu0 0.0
        %1493 = vmatpush1.msra.mxu0 0.0
        %1494 = vmatprep.subr.mxu0 0.0
        %1495 = vmatpush1.msra.mxu0 0.0
        %1496 = vmatprep.subr.mxu0 0.0
        %1497 = vmatpush1.msra.mxu0 0.0
        %1498 = vmatprep.subr.mxu0 0.0
        %1499 = vmatpush1.msra.mxu0 0.0
        %1500 = vmatprep.subr.mxu0 0.0
        %1501 = vmatpush1.msra.mxu0 0.0
        %v1502 = vand.u32 %v217, 4294901760
        %v1503 = vsub.f32 %v217, %v1502
        %1504 = vmatprep.subr.mxu0 %v1503
        %v1505 = vand.u32 %v216, 4294901760
        %v1506 = vsub.f32 %v216, %v1505
        %1507 = vmatpush1.msra.mxu0 %v1506
        %v1508 = vand.u32 %v214, 4294901760
        %v1509 = vsub.f32 %v214, %v1508
        %1510 = vmatprep.subr.mxu0 %v1509
        %v1511 = vand.u32 %v213, 4294901760
        %v1512 = vsub.f32 %v213, %v1511
        %1513 = vmatpush1.msra.mxu0 %v1512
        %1514 = vmatprep.subr.mxu0 0.0
        %1515 = vmatpush2.msra.mxu0 0.0
        %1516 = vmatprep.subr.mxu0 0.0
        %1517 = vmatpush2.msra.mxu0 0.0
        %1518 = vmatprep.subr.mxu0 0.0
        %1519 = vmatpush2.msra.mxu0 0.0
        %1520 = vmatprep.subr.mxu0 0.0
        %1521 = vmatpush2.msra.mxu0 0.0
        %1522 = vmatprep.subr.mxu0 0.0
        %1523 = vmatpush2.msra.mxu0 0.0
        %1524 = vmatprep.subr.mxu0 0.0
        %1525 = vmatpush2.msra.mxu0 0.0
        %1526 = vmatprep.subr.mxu0 0.0
        %1527 = vmatpush2.msra.mxu0 0.0
        %1528 = vmatprep.subr.mxu0 0.0
        %1529 = vmatpush2.msra.mxu0 0.0
        %1530 = vmatprep.subr.mxu0 0.0
        %1531 = vmatpush2.msra.mxu0 0.0
        %1532 = vmatprep.subr.mxu0 0.0
        %1533 = vmatpush2.msra.mxu0 0.0
        %1534 = vmatprep.subr.mxu0 0.0
        %1535 = vmatpush2.msra.mxu0 0.0
        %1536 = vmatprep.subr.mxu0 0.0
        %1537 = vmatpush2.msra.mxu0 0.0
        %1538 = vmatprep.subr.mxu0 0.0
        %1539 = vmatpush2.msra.mxu0 0.0
        %1540 = vmatprep.subr.mxu0 0.0
        %1541 = vmatpush2.msra.mxu0 0.0
        %1542 = vmatprep.subr.mxu0 0.0
        %1543 = vmatpush2.msra.mxu0 0.0
        %1544 = vmatprep.subr.mxu0 0.0
        %1545 = vmatpush2.msra.mxu0 0.0
        %1546 = vmatprep.mubr.f32.mxu0 0.0
        %v1547 = vand.u32 %v1279, 4294901760
        %v1548 = vsub.f32 %v1279, %v1547
        %1549 = vmatmul.mubr.f32.gmra.mxu0 %v1548
        %v1550 = vpop.f32.mrf.mxu0
        %v1551 = vadd.f32 %v1463, %v1550
        %v1552 = vpop.f32.mrf.mxu0
        %v1553 = vadd.f32 %v1465, %v1552
        %1554 = vmatprep.mubr.f32.mxu0 0.0
        %v1555 = vand.u32 %v1282, 4294901760
        %v1556 = vsub.f32 %v1282, %v1555
        %1557 = vmatmul.mubr.f32.gmra.mxu0 %v1556
        %v1558 = vpop.f32.mrf.mxu0
        %v1559 = vadd.f32 %v1470, %v1558
        %v1560 = vpop.f32.mrf.mxu0
        %v1561 = vadd.f32 %v1472, %v1560
        %1562 = vdwg.mxu0
        %1563 = vmatprep.subr.mxu0 0.0
        %1564 = vmatpush1.msra.mxu0 0.0
        %1565 = vmatprep.subr.mxu0 0.0
        %1566 = vmatpush1.msra.mxu0 0.0
        %1567 = vmatprep.subr.mxu0 0.0
        %1568 = vmatpush1.msra.mxu0 0.0
        %1569 = vmatprep.subr.mxu0 0.0
        %1570 = vmatpush1.msra.mxu0 0.0
        %1571 = vmatprep.subr.mxu0 0.0
        %1572 = vmatpush1.msra.mxu0 0.0
        %1573 = vmatprep.subr.mxu0 0.0
        %1574 = vmatpush1.msra.mxu0 0.0
        %1575 = vmatprep.subr.mxu0 0.0
        %1576 = vmatpush1.msra.mxu0 0.0
        %1577 = vmatprep.subr.mxu0 0.0
        %1578 = vmatpush1.msra.mxu0 0.0
        %1579 = vmatprep.subr.mxu0 0.0
        %1580 = vmatpush1.msra.mxu0 0.0
        %1581 = vmatprep.subr.mxu0 0.0
        %1582 = vmatpush1.msra.mxu0 0.0
        %1583 = vmatprep.subr.mxu0 0.0
        %1584 = vmatpush1.msra.mxu0 0.0
        %1585 = vmatprep.subr.mxu0 0.0
        %1586 = vmatpush1.msra.mxu0 0.0
        %1587 = vmatprep.subr.mxu0 0.0
        %1588 = vmatpush1.msra.mxu0 0.0
        %1589 = vmatprep.subr.mxu0 0.0
        %1590 = vmatpush1.msra.mxu0 0.0
        %v1591 = vand.u32 %v217, 4294901760
        %1592 = vmatprep.subr.mxu0 %v1591
        %v1593 = vand.u32 %v216, 4294901760
        %1594 = vmatpush1.msra.mxu0 %v1593
        %v1595 = vand.u32 %v214, 4294901760
        %1596 = vmatprep.subr.mxu0 %v1595
        %v1597 = vand.u32 %v213, 4294901760
        %1598 = vmatpush1.msra.mxu0 %v1597
        %1599 = vmatprep.subr.mxu0 0.0
        %1600 = vmatpush2.msra.mxu0 0.0
        %1601 = vmatprep.subr.mxu0 0.0
        %1602 = vmatpush2.msra.mxu0 0.0
        %1603 = vmatprep.subr.mxu0 0.0
        %1604 = vmatpush2.msra.mxu0 0.0
        %1605 = vmatprep.subr.mxu0 0.0
        %1606 = vmatpush2.msra.mxu0 0.0
        %1607 = vmatprep.subr.mxu0 0.0
        %1608 = vmatpush2.msra.mxu0 0.0
        %1609 = vmatprep.subr.mxu0 0.0
        %1610 = vmatpush2.msra.mxu0 0.0
        %1611 = vmatprep.subr.mxu0 0.0
        %1612 = vmatpush2.msra.mxu0 0.0
        %1613 = vmatprep.subr.mxu0 0.0
        %1614 = vmatpush2.msra.mxu0 0.0
        %1615 = vmatprep.subr.mxu0 0.0
        %1616 = vmatpush2.msra.mxu0 0.0
        %1617 = vmatprep.subr.mxu0 0.0
        %1618 = vmatpush2.msra.mxu0 0.0
        %1619 = vmatprep.subr.mxu0 0.0
        %1620 = vmatpush2.msra.mxu0 0.0
        %1621 = vmatprep.subr.mxu0 0.0
        %1622 = vmatpush2.msra.mxu0 0.0
        %1623 = vmatprep.subr.mxu0 0.0
        %1624 = vmatpush2.msra.mxu0 0.0
        %1625 = vmatprep.subr.mxu0 0.0
        %1626 = vmatpush2.msra.mxu0 0.0
        %1627 = vmatprep.subr.mxu0 0.0
        %1628 = vmatpush2.msra.mxu0 0.0
        %1629 = vmatprep.subr.mxu0 0.0
        %1630 = vmatpush2.msra.mxu0 0.0
        %1631 = vmatprep.mubr.f32.mxu0 0.0
        %v1632 = vand.u32 %v1279, 4294901760
        %v1633 = vsub.f32 %v1279, %v1632
        %v1634 = vand.u32 %v1633, 4294901760
        %1635 = vmatmul.mubr.f32.gmra.mxu0 %v1634
        %v1636 = vpop.f32.mrf.mxu0
        %v1637 = vadd.f32 %v1551, %v1636
        %v1638 = vpop.f32.mrf.mxu0
        %v1639 = vadd.f32 %v1553, %v1638
        %1640 = vmatprep.mubr.f32.mxu0 0.0
        %v1641 = vand.u32 %v1282, 4294901760
        %v1642 = vsub.f32 %v1282, %v1641
        %v1643 = vand.u32 %v1642, 4294901760
        %1644 = vmatmul.mubr.f32.gmra.mxu0 %v1643
        %v1645 = vpop.f32.mrf.mxu0
        %v1646 = vadd.f32 %v1559, %v1645
        %v1647 = vpop.f32.mrf.mxu0
        %v1648 = vadd.f32 %v1561, %v1647
        %1649 = vdwg.mxu0
        %1650 = vmatprep.subr.mxu0 0.0
        %1651 = vmatpush1.msra.mxu0 0.0
        %1652 = vmatprep.subr.mxu0 0.0
        %1653 = vmatpush1.msra.mxu0 0.0
        %1654 = vmatprep.subr.mxu0 0.0
        %1655 = vmatpush1.msra.mxu0 0.0
        %1656 = vmatprep.subr.mxu0 0.0
        %1657 = vmatpush1.msra.mxu0 0.0
        %1658 = vmatprep.subr.mxu0 0.0
        %1659 = vmatpush1.msra.mxu0 0.0
        %1660 = vmatprep.subr.mxu0 0.0
        %1661 = vmatpush1.msra.mxu0 0.0
        %1662 = vmatprep.subr.mxu0 0.0
        %1663 = vmatpush1.msra.mxu0 0.0
        %1664 = vmatprep.subr.mxu0 0.0
        %1665 = vmatpush1.msra.mxu0 0.0
        %1666 = vmatprep.subr.mxu0 0.0
        %1667 = vmatpush1.msra.mxu0 0.0
        %1668 = vmatprep.subr.mxu0 0.0
        %1669 = vmatpush1.msra.mxu0 0.0
        %1670 = vmatprep.subr.mxu0 0.0
        %1671 = vmatpush1.msra.mxu0 0.0
        %1672 = vmatprep.subr.mxu0 0.0
        %1673 = vmatpush1.msra.mxu0 0.0
        %1674 = vmatprep.subr.mxu0 0.0
        %1675 = vmatpush1.msra.mxu0 0.0
        %1676 = vmatprep.subr.mxu0 0.0
        %1677 = vmatpush1.msra.mxu0 0.0
        %v1678 = vand.u32 %v217, 4294901760
        %v1679 = vsub.f32 %v217, %v1678
        %v1680 = vand.u32 %v1679, 4294901760
        %1681 = vmatprep.subr.mxu0 %v1680
        %v1682 = vand.u32 %v216, 4294901760
        %v1683 = vsub.f32 %v216, %v1682
        %v1684 = vand.u32 %v1683, 4294901760
        %1685 = vmatpush1.msra.mxu0 %v1684
        %v1686 = vand.u32 %v214, 4294901760
        %v1687 = vsub.f32 %v214, %v1686
        %v1688 = vand.u32 %v1687, 4294901760
        %1689 = vmatprep.subr.mxu0 %v1688
        %v1690 = vand.u32 %v213, 4294901760
        %v1691 = vsub.f32 %v213, %v1690
        %v1692 = vand.u32 %v1691, 4294901760
        %1693 = vmatpush1.msra.mxu0 %v1692
        %1694 = vmatprep.subr.mxu0 0.0
        %1695 = vmatpush2.msra.mxu0 0.0
        %1696 = vmatprep.subr.mxu0 0.0
        %1697 = vmatpush2.msra.mxu0 0.0
        %1698 = vmatprep.subr.mxu0 0.0
        %1699 = vmatpush2.msra.mxu0 0.0
        %1700 = vmatprep.subr.mxu0 0.0
        %1701 = vmatpush2.msra.mxu0 0.0
        %1702 = vmatprep.subr.mxu0 0.0
        %1703 = vmatpush2.msra.mxu0 0.0
        %1704 = vmatprep.subr.mxu0 0.0
        %1705 = vmatpush2.msra.mxu0 0.0
        %1706 = vmatprep.subr.mxu0 0.0
        %1707 = vmatpush2.msra.mxu0 0.0
        %1708 = vmatprep.subr.mxu0 0.0
        %1709 = vmatpush2.msra.mxu0 0.0
        %1710 = vmatprep.subr.mxu0 0.0
        %1711 = vmatpush2.msra.mxu0 0.0
        %1712 = vmatprep.subr.mxu0 0.0
        %1713 = vmatpush2.msra.mxu0 0.0
        %1714 = vmatprep.subr.mxu0 0.0
        %1715 = vmatpush2.msra.mxu0 0.0
        %1716 = vmatprep.subr.mxu0 0.0
        %1717 = vmatpush2.msra.mxu0 0.0
        %1718 = vmatprep.subr.mxu0 0.0
        %1719 = vmatpush2.msra.mxu0 0.0
        %1720 = vmatprep.subr.mxu0 0.0
        %1721 = vmatpush2.msra.mxu0 0.0
        %1722 = vmatprep.subr.mxu0 0.0
        %1723 = vmatpush2.msra.mxu0 0.0
        %1724 = vmatprep.subr.mxu0 0.0
        %1725 = vmatpush2.msra.mxu0 0.0
        %1726 = vmatprep.mubr.f32.mxu0 0.0
        %v1727 = vand.u32 %v1279, 4294901760
        %1728 = vmatmul.mubr.f32.gmra.mxu0 %v1727
        %v1729 = vpop.f32.mrf.mxu0
        %v1730 = vadd.f32 %v1637, %v1729
        %v1731 = vpop.f32.mrf.mxu0
        %v1732 = vadd.f32 %v1639, %v1731
        %1733 = vmatprep.mubr.f32.mxu0 0.0
        %v1734 = vand.u32 %v1282, 4294901760
        %1735 = vmatmul.mubr.f32.gmra.mxu0 %v1734
        %v1736 = vpop.f32.mrf.mxu0
        %v1737 = vadd.f32 %v1646, %v1736
        %v1738 = vpop.f32.mrf.mxu0
        %v1739 = vadd.f32 %v1648, %v1738
        %1740 = vdwg.mxu0
        %1741 = vmatprep.subr.mxu0 0.0
        %1742 = vmatpush1.msra.mxu0 0.0
        %1743 = vmatprep.subr.mxu0 0.0
        %1744 = vmatpush1.msra.mxu0 0.0
        %1745 = vmatprep.subr.mxu0 0.0
        %1746 = vmatpush1.msra.mxu0 0.0
        %1747 = vmatprep.subr.mxu0 0.0
        %1748 = vmatpush1.msra.mxu0 0.0
        %1749 = vmatprep.subr.mxu0 0.0
        %1750 = vmatpush1.msra.mxu0 0.0
        %1751 = vmatprep.subr.mxu0 0.0
        %1752 = vmatpush1.msra.mxu0 0.0
        %1753 = vmatprep.subr.mxu0 0.0
        %1754 = vmatpush1.msra.mxu0 0.0
        %1755 = vmatprep.subr.mxu0 0.0
        %1756 = vmatpush1.msra.mxu0 0.0
        %1757 = vmatprep.subr.mxu0 0.0
        %1758 = vmatpush1.msra.mxu0 0.0
        %1759 = vmatprep.subr.mxu0 0.0
        %1760 = vmatpush1.msra.mxu0 0.0
        %1761 = vmatprep.subr.mxu0 0.0
        %1762 = vmatpush1.msra.mxu0 0.0
        %1763 = vmatprep.subr.mxu0 0.0
        %1764 = vmatpush1.msra.mxu0 0.0
        %1765 = vmatprep.subr.mxu0 0.0
        %1766 = vmatpush1.msra.mxu0 0.0
        %1767 = vmatprep.subr.mxu0 0.0
        %1768 = vmatpush1.msra.mxu0 0.0
        %v1769 = vand.u32 %v217, 4294901760
        %1770 = vmatprep.subr.mxu0 %v1769
        %v1771 = vand.u32 %v216, 4294901760
        %1772 = vmatpush1.msra.mxu0 %v1771
        %v1773 = vand.u32 %v214, 4294901760
        %1774 = vmatprep.subr.mxu0 %v1773
        %v1775 = vand.u32 %v213, 4294901760
        %1776 = vmatpush1.msra.mxu0 %v1775
        %1777 = vmatprep.subr.mxu0 0.0
        %1778 = vmatpush2.msra.mxu0 0.0
        %1779 = vmatprep.subr.mxu0 0.0
        %1780 = vmatpush2.msra.mxu0 0.0
        %1781 = vmatprep.subr.mxu0 0.0
        %1782 = vmatpush2.msra.mxu0 0.0
        %1783 = vmatprep.subr.mxu0 0.0
        %1784 = vmatpush2.msra.mxu0 0.0
        %1785 = vmatprep.subr.mxu0 0.0
        %1786 = vmatpush2.msra.mxu0 0.0
        %1787 = vmatprep.subr.mxu0 0.0
        %1788 = vmatpush2.msra.mxu0 0.0
        %1789 = vmatprep.subr.mxu0 0.0
        %1790 = vmatpush2.msra.mxu0 0.0
        %1791 = vmatprep.subr.mxu0 0.0
        %1792 = vmatpush2.msra.mxu0 0.0
        %1793 = vmatprep.subr.mxu0 0.0
        %1794 = vmatpush2.msra.mxu0 0.0
        %1795 = vmatprep.subr.mxu0 0.0
        %1796 = vmatpush2.msra.mxu0 0.0
        %1797 = vmatprep.subr.mxu0 0.0
        %1798 = vmatpush2.msra.mxu0 0.0
        %1799 = vmatprep.subr.mxu0 0.0
        %1800 = vmatpush2.msra.mxu0 0.0
        %1801 = vmatprep.subr.mxu0 0.0
        %1802 = vmatpush2.msra.mxu0 0.0
        %1803 = vmatprep.subr.mxu0 0.0
        %1804 = vmatpush2.msra.mxu0 0.0
        %1805 = vmatprep.subr.mxu0 0.0
        %1806 = vmatpush2.msra.mxu0 0.0
        %1807 = vmatprep.subr.mxu0 0.0
        %1808 = vmatpush2.msra.mxu0 0.0
        %1809 = vmatprep.mubr.f32.mxu0 0.0
        %v1810 = vand.u32 %v1279, 4294901760
        %1811 = vmatmul.mubr.f32.gmra.mxu0 %v1810
        %v1812 = vpop.f32.mrf.mxu0
        %v1813 = vadd.f32 %v1730, %v1812
        %v1814 = vpop.f32.mrf.mxu0
        %v1815 = vadd.f32 %v1732, %v1814
        %1816 = vmatprep.mubr.f32.mxu0 0.0
        %v1817 = vand.u32 %v1282, 4294901760
        %1818 = vmatmul.mubr.f32.gmra.mxu0 %v1817
        %v1819 = vpop.f32.mrf.mxu0
        %v1820 = vadd.f32 %v1737, %v1819
        %v1821 = vpop.f32.mrf.mxu0
        %v1822 = vadd.f32 %v1739, %v1821
        %1823 = vdwg.mxu0
        %1824 = vmatprep.subr.mxu0 0.0
        %1825 = vmatpush1.msra.mxu0 0.0
        %1826 = vmatprep.subr.mxu0 0.0
        %1827 = vmatpush1.msra.mxu0 0.0
        %1828 = vmatprep.subr.mxu0 0.0
        %1829 = vmatpush1.msra.mxu0 0.0
        %1830 = vmatprep.subr.mxu0 0.0
        %1831 = vmatpush1.msra.mxu0 0.0
        %1832 = vmatprep.subr.mxu0 0.0
        %1833 = vmatpush1.msra.mxu0 0.0
        %1834 = vmatprep.subr.mxu0 0.0
        %1835 = vmatpush1.msra.mxu0 0.0
        %1836 = vmatprep.subr.mxu0 0.0
        %1837 = vmatpush1.msra.mxu0 0.0
        %1838 = vmatprep.subr.mxu0 0.0
        %1839 = vmatpush1.msra.mxu0 0.0
        %1840 = vmatprep.subr.mxu0 0.0
        %1841 = vmatpush1.msra.mxu0 0.0
        %1842 = vmatprep.subr.mxu0 0.0
        %1843 = vmatpush1.msra.mxu0 0.0
        %1844 = vmatprep.subr.mxu0 0.0
        %1845 = vmatpush1.msra.mxu0 0.0
        %1846 = vmatprep.subr.mxu0 0.0
        %1847 = vmatpush1.msra.mxu0 0.0
        %1848 = vmatprep.subr.mxu0 0.0
        %1849 = vmatpush1.msra.mxu0 0.0
        %1850 = vmatprep.subr.mxu0 0.0
        %1851 = vmatpush1.msra.mxu0 0.0
        %1852 = vmatprep.subr.mxu0 0.0
        %v1853 = vand.u32 %v218, 4294901760
        %1854 = vmatpush1.msra.mxu0 %v1853
        %1855 = vmatprep.subr.mxu0 0.0
        %v1856 = vand.u32 %v215, 4294901760
        %1857 = vmatpush1.msra.mxu0 %v1856
        %1858 = vmatprep.subr.mxu0 0.0
        %1859 = vmatpush2.msra.mxu0 0.0
        %1860 = vmatprep.subr.mxu0 0.0
        %1861 = vmatpush2.msra.mxu0 0.0
        %1862 = vmatprep.subr.mxu0 0.0
        %1863 = vmatpush2.msra.mxu0 0.0
        %1864 = vmatprep.subr.mxu0 0.0
        %1865 = vmatpush2.msra.mxu0 0.0
        %1866 = vmatprep.subr.mxu0 0.0
        %1867 = vmatpush2.msra.mxu0 0.0
        %1868 = vmatprep.subr.mxu0 0.0
        %1869 = vmatpush2.msra.mxu0 0.0
        %1870 = vmatprep.subr.mxu0 0.0
        %1871 = vmatpush2.msra.mxu0 0.0
        %1872 = vmatprep.subr.mxu0 0.0
        %1873 = vmatpush2.msra.mxu0 0.0
        %1874 = vmatprep.subr.mxu0 0.0
        %1875 = vmatpush2.msra.mxu0 0.0
        %1876 = vmatprep.subr.mxu0 0.0
        %1877 = vmatpush2.msra.mxu0 0.0
        %1878 = vmatprep.subr.mxu0 0.0
        %1879 = vmatpush2.msra.mxu0 0.0
        %1880 = vmatprep.subr.mxu0 0.0
        %1881 = vmatpush2.msra.mxu0 0.0
        %1882 = vmatprep.subr.mxu0 0.0
        %1883 = vmatpush2.msra.mxu0 0.0
        %1884 = vmatprep.subr.mxu0 0.0
        %1885 = vmatpush2.msra.mxu0 0.0
        %1886 = vmatprep.subr.mxu0 0.0
        %1887 = vmatpush2.msra.mxu0 0.0
        %1888 = vmatprep.subr.mxu0 0.0
        %1889 = vmatpush2.msra.mxu0 0.0
        %1890 = vmatprep.mubr.f32.mxu0 0.0
        %v1891 = vand.u32 %v1279, 4294901760
        %v1892 = vsub.f32 %v1279, %v1891
        %v1893 = vand.u32 %v1892, 4294901760
        %v1894 = vsub.f32 %v1892, %v1893
        %v1895 = vand.u32 %v1894, 4294901760
        %1896 = vmatmul.mubr.f32.gmra.mxu0 %v1895
        %v1897 = vpop.f32.mrf.mxu0
        %v1898 = vadd.f32 %v1269, %v1897
        %v1899 = vpop.f32.mrf.mxu0
        %1900 = vmatprep.mubr.f32.mxu0 0.0
        %v1901 = vand.u32 %v1282, 4294901760
        %v1902 = vsub.f32 %v1282, %v1901
        %v1903 = vand.u32 %v1902, 4294901760
        %v1904 = vsub.f32 %v1902, %v1903
        %v1905 = vand.u32 %v1904, 4294901760
        %1906 = vmatmul.mubr.f32.gmra.mxu0 %v1905
        %v1907 = vpop.f32.mrf.mxu0
        %v1908 = vadd.f32 %v1275, %v1907
        %v1909 = vpop.f32.mrf.mxu0
        %1910 = vdwg.mxu0
        %1911 = vmatprep.subr.mxu0 0.0
        %1912 = vmatpush1.msra.mxu0 0.0
        %1913 = vmatprep.subr.mxu0 0.0
        %1914 = vmatpush1.msra.mxu0 0.0
        %1915 = vmatprep.subr.mxu0 0.0
        %1916 = vmatpush1.msra.mxu0 0.0
        %1917 = vmatprep.subr.mxu0 0.0
        %1918 = vmatpush1.msra.mxu0 0.0
        %1919 = vmatprep.subr.mxu0 0.0
        %1920 = vmatpush1.msra.mxu0 0.0
        %1921 = vmatprep.subr.mxu0 0.0
        %1922 = vmatpush1.msra.mxu0 0.0
        %1923 = vmatprep.subr.mxu0 0.0
        %1924 = vmatpush1.msra.mxu0 0.0
        %1925 = vmatprep.subr.mxu0 0.0
        %1926 = vmatpush1.msra.mxu0 0.0
        %1927 = vmatprep.subr.mxu0 0.0
        %1928 = vmatpush1.msra.mxu0 0.0
        %1929 = vmatprep.subr.mxu0 0.0
        %1930 = vmatpush1.msra.mxu0 0.0
        %1931 = vmatprep.subr.mxu0 0.0
        %1932 = vmatpush1.msra.mxu0 0.0
        %1933 = vmatprep.subr.mxu0 0.0
        %1934 = vmatpush1.msra.mxu0 0.0
        %1935 = vmatprep.subr.mxu0 0.0
        %1936 = vmatpush1.msra.mxu0 0.0
        %1937 = vmatprep.subr.mxu0 0.0
        %1938 = vmatpush1.msra.mxu0 0.0
        %1939 = vmatprep.subr.mxu0 0.0
        %v1940 = vand.u32 %v218, 4294901760
        %v1941 = vsub.f32 %v218, %v1940
        %v1942 = vand.u32 %v1941, 4294901760
        %v1943 = vsub.f32 %v1941, %v1942
        %v1944 = vand.u32 %v1943, 4294901760
        %1945 = vmatpush1.msra.mxu0 %v1944
        %1946 = vmatprep.subr.mxu0 0.0
        %v1947 = vand.u32 %v215, 4294901760
        %v1948 = vsub.f32 %v215, %v1947
        %v1949 = vand.u32 %v1948, 4294901760
        %v1950 = vsub.f32 %v1948, %v1949
        %v1951 = vand.u32 %v1950, 4294901760
        %1952 = vmatpush1.msra.mxu0 %v1951
        %1953 = vmatprep.subr.mxu0 0.0
        %1954 = vmatpush2.msra.mxu0 0.0
        %1955 = vmatprep.subr.mxu0 0.0
        %1956 = vmatpush2.msra.mxu0 0.0
        %1957 = vmatprep.subr.mxu0 0.0
        %1958 = vmatpush2.msra.mxu0 0.0
        %1959 = vmatprep.subr.mxu0 0.0
        %1960 = vmatpush2.msra.mxu0 0.0
        %1961 = vmatprep.subr.mxu0 0.0
        %1962 = vmatpush2.msra.mxu0 0.0
        %1963 = vmatprep.subr.mxu0 0.0
        %1964 = vmatpush2.msra.mxu0 0.0
        %1965 = vmatprep.subr.mxu0 0.0
        %1966 = vmatpush2.msra.mxu0 0.0
        %1967 = vmatprep.subr.mxu0 0.0
        %1968 = vmatpush2.msra.mxu0 0.0
        %1969 = vmatprep.subr.mxu0 0.0
        %1970 = vmatpush2.msra.mxu0 0.0
        %1971 = vmatprep.subr.mxu0 0.0
        %1972 = vmatpush2.msra.mxu0 0.0
        %1973 = vmatprep.subr.mxu0 0.0
        %1974 = vmatpush2.msra.mxu0 0.0
        %1975 = vmatprep.subr.mxu0 0.0
        %1976 = vmatpush2.msra.mxu0 0.0
        %1977 = vmatprep.subr.mxu0 0.0
        %1978 = vmatpush2.msra.mxu0 0.0
        %1979 = vmatprep.subr.mxu0 0.0
        %1980 = vmatpush2.msra.mxu0 0.0
        %1981 = vmatprep.subr.mxu0 0.0
        %1982 = vmatpush2.msra.mxu0 0.0
        %1983 = vmatprep.subr.mxu0 0.0
        %1984 = vmatpush2.msra.mxu0 0.0
        %1985 = vmatprep.mubr.f32.mxu0 0.0
        %v1986 = vand.u32 %v1279, 4294901760
        %1987 = vmatmul.mubr.f32.gmra.mxu0 %v1986
        %v1988 = vpop.f32.mrf.mxu0
        %v1989 = vadd.f32 %v1898, %v1988
        %v1990 = vpop.f32.mrf.mxu0
        %1991 = vmatprep.mubr.f32.mxu0 0.0
        %v1992 = vand.u32 %v1282, 4294901760
        %1993 = vmatmul.mubr.f32.gmra.mxu0 %v1992
        %v1994 = vpop.f32.mrf.mxu0
        %v1995 = vadd.f32 %v1908, %v1994
        %v1996 = vpop.f32.mrf.mxu0
        %1997 = vdwg.mxu0
        %1998 = vmatprep.subr.mxu0 0.0
        %1999 = vmatpush1.msra.mxu0 0.0
        %2000 = vmatprep.subr.mxu0 0.0
        %2001 = vmatpush1.msra.mxu0 0.0
        %2002 = vmatprep.subr.mxu0 0.0
        %2003 = vmatpush1.msra.mxu0 0.0
        %2004 = vmatprep.subr.mxu0 0.0
        %2005 = vmatpush1.msra.mxu0 0.0
        %2006 = vmatprep.subr.mxu0 0.0
        %2007 = vmatpush1.msra.mxu0 0.0
        %2008 = vmatprep.subr.mxu0 0.0
        %2009 = vmatpush1.msra.mxu0 0.0
        %2010 = vmatprep.subr.mxu0 0.0
        %2011 = vmatpush1.msra.mxu0 0.0
        %2012 = vmatprep.subr.mxu0 0.0
        %2013 = vmatpush1.msra.mxu0 0.0
        %2014 = vmatprep.subr.mxu0 0.0
        %2015 = vmatpush1.msra.mxu0 0.0
        %2016 = vmatprep.subr.mxu0 0.0
        %2017 = vmatpush1.msra.mxu0 0.0
        %2018 = vmatprep.subr.mxu0 0.0
        %2019 = vmatpush1.msra.mxu0 0.0
        %2020 = vmatprep.subr.mxu0 0.0
        %2021 = vmatpush1.msra.mxu0 0.0
        %2022 = vmatprep.subr.mxu0 0.0
        %2023 = vmatpush1.msra.mxu0 0.0
        %2024 = vmatprep.subr.mxu0 0.0
        %2025 = vmatpush1.msra.mxu0 0.0
        %2026 = vmatprep.subr.mxu0 0.0
        %v2027 = vand.u32 %v218, 4294901760
        %v2028 = vsub.f32 %v218, %v2027
        %2029 = vmatpush1.msra.mxu0 %v2028
        %2030 = vmatprep.subr.mxu0 0.0
        %v2031 = vand.u32 %v215, 4294901760
        %v2032 = vsub.f32 %v215, %v2031
        %2033 = vmatpush1.msra.mxu0 %v2032
        %2034 = vmatprep.subr.mxu0 0.0
        %2035 = vmatpush2.msra.mxu0 0.0
        %2036 = vmatprep.subr.mxu0 0.0
        %2037 = vmatpush2.msra.mxu0 0.0
        %2038 = vmatprep.subr.mxu0 0.0
        %2039 = vmatpush2.msra.mxu0 0.0
        %2040 = vmatprep.subr.mxu0 0.0
        %2041 = vmatpush2.msra.mxu0 0.0
        %2042 = vmatprep.subr.mxu0 0.0
        %2043 = vmatpush2.msra.mxu0 0.0
        %2044 = vmatprep.subr.mxu0 0.0
        %2045 = vmatpush2.msra.mxu0 0.0
        %2046 = vmatprep.subr.mxu0 0.0
        %2047 = vmatpush2.msra.mxu0 0.0
        %2048 = vmatprep.subr.mxu0 0.0
        %2049 = vmatpush2.msra.mxu0 0.0
        %2050 = vmatprep.subr.mxu0 0.0
        %2051 = vmatpush2.msra.mxu0 0.0
        %2052 = vmatprep.subr.mxu0 0.0
        %2053 = vmatpush2.msra.mxu0 0.0
        %2054 = vmatprep.subr.mxu0 0.0
        %2055 = vmatpush2.msra.mxu0 0.0
        %2056 = vmatprep.subr.mxu0 0.0
        %2057 = vmatpush2.msra.mxu0 0.0
        %2058 = vmatprep.subr.mxu0 0.0
        %2059 = vmatpush2.msra.mxu0 0.0
        %2060 = vmatprep.subr.mxu0 0.0
        %2061 = vmatpush2.msra.mxu0 0.0
        %2062 = vmatprep.subr.mxu0 0.0
        %2063 = vmatpush2.msra.mxu0 0.0
        %2064 = vmatprep.subr.mxu0 0.0
        %2065 = vmatpush2.msra.mxu0 0.0
        %2066 = vmatprep.mubr.f32.mxu0 0.0
        %v2067 = vand.u32 %v1279, 4294901760
        %v2068 = vsub.f32 %v1279, %v2067
        %2069 = vmatmul.mubr.f32.gmra.mxu0 %v2068
        %v2070 = vpop.f32.mrf.mxu0
        %v2071 = vadd.f32 %v1989, %v2070
        %v2072 = vpop.f32.mrf.mxu0
        %2073 = vmatprep.mubr.f32.mxu0 0.0
        %v2074 = vand.u32 %v1282, 4294901760
        %v2075 = vsub.f32 %v1282, %v2074
        %2076 = vmatmul.mubr.f32.gmra.mxu0 %v2075
        %v2077 = vpop.f32.mrf.mxu0
        %v2078 = vadd.f32 %v1995, %v2077
        %v2079 = vpop.f32.mrf.mxu0
        %2080 = vdwg.mxu0
        %2081 = vmatprep.subr.mxu0 0.0
        %2082 = vmatpush1.msra.mxu0 0.0
        %2083 = vmatprep.subr.mxu0 0.0
        %2084 = vmatpush1.msra.mxu0 0.0
        %2085 = vmatprep.subr.mxu0 0.0
        %2086 = vmatpush1.msra.mxu0 0.0
        %2087 = vmatprep.subr.mxu0 0.0
        %2088 = vmatpush1.msra.mxu0 0.0
        %2089 = vmatprep.subr.mxu0 0.0
        %2090 = vmatpush1.msra.mxu0 0.0
        %2091 = vmatprep.subr.mxu0 0.0
        %2092 = vmatpush1.msra.mxu0 0.0
        %2093 = vmatprep.subr.mxu0 0.0
        %2094 = vmatpush1.msra.mxu0 0.0
        %2095 = vmatprep.subr.mxu0 0.0
        %2096 = vmatpush1.msra.mxu0 0.0
        %2097 = vmatprep.subr.mxu0 0.0
        %2098 = vmatpush1.msra.mxu0 0.0
        %2099 = vmatprep.subr.mxu0 0.0
        %2100 = vmatpush1.msra.mxu0 0.0
        %2101 = vmatprep.subr.mxu0 0.0
        %2102 = vmatpush1.msra.mxu0 0.0
        %2103 = vmatprep.subr.mxu0 0.0
        %2104 = vmatpush1.msra.mxu0 0.0
        %2105 = vmatprep.subr.mxu0 0.0
        %2106 = vmatpush1.msra.mxu0 0.0
        %2107 = vmatprep.subr.mxu0 0.0
        %2108 = vmatpush1.msra.mxu0 0.0
        %2109 = vmatprep.subr.mxu0 0.0
        %v2110 = vand.u32 %v218, 4294901760
        %2111 = vmatpush1.msra.mxu0 %v2110
        %2112 = vmatprep.subr.mxu0 0.0
        %v2113 = vand.u32 %v215, 4294901760
        %2114 = vmatpush1.msra.mxu0 %v2113
        %2115 = vmatprep.subr.mxu0 0.0
        %2116 = vmatpush2.msra.mxu0 0.0
        %2117 = vmatprep.subr.mxu0 0.0
        %2118 = vmatpush2.msra.mxu0 0.0
        %2119 = vmatprep.subr.mxu0 0.0
        %2120 = vmatpush2.msra.mxu0 0.0
        %2121 = vmatprep.subr.mxu0 0.0
        %2122 = vmatpush2.msra.mxu0 0.0
        %2123 = vmatprep.subr.mxu0 0.0
        %2124 = vmatpush2.msra.mxu0 0.0
        %2125 = vmatprep.subr.mxu0 0.0
        %2126 = vmatpush2.msra.mxu0 0.0
        %2127 = vmatprep.subr.mxu0 0.0
        %2128 = vmatpush2.msra.mxu0 0.0
        %2129 = vmatprep.subr.mxu0 0.0
        %2130 = vmatpush2.msra.mxu0 0.0
        %2131 = vmatprep.subr.mxu0 0.0
        %2132 = vmatpush2.msra.mxu0 0.0
        %2133 = vmatprep.subr.mxu0 0.0
        %2134 = vmatpush2.msra.mxu0 0.0
        %2135 = vmatprep.subr.mxu0 0.0
        %2136 = vmatpush2.msra.mxu0 0.0
        %2137 = vmatprep.subr.mxu0 0.0
        %2138 = vmatpush2.msra.mxu0 0.0
        %2139 = vmatprep.subr.mxu0 0.0
        %2140 = vmatpush2.msra.mxu0 0.0
        %2141 = vmatprep.subr.mxu0 0.0
        %2142 = vmatpush2.msra.mxu0 0.0
        %2143 = vmatprep.subr.mxu0 0.0
        %2144 = vmatpush2.msra.mxu0 0.0
        %2145 = vmatprep.subr.mxu0 0.0
        %2146 = vmatpush2.msra.mxu0 0.0
        %2147 = vmatprep.mubr.f32.mxu0 0.0
        %v2148 = vand.u32 %v1279, 4294901760
        %v2149 = vsub.f32 %v1279, %v2148
        %v2150 = vand.u32 %v2149, 4294901760
        %2151 = vmatmul.mubr.f32.gmra.mxu0 %v2150
        %v2152 = vpop.f32.mrf.mxu0
        %v2153 = vadd.f32 %v2071, %v2152
        %v2154 = vpop.f32.mrf.mxu0
        %2155 = vmatprep.mubr.f32.mxu0 0.0
        %v2156 = vand.u32 %v1282, 4294901760
        %v2157 = vsub.f32 %v1282, %v2156
        %v2158 = vand.u32 %v2157, 4294901760
        %2159 = vmatmul.mubr.f32.gmra.mxu0 %v2158
        %v2160 = vpop.f32.mrf.mxu0
        %v2161 = vadd.f32 %v2078, %v2160
        %v2162 = vpop.f32.mrf.mxu0
        %2163 = vdwg.mxu0
        %2164 = vmatprep.subr.mxu0 0.0
        %2165 = vmatpush1.msra.mxu0 0.0
        %2166 = vmatprep.subr.mxu0 0.0
        %2167 = vmatpush1.msra.mxu0 0.0
        %2168 = vmatprep.subr.mxu0 0.0
        %2169 = vmatpush1.msra.mxu0 0.0
        %2170 = vmatprep.subr.mxu0 0.0
        %2171 = vmatpush1.msra.mxu0 0.0
        %2172 = vmatprep.subr.mxu0 0.0
        %2173 = vmatpush1.msra.mxu0 0.0
        %2174 = vmatprep.subr.mxu0 0.0
        %2175 = vmatpush1.msra.mxu0 0.0
        %2176 = vmatprep.subr.mxu0 0.0
        %2177 = vmatpush1.msra.mxu0 0.0
        %2178 = vmatprep.subr.mxu0 0.0
        %2179 = vmatpush1.msra.mxu0 0.0
        %2180 = vmatprep.subr.mxu0 0.0
        %2181 = vmatpush1.msra.mxu0 0.0
        %2182 = vmatprep.subr.mxu0 0.0
        %2183 = vmatpush1.msra.mxu0 0.0
        %2184 = vmatprep.subr.mxu0 0.0
        %2185 = vmatpush1.msra.mxu0 0.0
        %2186 = vmatprep.subr.mxu0 0.0
        %2187 = vmatpush1.msra.mxu0 0.0
        %2188 = vmatprep.subr.mxu0 0.0
        %2189 = vmatpush1.msra.mxu0 0.0
        %2190 = vmatprep.subr.mxu0 0.0
        %2191 = vmatpush1.msra.mxu0 0.0
        %2192 = vmatprep.subr.mxu0 0.0
        %v2193 = vand.u32 %v218, 4294901760
        %v2194 = vsub.f32 %v218, %v2193
        %v2195 = vand.u32 %v2194, 4294901760
        %2196 = vmatpush1.msra.mxu0 %v2195
        %2197 = vmatprep.subr.mxu0 0.0
        %v2198 = vand.u32 %v215, 4294901760
        %v2199 = vsub.f32 %v215, %v2198
        %v2200 = vand.u32 %v2199, 4294901760
        %2201 = vmatpush1.msra.mxu0 %v2200
        %2202 = vmatprep.subr.mxu0 0.0
        %2203 = vmatpush2.msra.mxu0 0.0
        %2204 = vmatprep.subr.mxu0 0.0
        %2205 = vmatpush2.msra.mxu0 0.0
        %2206 = vmatprep.subr.mxu0 0.0
        %2207 = vmatpush2.msra.mxu0 0.0
        %2208 = vmatprep.subr.mxu0 0.0
        %2209 = vmatpush2.msra.mxu0 0.0
        %2210 = vmatprep.subr.mxu0 0.0
        %2211 = vmatpush2.msra.mxu0 0.0
        %2212 = vmatprep.subr.mxu0 0.0
        %2213 = vmatpush2.msra.mxu0 0.0
        %2214 = vmatprep.subr.mxu0 0.0
        %2215 = vmatpush2.msra.mxu0 0.0
        %2216 = vmatprep.subr.mxu0 0.0
        %2217 = vmatpush2.msra.mxu0 0.0
        %2218 = vmatprep.subr.mxu0 0.0
        %2219 = vmatpush2.msra.mxu0 0.0
        %2220 = vmatprep.subr.mxu0 0.0
        %2221 = vmatpush2.msra.mxu0 0.0
        %2222 = vmatprep.subr.mxu0 0.0
        %2223 = vmatpush2.msra.mxu0 0.0
        %2224 = vmatprep.subr.mxu0 0.0
        %2225 = vmatpush2.msra.mxu0 0.0
        %2226 = vmatprep.subr.mxu0 0.0
        %2227 = vmatpush2.msra.mxu0 0.0
        %2228 = vmatprep.subr.mxu0 0.0
        %2229 = vmatpush2.msra.mxu0 0.0
        %2230 = vmatprep.subr.mxu0 0.0
        %2231 = vmatpush2.msra.mxu0 0.0
        %2232 = vmatprep.subr.mxu0 0.0
        %2233 = vmatpush2.msra.mxu0 0.0
        %2234 = vmatprep.mubr.f32.mxu0 0.0
        %v2235 = vand.u32 %v1279, 4294901760
        %2236 = vmatmul.mubr.f32.gmra.mxu0 %v2235
        %v2237 = vpop.f32.mrf.mxu0
        %v2238 = vadd.f32 %v2153, %v2237
        %v2239 = vpop.f32.mrf.mxu0
        %2240 = vmatprep.mubr.f32.mxu0 0.0
        %v2241 = vand.u32 %v1282, 4294901760
        %2242 = vmatmul.mubr.f32.gmra.mxu0 %v2241
        %v2243 = vpop.f32.mrf.mxu0
        %v2244 = vadd.f32 %v2161, %v2243
        %v2245 = vpop.f32.mrf.mxu0
        %2246 = vdwg.mxu0
        %2247 = vmatprep.subr.mxu0 0.0
        %2248 = vmatpush1.msra.mxu0 0.0
        %2249 = vmatprep.subr.mxu0 0.0
        %2250 = vmatpush1.msra.mxu0 0.0
        %2251 = vmatprep.subr.mxu0 0.0
        %2252 = vmatpush1.msra.mxu0 0.0
        %2253 = vmatprep.subr.mxu0 0.0
        %2254 = vmatpush1.msra.mxu0 0.0
        %2255 = vmatprep.subr.mxu0 0.0
        %2256 = vmatpush1.msra.mxu0 0.0
        %2257 = vmatprep.subr.mxu0 0.0
        %2258 = vmatpush1.msra.mxu0 0.0
        %2259 = vmatprep.subr.mxu0 0.0
        %2260 = vmatpush1.msra.mxu0 0.0
        %2261 = vmatprep.subr.mxu0 0.0
        %2262 = vmatpush1.msra.mxu0 0.0
        %2263 = vmatprep.subr.mxu0 0.0
        %2264 = vmatpush1.msra.mxu0 0.0
        %2265 = vmatprep.subr.mxu0 0.0
        %2266 = vmatpush1.msra.mxu0 0.0
        %2267 = vmatprep.subr.mxu0 0.0
        %2268 = vmatpush1.msra.mxu0 0.0
        %2269 = vmatprep.subr.mxu0 0.0
        %2270 = vmatpush1.msra.mxu0 0.0
        %2271 = vmatprep.subr.mxu0 0.0
        %2272 = vmatpush1.msra.mxu0 0.0
        %2273 = vmatprep.subr.mxu0 0.0
        %2274 = vmatpush1.msra.mxu0 0.0
        %2275 = vmatprep.subr.mxu0 0.0
        %v2276 = vand.u32 %v218, 4294901760
        %2277 = vmatpush1.msra.mxu0 %v2276
        %2278 = vmatprep.subr.mxu0 0.0
        %v2279 = vand.u32 %v215, 4294901760
        %2280 = vmatpush1.msra.mxu0 %v2279
        %2281 = vmatprep.subr.mxu0 0.0
        %2282 = vmatpush2.msra.mxu0 0.0
        %2283 = vmatprep.subr.mxu0 0.0
        %2284 = vmatpush2.msra.mxu0 0.0
        %2285 = vmatprep.subr.mxu0 0.0
        %2286 = vmatpush2.msra.mxu0 0.0
        %2287 = vmatprep.subr.mxu0 0.0
        %2288 = vmatpush2.msra.mxu0 0.0
        %2289 = vmatprep.subr.mxu0 0.0
        %2290 = vmatpush2.msra.mxu0 0.0
        %2291 = vmatprep.subr.mxu0 0.0
        %2292 = vmatpush2.msra.mxu0 0.0
        %2293 = vmatprep.subr.mxu0 0.0
        %2294 = vmatpush2.msra.mxu0 0.0
        %2295 = vmatprep.subr.mxu0 0.0
        %2296 = vmatpush2.msra.mxu0 0.0
        %2297 = vmatprep.subr.mxu0 0.0
        %2298 = vmatpush2.msra.mxu0 0.0
        %2299 = vmatprep.subr.mxu0 0.0
        %2300 = vmatpush2.msra.mxu0 0.0
        %2301 = vmatprep.subr.mxu0 0.0
        %2302 = vmatpush2.msra.mxu0 0.0
        %2303 = vmatprep.subr.mxu0 0.0
        %2304 = vmatpush2.msra.mxu0 0.0
        %2305 = vmatprep.subr.mxu0 0.0
        %2306 = vmatpush2.msra.mxu0 0.0
        %2307 = vmatprep.subr.mxu0 0.0
        %2308 = vmatpush2.msra.mxu0 0.0
        %2309 = vmatprep.subr.mxu0 0.0
        %2310 = vmatpush2.msra.mxu0 0.0
        %2311 = vmatprep.subr.mxu0 0.0
        %2312 = vmatpush2.msra.mxu0 0.0
        %2313 = vmatprep.mubr.f32.mxu0 0.0
        %v2314 = vand.u32 %v1279, 4294901760
        %2315 = vmatmul.mubr.f32.gmra.mxu0 %v2314
        %v2316 = vpop.f32.mrf.mxu0
        %v2317 = vadd.f32 %v2238, %v2316
        %v2318 = vpop.f32.mrf.mxu0
        %2319 = vmatprep.mubr.f32.mxu0 0.0
        %v2320 = vand.u32 %v1282, 4294901760
        %2321 = vmatmul.mubr.f32.gmra.mxu0 %v2320
        %v2322 = vpop.f32.mrf.mxu0
        %v2323 = vadd.f32 %v2244, %v2322
        %v2324 = vpop.f32.mrf.mxu0
        %2325 = vdwg.mxu0
        %s2326 = scalar_lea.vmem %s210, 32
        %v2327 = vld [vmem:[%s2326] sm:$0xff]
        %v2328 = vld [vmem:[%s2326 + $0x8] sm:$0xff]
        %s2329 = scalar_lea.vmem [#allocation2], 96
        %v2330 = vld [vmem:[%s2329] sm:$0xff]
        %v2331 = vld [vmem:[%s2329 + $0x8] sm:$0xff]
        %v2332 = vld [vmem:[%s2329 + $0x10] sm:$0xff]
        %v2333 = vld [vmem:[%s2329 + $0x18] sm:$0xff]
        %v2334 = vld [vmem:[%s2329 + $0x20] sm:$0xff]
        %v2335 = vld [vmem:[%s2329 + $0x28] sm:$0xff]
        %v2337 = vsel %vm229, %v2327, 0
        %v2340 = vsel %vm229, %v2328, 0
        %2342 = vmatprep.subr.mxu0 0.0
        %2343 = vmatpush1.msra.mxu0 0.0
        %2344 = vmatprep.subr.mxu0 0.0
        %2345 = vmatpush1.msra.mxu0 0.0
        %2346 = vmatprep.subr.mxu0 0.0
        %2347 = vmatpush1.msra.mxu0 0.0
        %2348 = vmatprep.subr.mxu0 0.0
        %2349 = vmatpush1.msra.mxu0 0.0
        %2350 = vmatprep.subr.mxu0 0.0
        %2351 = vmatpush1.msra.mxu0 0.0
        %2352 = vmatprep.subr.mxu0 0.0
        %2353 = vmatpush1.msra.mxu0 0.0
        %2354 = vmatprep.subr.mxu0 0.0
        %2355 = vmatpush1.msra.mxu0 0.0
        %2356 = vmatprep.subr.mxu0 0.0
        %2357 = vmatpush1.msra.mxu0 0.0
        %2358 = vmatprep.subr.mxu0 0.0
        %2359 = vmatpush1.msra.mxu0 0.0
        %2360 = vmatprep.subr.mxu0 0.0
        %2361 = vmatpush1.msra.mxu0 0.0
        %2362 = vmatprep.subr.mxu0 0.0
        %2363 = vmatpush1.msra.mxu0 0.0
        %2364 = vmatprep.subr.mxu0 0.0
        %2365 = vmatpush1.msra.mxu0 0.0
        %2366 = vmatprep.subr.mxu0 0.0
        %2367 = vmatpush1.msra.mxu0 0.0
        %2368 = vmatprep.subr.mxu0 0.0
        %2369 = vmatpush1.msra.mxu0 0.0
        %v2370 = vand.u32 %v2334, 4294901760
        %2371 = vmatprep.subr.mxu0 %v2370
        %v2372 = vand.u32 %v2333, 4294901760
        %2373 = vmatpush1.msra.mxu0 %v2372
        %v2374 = vand.u32 %v2331, 4294901760
        %2375 = vmatprep.subr.mxu0 %v2374
        %v2376 = vand.u32 %v2330, 4294901760
        %2377 = vmatpush1.msra.mxu0 %v2376
        %2378 = vmatprep.subr.mxu0 0.0
        %2379 = vmatpush2.msra.mxu0 0.0
        %2380 = vmatprep.subr.mxu0 0.0
        %2381 = vmatpush2.msra.mxu0 0.0
        %2382 = vmatprep.subr.mxu0 0.0
        %2383 = vmatpush2.msra.mxu0 0.0
        %2384 = vmatprep.subr.mxu0 0.0
        %2385 = vmatpush2.msra.mxu0 0.0
        %2386 = vmatprep.subr.mxu0 0.0
        %2387 = vmatpush2.msra.mxu0 0.0
        %2388 = vmatprep.subr.mxu0 0.0
        %2389 = vmatpush2.msra.mxu0 0.0
        %2390 = vmatprep.subr.mxu0 0.0
        %2391 = vmatpush2.msra.mxu0 0.0
        %2392 = vmatprep.subr.mxu0 0.0
        %2393 = vmatpush2.msra.mxu0 0.0
        %2394 = vmatprep.subr.mxu0 0.0
        %2395 = vmatpush2.msra.mxu0 0.0
        %2396 = vmatprep.subr.mxu0 0.0
        %2397 = vmatpush2.msra.mxu0 0.0
        %2398 = vmatprep.subr.mxu0 0.0
        %2399 = vmatpush2.msra.mxu0 0.0
        %2400 = vmatprep.subr.mxu0 0.0
        %2401 = vmatpush2.msra.mxu0 0.0
        %2402 = vmatprep.subr.mxu0 0.0
        %2403 = vmatpush2.msra.mxu0 0.0
        %2404 = vmatprep.subr.mxu0 0.0
        %2405 = vmatpush2.msra.mxu0 0.0
        %2406 = vmatprep.subr.mxu0 0.0
        %2407 = vmatpush2.msra.mxu0 0.0
        %2408 = vmatprep.subr.mxu0 0.0
        %2409 = vmatpush2.msra.mxu0 0.0
        %2410 = vmatprep.mubr.f32.mxu0 0.0
        %v2411 = vand.u32 %v2337, 4294901760
        %v2412 = vsub.f32 %v2337, %v2411
        %v2413 = vand.u32 %v2412, 4294901760
        %v2414 = vsub.f32 %v2412, %v2413
        %v2415 = vand.u32 %v2414, 4294901760
        %2416 = vmatmul.mubr.f32.gmra.mxu0 %v2415
        %v2417 = vpop.f32.mrf.mxu0
        %v2418 = vadd.f32 0.0, %v2417
        %v2419 = vpop.f32.mrf.mxu0
        %v2420 = vadd.f32 0.0, %v2419
        %2421 = vmatprep.mubr.f32.mxu0 0.0
        %v2422 = vand.u32 %v2340, 4294901760
        %v2423 = vsub.f32 %v2340, %v2422
        %v2424 = vand.u32 %v2423, 4294901760
        %v2425 = vsub.f32 %v2423, %v2424
        %v2426 = vand.u32 %v2425, 4294901760
        %2427 = vmatmul.mubr.f32.gmra.mxu0 %v2426
        %v2428 = vpop.f32.mrf.mxu0
        %v2429 = vadd.f32 0.0, %v2428
        %v2430 = vpop.f32.mrf.mxu0
        %v2431 = vadd.f32 0.0, %v2430
        %2432 = vdwg.mxu0
        %2433 = vmatprep.subr.mxu0 0.0
        %2434 = vmatpush1.msra.mxu0 0.0
        %2435 = vmatprep.subr.mxu0 0.0
        %2436 = vmatpush1.msra.mxu0 0.0
        %2437 = vmatprep.subr.mxu0 0.0
        %2438 = vmatpush1.msra.mxu0 0.0
        %2439 = vmatprep.subr.mxu0 0.0
        %2440 = vmatpush1.msra.mxu0 0.0
        %2441 = vmatprep.subr.mxu0 0.0
        %2442 = vmatpush1.msra.mxu0 0.0
        %2443 = vmatprep.subr.mxu0 0.0
        %2444 = vmatpush1.msra.mxu0 0.0
        %2445 = vmatprep.subr.mxu0 0.0
        %2446 = vmatpush1.msra.mxu0 0.0
        %2447 = vmatprep.subr.mxu0 0.0
        %2448 = vmatpush1.msra.mxu0 0.0
        %2449 = vmatprep.subr.mxu0 0.0
        %2450 = vmatpush1.msra.mxu0 0.0
        %2451 = vmatprep.subr.mxu0 0.0
        %2452 = vmatpush1.msra.mxu0 0.0
        %2453 = vmatprep.subr.mxu0 0.0
        %2454 = vmatpush1.msra.mxu0 0.0
        %2455 = vmatprep.subr.mxu0 0.0
        %2456 = vmatpush1.msra.mxu0 0.0
        %2457 = vmatprep.subr.mxu0 0.0
        %2458 = vmatpush1.msra.mxu0 0.0
        %2459 = vmatprep.subr.mxu0 0.0
        %2460 = vmatpush1.msra.mxu0 0.0
        %v2461 = vand.u32 %v2334, 4294901760
        %v2462 = vsub.f32 %v2334, %v2461
        %v2463 = vand.u32 %v2462, 4294901760
        %v2464 = vsub.f32 %v2462, %v2463
        %v2465 = vand.u32 %v2464, 4294901760
        %2466 = vmatprep.subr.mxu0 %v2465
        %v2467 = vand.u32 %v2333, 4294901760
        %v2468 = vsub.f32 %v2333, %v2467
        %v2469 = vand.u32 %v2468, 4294901760
        %v2470 = vsub.f32 %v2468, %v2469
        %v2471 = vand.u32 %v2470, 4294901760
        %2472 = vmatpush1.msra.mxu0 %v2471
        %v2473 = vand.u32 %v2331, 4294901760
        %v2474 = vsub.f32 %v2331, %v2473
        %v2475 = vand.u32 %v2474, 4294901760
        %v2476 = vsub.f32 %v2474, %v2475
        %v2477 = vand.u32 %v2476, 4294901760
        %2478 = vmatprep.subr.mxu0 %v2477
        %v2479 = vand.u32 %v2330, 4294901760
        %v2480 = vsub.f32 %v2330, %v2479
        %v2481 = vand.u32 %v2480, 4294901760
        %v2482 = vsub.f32 %v2480, %v2481
        %v2483 = vand.u32 %v2482, 4294901760
        %2484 = vmatpush1.msra.mxu0 %v2483
        %2485 = vmatprep.subr.mxu0 0.0
        %2486 = vmatpush2.msra.mxu0 0.0
        %2487 = vmatprep.subr.mxu0 0.0
        %2488 = vmatpush2.msra.mxu0 0.0
        %2489 = vmatprep.subr.mxu0 0.0
        %2490 = vmatpush2.msra.mxu0 0.0
        %2491 = vmatprep.subr.mxu0 0.0
        %2492 = vmatpush2.msra.mxu0 0.0
        %2493 = vmatprep.subr.mxu0 0.0
        %2494 = vmatpush2.msra.mxu0 0.0
        %2495 = vmatprep.subr.mxu0 0.0
        %2496 = vmatpush2.msra.mxu0 0.0
        %2497 = vmatprep.subr.mxu0 0.0
        %2498 = vmatpush2.msra.mxu0 0.0
        %2499 = vmatprep.subr.mxu0 0.0
        %2500 = vmatpush2.msra.mxu0 0.0
        %2501 = vmatprep.subr.mxu0 0.0
        %2502 = vmatpush2.msra.mxu0 0.0
        %2503 = vmatprep.subr.mxu0 0.0
        %2504 = vmatpush2.msra.mxu0 0.0
        %2505 = vmatprep.subr.mxu0 0.0
        %2506 = vmatpush2.msra.mxu0 0.0
        %2507 = vmatprep.subr.mxu0 0.0
        %2508 = vmatpush2.msra.mxu0 0.0
        %2509 = vmatprep.subr.mxu0 0.0
        %2510 = vmatpush2.msra.mxu0 0.0
        %2511 = vmatprep.subr.mxu0 0.0
        %2512 = vmatpush2.msra.mxu0 0.0
        %2513 = vmatprep.subr.mxu0 0.0
        %2514 = vmatpush2.msra.mxu0 0.0
        %2515 = vmatprep.subr.mxu0 0.0
        %2516 = vmatpush2.msra.mxu0 0.0
        %2517 = vmatprep.mubr.f32.mxu0 0.0
        %v2518 = vand.u32 %v2337, 4294901760
        %2519 = vmatmul.mubr.f32.gmra.mxu0 %v2518
        %v2520 = vpop.f32.mrf.mxu0
        %v2521 = vadd.f32 %v2418, %v2520
        %v2522 = vpop.f32.mrf.mxu0
        %v2523 = vadd.f32 %v2420, %v2522
        %2524 = vmatprep.mubr.f32.mxu0 0.0
        %v2525 = vand.u32 %v2340, 4294901760
        %2526 = vmatmul.mubr.f32.gmra.mxu0 %v2525
        %v2527 = vpop.f32.mrf.mxu0
        %v2528 = vadd.f32 %v2429, %v2527
        %v2529 = vpop.f32.mrf.mxu0
        %v2530 = vadd.f32 %v2431, %v2529
        %2531 = vdwg.mxu0
        %2532 = vmatprep.subr.mxu0 0.0
        %2533 = vmatpush1.msra.mxu0 0.0
        %2534 = vmatprep.subr.mxu0 0.0
        %2535 = vmatpush1.msra.mxu0 0.0
        %2536 = vmatprep.subr.mxu0 0.0
        %2537 = vmatpush1.msra.mxu0 0.0
        %2538 = vmatprep.subr.mxu0 0.0
        %2539 = vmatpush1.msra.mxu0 0.0
        %2540 = vmatprep.subr.mxu0 0.0
        %2541 = vmatpush1.msra.mxu0 0.0
        %2542 = vmatprep.subr.mxu0 0.0
        %2543 = vmatpush1.msra.mxu0 0.0
        %2544 = vmatprep.subr.mxu0 0.0
        %2545 = vmatpush1.msra.mxu0 0.0
        %2546 = vmatprep.subr.mxu0 0.0
        %2547 = vmatpush1.msra.mxu0 0.0
        %2548 = vmatprep.subr.mxu0 0.0
        %2549 = vmatpush1.msra.mxu0 0.0
        %2550 = vmatprep.subr.mxu0 0.0
        %2551 = vmatpush1.msra.mxu0 0.0
        %2552 = vmatprep.subr.mxu0 0.0
        %2553 = vmatpush1.msra.mxu0 0.0
        %2554 = vmatprep.subr.mxu0 0.0
        %2555 = vmatpush1.msra.mxu0 0.0
        %2556 = vmatprep.subr.mxu0 0.0
        %2557 = vmatpush1.msra.mxu0 0.0
        %2558 = vmatprep.subr.mxu0 0.0
        %2559 = vmatpush1.msra.mxu0 0.0
        %v2560 = vand.u32 %v2334, 4294901760
        %v2561 = vsub.f32 %v2334, %v2560
        %2562 = vmatprep.subr.mxu0 %v2561
        %v2563 = vand.u32 %v2333, 4294901760
        %v2564 = vsub.f32 %v2333, %v2563
        %2565 = vmatpush1.msra.mxu0 %v2564
        %v2566 = vand.u32 %v2331, 4294901760
        %v2567 = vsub.f32 %v2331, %v2566
        %2568 = vmatprep.subr.mxu0 %v2567
        %v2569 = vand.u32 %v2330, 4294901760
        %v2570 = vsub.f32 %v2330, %v2569
        %2571 = vmatpush1.msra.mxu0 %v2570
        %2572 = vmatprep.subr.mxu0 0.0
        %2573 = vmatpush2.msra.mxu0 0.0
        %2574 = vmatprep.subr.mxu0 0.0
        %2575 = vmatpush2.msra.mxu0 0.0
        %2576 = vmatprep.subr.mxu0 0.0
        %2577 = vmatpush2.msra.mxu0 0.0
        %2578 = vmatprep.subr.mxu0 0.0
        %2579 = vmatpush2.msra.mxu0 0.0
        %2580 = vmatprep.subr.mxu0 0.0
        %2581 = vmatpush2.msra.mxu0 0.0
        %2582 = vmatprep.subr.mxu0 0.0
        %2583 = vmatpush2.msra.mxu0 0.0
        %2584 = vmatprep.subr.mxu0 0.0
        %2585 = vmatpush2.msra.mxu0 0.0
        %2586 = vmatprep.subr.mxu0 0.0
        %2587 = vmatpush2.msra.mxu0 0.0
        %2588 = vmatprep.subr.mxu0 0.0
        %2589 = vmatpush2.msra.mxu0 0.0
        %2590 = vmatprep.subr.mxu0 0.0
        %2591 = vmatpush2.msra.mxu0 0.0
        %2592 = vmatprep.subr.mxu0 0.0
        %2593 = vmatpush2.msra.mxu0 0.0
        %2594 = vmatprep.subr.mxu0 0.0
        %2595 = vmatpush2.msra.mxu0 0.0
        %2596 = vmatprep.subr.mxu0 0.0
        %2597 = vmatpush2.msra.mxu0 0.0
        %2598 = vmatprep.subr.mxu0 0.0
        %2599 = vmatpush2.msra.mxu0 0.0
        %2600 = vmatprep.subr.mxu0 0.0
        %2601 = vmatpush2.msra.mxu0 0.0
        %2602 = vmatprep.subr.mxu0 0.0
        %2603 = vmatpush2.msra.mxu0 0.0
        %2604 = vmatprep.mubr.f32.mxu0 0.0
        %v2605 = vand.u32 %v2337, 4294901760
        %v2606 = vsub.f32 %v2337, %v2605
        %2607 = vmatmul.mubr.f32.gmra.mxu0 %v2606
        %v2608 = vpop.f32.mrf.mxu0
        %v2609 = vadd.f32 %v2521, %v2608
        %v2610 = vpop.f32.mrf.mxu0
        %v2611 = vadd.f32 %v2523, %v2610
        %2612 = vmatprep.mubr.f32.mxu0 0.0
        %v2613 = vand.u32 %v2340, 4294901760
        %v2614 = vsub.f32 %v2340, %v2613
        %2615 = vmatmul.mubr.f32.gmra.mxu0 %v2614
        %v2616 = vpop.f32.mrf.mxu0
        %v2617 = vadd.f32 %v2528, %v2616
        %v2618 = vpop.f32.mrf.mxu0
        %v2619 = vadd.f32 %v2530, %v2618
        %2620 = vdwg.mxu0
        %2621 = vmatprep.subr.mxu0 0.0
        %2622 = vmatpush1.msra.mxu0 0.0
        %2623 = vmatprep.subr.mxu0 0.0
        %2624 = vmatpush1.msra.mxu0 0.0
        %2625 = vmatprep.subr.mxu0 0.0
        %2626 = vmatpush1.msra.mxu0 0.0
        %2627 = vmatprep.subr.mxu0 0.0
        %2628 = vmatpush1.msra.mxu0 0.0
        %2629 = vmatprep.subr.mxu0 0.0
        %2630 = vmatpush1.msra.mxu0 0.0
        %2631 = vmatprep.subr.mxu0 0.0
        %2632 = vmatpush1.msra.mxu0 0.0
        %2633 = vmatprep.subr.mxu0 0.0
        %2634 = vmatpush1.msra.mxu0 0.0
        %2635 = vmatprep.subr.mxu0 0.0
        %2636 = vmatpush1.msra.mxu0 0.0
        %2637 = vmatprep.subr.mxu0 0.0
        %2638 = vmatpush1.msra.mxu0 0.0
        %2639 = vmatprep.subr.mxu0 0.0
        %2640 = vmatpush1.msra.mxu0 0.0
        %2641 = vmatprep.subr.mxu0 0.0
        %2642 = vmatpush1.msra.mxu0 0.0
        %2643 = vmatprep.subr.mxu0 0.0
        %2644 = vmatpush1.msra.mxu0 0.0
        %2645 = vmatprep.subr.mxu0 0.0
        %2646 = vmatpush1.msra.mxu0 0.0
        %2647 = vmatprep.subr.mxu0 0.0
        %2648 = vmatpush1.msra.mxu0 0.0
        %v2649 = vand.u32 %v2334, 4294901760
        %2650 = vmatprep.subr.mxu0 %v2649
        %v2651 = vand.u32 %v2333, 4294901760
        %2652 = vmatpush1.msra.mxu0 %v2651
        %v2653 = vand.u32 %v2331, 4294901760
        %2654 = vmatprep.subr.mxu0 %v2653
        %v2655 = vand.u32 %v2330, 4294901760
        %2656 = vmatpush1.msra.mxu0 %v2655
        %2657 = vmatprep.subr.mxu0 0.0
        %2658 = vmatpush2.msra.mxu0 0.0
        %2659 = vmatprep.subr.mxu0 0.0
        %2660 = vmatpush2.msra.mxu0 0.0
        %2661 = vmatprep.subr.mxu0 0.0
        %2662 = vmatpush2.msra.mxu0 0.0
        %2663 = vmatprep.subr.mxu0 0.0
        %2664 = vmatpush2.msra.mxu0 0.0
        %2665 = vmatprep.subr.mxu0 0.0
        %2666 = vmatpush2.msra.mxu0 0.0
        %2667 = vmatprep.subr.mxu0 0.0
        %2668 = vmatpush2.msra.mxu0 0.0
        %2669 = vmatprep.subr.mxu0 0.0
        %2670 = vmatpush2.msra.mxu0 0.0
        %2671 = vmatprep.subr.mxu0 0.0
        %2672 = vmatpush2.msra.mxu0 0.0
        %2673 = vmatprep.subr.mxu0 0.0
        %2674 = vmatpush2.msra.mxu0 0.0
        %2675 = vmatprep.subr.mxu0 0.0
        %2676 = vmatpush2.msra.mxu0 0.0
        %2677 = vmatprep.subr.mxu0 0.0
        %2678 = vmatpush2.msra.mxu0 0.0
        %2679 = vmatprep.subr.mxu0 0.0
        %2680 = vmatpush2.msra.mxu0 0.0
        %2681 = vmatprep.subr.mxu0 0.0
        %2682 = vmatpush2.msra.mxu0 0.0
        %2683 = vmatprep.subr.mxu0 0.0
        %2684 = vmatpush2.msra.mxu0 0.0
        %2685 = vmatprep.subr.mxu0 0.0
        %2686 = vmatpush2.msra.mxu0 0.0
        %2687 = vmatprep.subr.mxu0 0.0
        %2688 = vmatpush2.msra.mxu0 0.0
        %2689 = vmatprep.mubr.f32.mxu0 0.0
        %v2690 = vand.u32 %v2337, 4294901760
        %v2691 = vsub.f32 %v2337, %v2690
        %v2692 = vand.u32 %v2691, 4294901760
        %2693 = vmatmul.mubr.f32.gmra.mxu0 %v2692
        %v2694 = vpop.f32.mrf.mxu0
        %v2695 = vadd.f32 %v2609, %v2694
        %v2696 = vpop.f32.mrf.mxu0
        %v2697 = vadd.f32 %v2611, %v2696
        %2698 = vmatprep.mubr.f32.mxu0 0.0
        %v2699 = vand.u32 %v2340, 4294901760
        %v2700 = vsub.f32 %v2340, %v2699
        %v2701 = vand.u32 %v2700, 4294901760
        %2702 = vmatmul.mubr.f32.gmra.mxu0 %v2701
        %v2703 = vpop.f32.mrf.mxu0
        %v2704 = vadd.f32 %v2617, %v2703
        %v2705 = vpop.f32.mrf.mxu0
        %v2706 = vadd.f32 %v2619, %v2705
        %2707 = vdwg.mxu0
        %2708 = vmatprep.subr.mxu0 0.0
        %2709 = vmatpush1.msra.mxu0 0.0
        %2710 = vmatprep.subr.mxu0 0.0
        %2711 = vmatpush1.msra.mxu0 0.0
        %2712 = vmatprep.subr.mxu0 0.0
        %2713 = vmatpush1.msra.mxu0 0.0
        %2714 = vmatprep.subr.mxu0 0.0
        %2715 = vmatpush1.msra.mxu0 0.0
        %2716 = vmatprep.subr.mxu0 0.0
        %2717 = vmatpush1.msra.mxu0 0.0
        %2718 = vmatprep.subr.mxu0 0.0
        %2719 = vmatpush1.msra.mxu0 0.0
        %2720 = vmatprep.subr.mxu0 0.0
        %2721 = vmatpush1.msra.mxu0 0.0
        %2722 = vmatprep.subr.mxu0 0.0
        %2723 = vmatpush1.msra.mxu0 0.0
        %2724 = vmatprep.subr.mxu0 0.0
        %2725 = vmatpush1.msra.mxu0 0.0
        %2726 = vmatprep.subr.mxu0 0.0
        %2727 = vmatpush1.msra.mxu0 0.0
        %2728 = vmatprep.subr.mxu0 0.0
        %2729 = vmatpush1.msra.mxu0 0.0
        %2730 = vmatprep.subr.mxu0 0.0
        %2731 = vmatpush1.msra.mxu0 0.0
        %2732 = vmatprep.subr.mxu0 0.0
        %2733 = vmatpush1.msra.mxu0 0.0
        %2734 = vmatprep.subr.mxu0 0.0
        %2735 = vmatpush1.msra.mxu0 0.0
        %v2736 = vand.u32 %v2334, 4294901760
        %v2737 = vsub.f32 %v2334, %v2736
        %v2738 = vand.u32 %v2737, 4294901760
        %2739 = vmatprep.subr.mxu0 %v2738
        %v2740 = vand.u32 %v2333, 4294901760
        %v2741 = vsub.f32 %v2333, %v2740
        %v2742 = vand.u32 %v2741, 4294901760
        %2743 = vmatpush1.msra.mxu0 %v2742
        %v2744 = vand.u32 %v2331, 4294901760
        %v2745 = vsub.f32 %v2331, %v2744
        %v2746 = vand.u32 %v2745, 4294901760
        %2747 = vmatprep.subr.mxu0 %v2746
        %v2748 = vand.u32 %v2330, 4294901760
        %v2749 = vsub.f32 %v2330, %v2748
        %v2750 = vand.u32 %v2749, 4294901760
        %2751 = vmatpush1.msra.mxu0 %v2750
        %2752 = vmatprep.subr.mxu0 0.0
        %2753 = vmatpush2.msra.mxu0 0.0
        %2754 = vmatprep.subr.mxu0 0.0
        %2755 = vmatpush2.msra.mxu0 0.0
        %2756 = vmatprep.subr.mxu0 0.0
        %2757 = vmatpush2.msra.mxu0 0.0
        %2758 = vmatprep.subr.mxu0 0.0
        %2759 = vmatpush2.msra.mxu0 0.0
        %2760 = vmatprep.subr.mxu0 0.0
        %2761 = vmatpush2.msra.mxu0 0.0
        %2762 = vmatprep.subr.mxu0 0.0
        %2763 = vmatpush2.msra.mxu0 0.0
        %2764 = vmatprep.subr.mxu0 0.0
        %2765 = vmatpush2.msra.mxu0 0.0
        %2766 = vmatprep.subr.mxu0 0.0
        %2767 = vmatpush2.msra.mxu0 0.0
        %2768 = vmatprep.subr.mxu0 0.0
        %2769 = vmatpush2.msra.mxu0 0.0
        %2770 = vmatprep.subr.mxu0 0.0
        %2771 = vmatpush2.msra.mxu0 0.0
        %2772 = vmatprep.subr.mxu0 0.0
        %2773 = vmatpush2.msra.mxu0 0.0
        %2774 = vmatprep.subr.mxu0 0.0
        %2775 = vmatpush2.msra.mxu0 0.0
        %2776 = vmatprep.subr.mxu0 0.0
        %2777 = vmatpush2.msra.mxu0 0.0
        %2778 = vmatprep.subr.mxu0 0.0
        %2779 = vmatpush2.msra.mxu0 0.0
        %2780 = vmatprep.subr.mxu0 0.0
        %2781 = vmatpush2.msra.mxu0 0.0
        %2782 = vmatprep.subr.mxu0 0.0
        %2783 = vmatpush2.msra.mxu0 0.0
        %2784 = vmatprep.mubr.f32.mxu0 0.0
        %v2785 = vand.u32 %v2337, 4294901760
        %2786 = vmatmul.mubr.f32.gmra.mxu0 %v2785
        %v2787 = vpop.f32.mrf.mxu0
        %v2788 = vadd.f32 %v2695, %v2787
        %v2789 = vpop.f32.mrf.mxu0
        %v2790 = vadd.f32 %v2697, %v2789
        %2791 = vmatprep.mubr.f32.mxu0 0.0
        %v2792 = vand.u32 %v2340, 4294901760
        %2793 = vmatmul.mubr.f32.gmra.mxu0 %v2792
        %v2794 = vpop.f32.mrf.mxu0
        %v2795 = vadd.f32 %v2704, %v2794
        %v2796 = vpop.f32.mrf.mxu0
        %v2797 = vadd.f32 %v2706, %v2796
        %2798 = vdwg.mxu0
        %2799 = vmatprep.subr.mxu0 0.0
        %2800 = vmatpush1.msra.mxu0 0.0
        %2801 = vmatprep.subr.mxu0 0.0
        %2802 = vmatpush1.msra.mxu0 0.0
        %2803 = vmatprep.subr.mxu0 0.0
        %2804 = vmatpush1.msra.mxu0 0.0
        %2805 = vmatprep.subr.mxu0 0.0
        %2806 = vmatpush1.msra.mxu0 0.0
        %2807 = vmatprep.subr.mxu0 0.0
        %2808 = vmatpush1.msra.mxu0 0.0
        %2809 = vmatprep.subr.mxu0 0.0
        %2810 = vmatpush1.msra.mxu0 0.0
        %2811 = vmatprep.subr.mxu0 0.0
        %2812 = vmatpush1.msra.mxu0 0.0
        %2813 = vmatprep.subr.mxu0 0.0
        %2814 = vmatpush1.msra.mxu0 0.0
        %2815 = vmatprep.subr.mxu0 0.0
        %2816 = vmatpush1.msra.mxu0 0.0
        %2817 = vmatprep.subr.mxu0 0.0
        %2818 = vmatpush1.msra.mxu0 0.0
        %2819 = vmatprep.subr.mxu0 0.0
        %2820 = vmatpush1.msra.mxu0 0.0
        %2821 = vmatprep.subr.mxu0 0.0
        %2822 = vmatpush1.msra.mxu0 0.0
        %2823 = vmatprep.subr.mxu0 0.0
        %2824 = vmatpush1.msra.mxu0 0.0
        %2825 = vmatprep.subr.mxu0 0.0
        %2826 = vmatpush1.msra.mxu0 0.0
        %v2827 = vand.u32 %v2334, 4294901760
        %2828 = vmatprep.subr.mxu0 %v2827
        %v2829 = vand.u32 %v2333, 4294901760
        %2830 = vmatpush1.msra.mxu0 %v2829
        %v2831 = vand.u32 %v2331, 4294901760
        %2832 = vmatprep.subr.mxu0 %v2831
        %v2833 = vand.u32 %v2330, 4294901760
        %2834 = vmatpush1.msra.mxu0 %v2833
        %2835 = vmatprep.subr.mxu0 0.0
        %2836 = vmatpush2.msra.mxu0 0.0
        %2837 = vmatprep.subr.mxu0 0.0
        %2838 = vmatpush2.msra.mxu0 0.0
        %2839 = vmatprep.subr.mxu0 0.0
        %2840 = vmatpush2.msra.mxu0 0.0
        %2841 = vmatprep.subr.mxu0 0.0
        %2842 = vmatpush2.msra.mxu0 0.0
        %2843 = vmatprep.subr.mxu0 0.0
        %2844 = vmatpush2.msra.mxu0 0.0
        %2845 = vmatprep.subr.mxu0 0.0
        %2846 = vmatpush2.msra.mxu0 0.0
        %2847 = vmatprep.subr.mxu0 0.0
        %2848 = vmatpush2.msra.mxu0 0.0
        %2849 = vmatprep.subr.mxu0 0.0
        %2850 = vmatpush2.msra.mxu0 0.0
        %2851 = vmatprep.subr.mxu0 0.0
        %2852 = vmatpush2.msra.mxu0 0.0
        %2853 = vmatprep.subr.mxu0 0.0
        %2854 = vmatpush2.msra.mxu0 0.0
        %2855 = vmatprep.subr.mxu0 0.0
        %2856 = vmatpush2.msra.mxu0 0.0
        %2857 = vmatprep.subr.mxu0 0.0
        %2858 = vmatpush2.msra.mxu0 0.0
        %2859 = vmatprep.subr.mxu0 0.0
        %2860 = vmatpush2.msra.mxu0 0.0
        %2861 = vmatprep.subr.mxu0 0.0
        %2862 = vmatpush2.msra.mxu0 0.0
        %2863 = vmatprep.subr.mxu0 0.0
        %2864 = vmatpush2.msra.mxu0 0.0
        %2865 = vmatprep.subr.mxu0 0.0
        %2866 = vmatpush2.msra.mxu0 0.0
        %2867 = vmatprep.mubr.f32.mxu0 0.0
        %v2868 = vand.u32 %v2337, 4294901760
        %2869 = vmatmul.mubr.f32.gmra.mxu0 %v2868
        %v2870 = vpop.f32.mrf.mxu0
        %v2871 = vadd.f32 %v2788, %v2870
        %v2872 = vpop.f32.mrf.mxu0
        %v2873 = vadd.f32 %v2790, %v2872
        %2874 = vmatprep.mubr.f32.mxu0 0.0
        %v2875 = vand.u32 %v2340, 4294901760
        %2876 = vmatmul.mubr.f32.gmra.mxu0 %v2875
        %v2877 = vpop.f32.mrf.mxu0
        %v2878 = vadd.f32 %v2795, %v2877
        %v2879 = vpop.f32.mrf.mxu0
        %v2880 = vadd.f32 %v2797, %v2879
        %2881 = vdwg.mxu0
        %2882 = vmatprep.subr.mxu0 0.0
        %2883 = vmatpush1.msra.mxu0 0.0
        %2884 = vmatprep.subr.mxu0 0.0
        %2885 = vmatpush1.msra.mxu0 0.0
        %2886 = vmatprep.subr.mxu0 0.0
        %2887 = vmatpush1.msra.mxu0 0.0
        %2888 = vmatprep.subr.mxu0 0.0
        %2889 = vmatpush1.msra.mxu0 0.0
        %2890 = vmatprep.subr.mxu0 0.0
        %2891 = vmatpush1.msra.mxu0 0.0
        %2892 = vmatprep.subr.mxu0 0.0
        %2893 = vmatpush1.msra.mxu0 0.0
        %2894 = vmatprep.subr.mxu0 0.0
        %2895 = vmatpush1.msra.mxu0 0.0
        %2896 = vmatprep.subr.mxu0 0.0
        %2897 = vmatpush1.msra.mxu0 0.0
        %2898 = vmatprep.subr.mxu0 0.0
        %2899 = vmatpush1.msra.mxu0 0.0
        %2900 = vmatprep.subr.mxu0 0.0
        %2901 = vmatpush1.msra.mxu0 0.0
        %2902 = vmatprep.subr.mxu0 0.0
        %2903 = vmatpush1.msra.mxu0 0.0
        %2904 = vmatprep.subr.mxu0 0.0
        %2905 = vmatpush1.msra.mxu0 0.0
        %2906 = vmatprep.subr.mxu0 0.0
        %2907 = vmatpush1.msra.mxu0 0.0
        %2908 = vmatprep.subr.mxu0 0.0
        %2909 = vmatpush1.msra.mxu0 0.0
        %2910 = vmatprep.subr.mxu0 0.0
        %v2911 = vand.u32 %v2335, 4294901760
        %2912 = vmatpush1.msra.mxu0 %v2911
        %2913 = vmatprep.subr.mxu0 0.0
        %v2914 = vand.u32 %v2332, 4294901760
        %2915 = vmatpush1.msra.mxu0 %v2914
        %2916 = vmatprep.subr.mxu0 0.0
        %2917 = vmatpush2.msra.mxu0 0.0
        %2918 = vmatprep.subr.mxu0 0.0
        %2919 = vmatpush2.msra.mxu0 0.0
        %2920 = vmatprep.subr.mxu0 0.0
        %2921 = vmatpush2.msra.mxu0 0.0
        %2922 = vmatprep.subr.mxu0 0.0
        %2923 = vmatpush2.msra.mxu0 0.0
        %2924 = vmatprep.subr.mxu0 0.0
        %2925 = vmatpush2.msra.mxu0 0.0
        %2926 = vmatprep.subr.mxu0 0.0
        %2927 = vmatpush2.msra.mxu0 0.0
        %2928 = vmatprep.subr.mxu0 0.0
        %2929 = vmatpush2.msra.mxu0 0.0
        %2930 = vmatprep.subr.mxu0 0.0
        %2931 = vmatpush2.msra.mxu0 0.0
        %2932 = vmatprep.subr.mxu0 0.0
        %2933 = vmatpush2.msra.mxu0 0.0
        %2934 = vmatprep.subr.mxu0 0.0
        %2935 = vmatpush2.msra.mxu0 0.0
        %2936 = vmatprep.subr.mxu0 0.0
        %2937 = vmatpush2.msra.mxu0 0.0
        %2938 = vmatprep.subr.mxu0 0.0
        %2939 = vmatpush2.msra.mxu0 0.0
        %2940 = vmatprep.subr.mxu0 0.0
        %2941 = vmatpush2.msra.mxu0 0.0
        %2942 = vmatprep.subr.mxu0 0.0
        %2943 = vmatpush2.msra.mxu0 0.0
        %2944 = vmatprep.subr.mxu0 0.0
        %2945 = vmatpush2.msra.mxu0 0.0
        %2946 = vmatprep.subr.mxu0 0.0
        %2947 = vmatpush2.msra.mxu0 0.0
        %2948 = vmatprep.mubr.f32.mxu0 0.0
        %v2949 = vand.u32 %v2337, 4294901760
        %v2950 = vsub.f32 %v2337, %v2949
        %v2951 = vand.u32 %v2950, 4294901760
        %v2952 = vsub.f32 %v2950, %v2951
        %v2953 = vand.u32 %v2952, 4294901760
        %2954 = vmatmul.mubr.f32.gmra.mxu0 %v2953
        %v2955 = vpop.f32.mrf.mxu0
        %v2956 = vadd.f32 0.0, %v2955
        %v2957 = vpop.f32.mrf.mxu0
        %2958 = vmatprep.mubr.f32.mxu0 0.0
        %v2959 = vand.u32 %v2340, 4294901760
        %v2960 = vsub.f32 %v2340, %v2959
        %v2961 = vand.u32 %v2960, 4294901760
        %v2962 = vsub.f32 %v2960, %v2961
        %v2963 = vand.u32 %v2962, 4294901760
        %2964 = vmatmul.mubr.f32.gmra.mxu0 %v2963
        %v2965 = vpop.f32.mrf.mxu0
        %v2966 = vadd.f32 0.0, %v2965
        %v2967 = vpop.f32.mrf.mxu0
        %2968 = vdwg.mxu0
        %2969 = vmatprep.subr.mxu0 0.0
        %2970 = vmatpush1.msra.mxu0 0.0
        %2971 = vmatprep.subr.mxu0 0.0
        %2972 = vmatpush1.msra.mxu0 0.0
        %2973 = vmatprep.subr.mxu0 0.0
        %2974 = vmatpush1.msra.mxu0 0.0
        %2975 = vmatprep.subr.mxu0 0.0
        %2976 = vmatpush1.msra.mxu0 0.0
        %2977 = vmatprep.subr.mxu0 0.0
        %2978 = vmatpush1.msra.mxu0 0.0
        %2979 = vmatprep.subr.mxu0 0.0
        %2980 = vmatpush1.msra.mxu0 0.0
        %2981 = vmatprep.subr.mxu0 0.0
        %2982 = vmatpush1.msra.mxu0 0.0
        %2983 = vmatprep.subr.mxu0 0.0
        %2984 = vmatpush1.msra.mxu0 0.0
        %2985 = vmatprep.subr.mxu0 0.0
        %2986 = vmatpush1.msra.mxu0 0.0
        %2987 = vmatprep.subr.mxu0 0.0
        %2988 = vmatpush1.msra.mxu0 0.0
        %2989 = vmatprep.subr.mxu0 0.0
        %2990 = vmatpush1.msra.mxu0 0.0
        %2991 = vmatprep.subr.mxu0 0.0
        %2992 = vmatpush1.msra.mxu0 0.0
        %2993 = vmatprep.subr.mxu0 0.0
        %2994 = vmatpush1.msra.mxu0 0.0
        %2995 = vmatprep.subr.mxu0 0.0
        %2996 = vmatpush1.msra.mxu0 0.0
        %2997 = vmatprep.subr.mxu0 0.0
        %v2998 = vand.u32 %v2335, 4294901760
        %v2999 = vsub.f32 %v2335, %v2998
        %v3000 = vand.u32 %v2999, 4294901760
        %v3001 = vsub.f32 %v2999, %v3000
        %v3002 = vand.u32 %v3001, 4294901760
        %3003 = vmatpush1.msra.mxu0 %v3002
        %3004 = vmatprep.subr.mxu0 0.0
        %v3005 = vand.u32 %v2332, 4294901760
        %v3006 = vsub.f32 %v2332, %v3005
        %v3007 = vand.u32 %v3006, 4294901760
        %v3008 = vsub.f32 %v3006, %v3007
        %v3009 = vand.u32 %v3008, 4294901760
        %3010 = vmatpush1.msra.mxu0 %v3009
        %3011 = vmatprep.subr.mxu0 0.0
        %3012 = vmatpush2.msra.mxu0 0.0
        %3013 = vmatprep.subr.mxu0 0.0
        %3014 = vmatpush2.msra.mxu0 0.0
        %3015 = vmatprep.subr.mxu0 0.0
        %3016 = vmatpush2.msra.mxu0 0.0
        %3017 = vmatprep.subr.mxu0 0.0
        %3018 = vmatpush2.msra.mxu0 0.0
        %3019 = vmatprep.subr.mxu0 0.0
        %3020 = vmatpush2.msra.mxu0 0.0
        %3021 = vmatprep.subr.mxu0 0.0
        %3022 = vmatpush2.msra.mxu0 0.0
        %3023 = vmatprep.subr.mxu0 0.0
        %3024 = vmatpush2.msra.mxu0 0.0
        %3025 = vmatprep.subr.mxu0 0.0
        %3026 = vmatpush2.msra.mxu0 0.0
        %3027 = vmatprep.subr.mxu0 0.0
        %3028 = vmatpush2.msra.mxu0 0.0
        %3029 = vmatprep.subr.mxu0 0.0
        %3030 = vmatpush2.msra.mxu0 0.0
        %3031 = vmatprep.subr.mxu0 0.0
        %3032 = vmatpush2.msra.mxu0 0.0
        %3033 = vmatprep.subr.mxu0 0.0
        %3034 = vmatpush2.msra.mxu0 0.0
        %3035 = vmatprep.subr.mxu0 0.0
        %3036 = vmatpush2.msra.mxu0 0.0
        %3037 = vmatprep.subr.mxu0 0.0
        %3038 = vmatpush2.msra.mxu0 0.0
        %3039 = vmatprep.subr.mxu0 0.0
        %3040 = vmatpush2.msra.mxu0 0.0
        %3041 = vmatprep.subr.mxu0 0.0
        %3042 = vmatpush2.msra.mxu0 0.0
        %3043 = vmatprep.mubr.f32.mxu0 0.0
        %v3044 = vand.u32 %v2337, 4294901760
        %3045 = vmatmul.mubr.f32.gmra.mxu0 %v3044
        %v3046 = vpop.f32.mrf.mxu0
        %v3047 = vadd.f32 %v2956, %v3046
        %v3048 = vpop.f32.mrf.mxu0
        %3049 = vmatprep.mubr.f32.mxu0 0.0
        %v3050 = vand.u32 %v2340, 4294901760
        %3051 = vmatmul.mubr.f32.gmra.mxu0 %v3050
        %v3052 = vpop.f32.mrf.mxu0
        %v3053 = vadd.f32 %v2966, %v3052
        %v3054 = vpop.f32.mrf.mxu0
        %3055 = vdwg.mxu0
        %3056 = vmatprep.subr.mxu0 0.0
        %3057 = vmatpush1.msra.mxu0 0.0
        %3058 = vmatprep.subr.mxu0 0.0
        %3059 = vmatpush1.msra.mxu0 0.0
        %3060 = vmatprep.subr.mxu0 0.0
        %3061 = vmatpush1.msra.mxu0 0.0
        %3062 = vmatprep.subr.mxu0 0.0
        %3063 = vmatpush1.msra.mxu0 0.0
        %3064 = vmatprep.subr.mxu0 0.0
        %3065 = vmatpush1.msra.mxu0 0.0
        %3066 = vmatprep.subr.mxu0 0.0
        %3067 = vmatpush1.msra.mxu0 0.0
        %3068 = vmatprep.subr.mxu0 0.0
        %3069 = vmatpush1.msra.mxu0 0.0
        %3070 = vmatprep.subr.mxu0 0.0
        %3071 = vmatpush1.msra.mxu0 0.0
        %3072 = vmatprep.subr.mxu0 0.0
        %3073 = vmatpush1.msra.mxu0 0.0
        %3074 = vmatprep.subr.mxu0 0.0
        %3075 = vmatpush1.msra.mxu0 0.0
        %3076 = vmatprep.subr.mxu0 0.0
        %3077 = vmatpush1.msra.mxu0 0.0
        %3078 = vmatprep.subr.mxu0 0.0
        %3079 = vmatpush1.msra.mxu0 0.0
        %3080 = vmatprep.subr.mxu0 0.0
        %3081 = vmatpush1.msra.mxu0 0.0
        %3082 = vmatprep.subr.mxu0 0.0
        %3083 = vmatpush1.msra.mxu0 0.0
        %3084 = vmatprep.subr.mxu0 0.0
        %v3085 = vand.u32 %v2335, 4294901760
        %v3086 = vsub.f32 %v2335, %v3085
        %3087 = vmatpush1.msra.mxu0 %v3086
        %3088 = vmatprep.subr.mxu0 0.0
        %v3089 = vand.u32 %v2332, 4294901760
        %v3090 = vsub.f32 %v2332, %v3089
        %3091 = vmatpush1.msra.mxu0 %v3090
        %3092 = vmatprep.subr.mxu0 0.0
        %3093 = vmatpush2.msra.mxu0 0.0
        %3094 = vmatprep.subr.mxu0 0.0
        %3095 = vmatpush2.msra.mxu0 0.0
        %3096 = vmatprep.subr.mxu0 0.0
        %3097 = vmatpush2.msra.mxu0 0.0
        %3098 = vmatprep.subr.mxu0 0.0
        %3099 = vmatpush2.msra.mxu0 0.0
        %3100 = vmatprep.subr.mxu0 0.0
        %3101 = vmatpush2.msra.mxu0 0.0
        %3102 = vmatprep.subr.mxu0 0.0
        %3103 = vmatpush2.msra.mxu0 0.0
        %3104 = vmatprep.subr.mxu0 0.0
        %3105 = vmatpush2.msra.mxu0 0.0
        %3106 = vmatprep.subr.mxu0 0.0
        %3107 = vmatpush2.msra.mxu0 0.0
        %3108 = vmatprep.subr.mxu0 0.0
        %3109 = vmatpush2.msra.mxu0 0.0
        %3110 = vmatprep.subr.mxu0 0.0
        %3111 = vmatpush2.msra.mxu0 0.0
        %3112 = vmatprep.subr.mxu0 0.0
        %3113 = vmatpush2.msra.mxu0 0.0
        %3114 = vmatprep.subr.mxu0 0.0
        %3115 = vmatpush2.msra.mxu0 0.0
        %3116 = vmatprep.subr.mxu0 0.0
        %3117 = vmatpush2.msra.mxu0 0.0
        %3118 = vmatprep.subr.mxu0 0.0
        %3119 = vmatpush2.msra.mxu0 0.0
        %3120 = vmatprep.subr.mxu0 0.0
        %3121 = vmatpush2.msra.mxu0 0.0
        %3122 = vmatprep.subr.mxu0 0.0
        %3123 = vmatpush2.msra.mxu0 0.0
        %3124 = vmatprep.mubr.f32.mxu0 0.0
        %v3125 = vand.u32 %v2337, 4294901760
        %v3126 = vsub.f32 %v2337, %v3125
        %3127 = vmatmul.mubr.f32.gmra.mxu0 %v3126
        %v3128 = vpop.f32.mrf.mxu0
        %v3129 = vadd.f32 %v3047, %v3128
        %v3130 = vpop.f32.mrf.mxu0
        %3131 = vmatprep.mubr.f32.mxu0 0.0
        %v3132 = vand.u32 %v2340, 4294901760
        %v3133 = vsub.f32 %v2340, %v3132
        %3134 = vmatmul.mubr.f32.gmra.mxu0 %v3133
        %v3135 = vpop.f32.mrf.mxu0
        %v3136 = vadd.f32 %v3053, %v3135
        %v3137 = vpop.f32.mrf.mxu0
        %3138 = vdwg.mxu0
        %3139 = vmatprep.subr.mxu0 0.0
        %3140 = vmatpush1.msra.mxu0 0.0
        %3141 = vmatprep.subr.mxu0 0.0
        %3142 = vmatpush1.msra.mxu0 0.0
        %3143 = vmatprep.subr.mxu0 0.0
        %3144 = vmatpush1.msra.mxu0 0.0
        %3145 = vmatprep.subr.mxu0 0.0
        %3146 = vmatpush1.msra.mxu0 0.0
        %3147 = vmatprep.subr.mxu0 0.0
        %3148 = vmatpush1.msra.mxu0 0.0
        %3149 = vmatprep.subr.mxu0 0.0
        %3150 = vmatpush1.msra.mxu0 0.0
        %3151 = vmatprep.subr.mxu0 0.0
        %3152 = vmatpush1.msra.mxu0 0.0
        %3153 = vmatprep.subr.mxu0 0.0
        %3154 = vmatpush1.msra.mxu0 0.0
        %3155 = vmatprep.subr.mxu0 0.0
        %3156 = vmatpush1.msra.mxu0 0.0
        %3157 = vmatprep.subr.mxu0 0.0
        %3158 = vmatpush1.msra.mxu0 0.0
        %3159 = vmatprep.subr.mxu0 0.0
        %3160 = vmatpush1.msra.mxu0 0.0
        %3161 = vmatprep.subr.mxu0 0.0
        %3162 = vmatpush1.msra.mxu0 0.0
        %3163 = vmatprep.subr.mxu0 0.0
        %3164 = vmatpush1.msra.mxu0 0.0
        %3165 = vmatprep.subr.mxu0 0.0
        %3166 = vmatpush1.msra.mxu0 0.0
        %3167 = vmatprep.subr.mxu0 0.0
        %v3168 = vand.u32 %v2335, 4294901760
        %3169 = vmatpush1.msra.mxu0 %v3168
        %3170 = vmatprep.subr.mxu0 0.0
        %v3171 = vand.u32 %v2332, 4294901760
        %3172 = vmatpush1.msra.mxu0 %v3171
        %3173 = vmatprep.subr.mxu0 0.0
        %3174 = vmatpush2.msra.mxu0 0.0
        %3175 = vmatprep.subr.mxu0 0.0
        %3176 = vmatpush2.msra.mxu0 0.0
        %3177 = vmatprep.subr.mxu0 0.0
        %3178 = vmatpush2.msra.mxu0 0.0
        %3179 = vmatprep.subr.mxu0 0.0
        %3180 = vmatpush2.msra.mxu0 0.0
        %3181 = vmatprep.subr.mxu0 0.0
        %3182 = vmatpush2.msra.mxu0 0.0
        %3183 = vmatprep.subr.mxu0 0.0
        %3184 = vmatpush2.msra.mxu0 0.0
        %3185 = vmatprep.subr.mxu0 0.0
        %3186 = vmatpush2.msra.mxu0 0.0
        %3187 = vmatprep.subr.mxu0 0.0
        %3188 = vmatpush2.msra.mxu0 0.0
        %3189 = vmatprep.subr.mxu0 0.0
        %3190 = vmatpush2.msra.mxu0 0.0
        %3191 = vmatprep.subr.mxu0 0.0
        %3192 = vmatpush2.msra.mxu0 0.0
        %3193 = vmatprep.subr.mxu0 0.0
        %3194 = vmatpush2.msra.mxu0 0.0
        %3195 = vmatprep.subr.mxu0 0.0
        %3196 = vmatpush2.msra.mxu0 0.0
        %3197 = vmatprep.subr.mxu0 0.0
        %3198 = vmatpush2.msra.mxu0 0.0
        %3199 = vmatprep.subr.mxu0 0.0
        %3200 = vmatpush2.msra.mxu0 0.0
        %3201 = vmatprep.subr.mxu0 0.0
        %3202 = vmatpush2.msra.mxu0 0.0
        %3203 = vmatprep.subr.mxu0 0.0
        %3204 = vmatpush2.msra.mxu0 0.0
        %3205 = vmatprep.mubr.f32.mxu0 0.0
        %v3206 = vand.u32 %v2337, 4294901760
        %v3207 = vsub.f32 %v2337, %v3206
        %v3208 = vand.u32 %v3207, 4294901760
        %3209 = vmatmul.mubr.f32.gmra.mxu0 %v3208
        %v3210 = vpop.f32.mrf.mxu0
        %v3211 = vadd.f32 %v3129, %v3210
        %v3212 = vpop.f32.mrf.mxu0
        %3213 = vmatprep.mubr.f32.mxu0 0.0
        %v3214 = vand.u32 %v2340, 4294901760
        %v3215 = vsub.f32 %v2340, %v3214
        %v3216 = vand.u32 %v3215, 4294901760
        %3217 = vmatmul.mubr.f32.gmra.mxu0 %v3216
        %v3218 = vpop.f32.mrf.mxu0
        %v3219 = vadd.f32 %v3136, %v3218
        %v3220 = vpop.f32.mrf.mxu0
        %3221 = vdwg.mxu0
        %3222 = vmatprep.subr.mxu0 0.0
        %3223 = vmatpush1.msra.mxu0 0.0
        %3224 = vmatprep.subr.mxu0 0.0
        %3225 = vmatpush1.msra.mxu0 0.0
        %3226 = vmatprep.subr.mxu0 0.0
        %3227 = vmatpush1.msra.mxu0 0.0
        %3228 = vmatprep.subr.mxu0 0.0
        %3229 = vmatpush1.msra.mxu0 0.0
        %3230 = vmatprep.subr.mxu0 0.0
        %3231 = vmatpush1.msra.mxu0 0.0
        %3232 = vmatprep.subr.mxu0 0.0
        %3233 = vmatpush1.msra.mxu0 0.0
        %3234 = vmatprep.subr.mxu0 0.0
        %3235 = vmatpush1.msra.mxu0 0.0
        %3236 = vmatprep.subr.mxu0 0.0
        %3237 = vmatpush1.msra.mxu0 0.0
        %3238 = vmatprep.subr.mxu0 0.0
        %3239 = vmatpush1.msra.mxu0 0.0
        %3240 = vmatprep.subr.mxu0 0.0
        %3241 = vmatpush1.msra.mxu0 0.0
        %3242 = vmatprep.subr.mxu0 0.0
        %3243 = vmatpush1.msra.mxu0 0.0
        %3244 = vmatprep.subr.mxu0 0.0
        %3245 = vmatpush1.msra.mxu0 0.0
        %3246 = vmatprep.subr.mxu0 0.0
        %3247 = vmatpush1.msra.mxu0 0.0
        %3248 = vmatprep.subr.mxu0 0.0
        %3249 = vmatpush1.msra.mxu0 0.0
        %3250 = vmatprep.subr.mxu0 0.0
        %v3251 = vand.u32 %v2335, 4294901760
        %v3252 = vsub.f32 %v2335, %v3251
        %v3253 = vand.u32 %v3252, 4294901760
        %3254 = vmatpush1.msra.mxu0 %v3253
        %3255 = vmatprep.subr.mxu0 0.0
        %v3256 = vand.u32 %v2332, 4294901760
        %v3257 = vsub.f32 %v2332, %v3256
        %v3258 = vand.u32 %v3257, 4294901760
        %3259 = vmatpush1.msra.mxu0 %v3258
        %3260 = vmatprep.subr.mxu0 0.0
        %3261 = vmatpush2.msra.mxu0 0.0
        %3262 = vmatprep.subr.mxu0 0.0
        %3263 = vmatpush2.msra.mxu0 0.0
        %3264 = vmatprep.subr.mxu0 0.0
        %3265 = vmatpush2.msra.mxu0 0.0
        %3266 = vmatprep.subr.mxu0 0.0
        %3267 = vmatpush2.msra.mxu0 0.0
        %3268 = vmatprep.subr.mxu0 0.0
        %3269 = vmatpush2.msra.mxu0 0.0
        %3270 = vmatprep.subr.mxu0 0.0
        %3271 = vmatpush2.msra.mxu0 0.0
        %3272 = vmatprep.subr.mxu0 0.0
        %3273 = vmatpush2.msra.mxu0 0.0
        %3274 = vmatprep.subr.mxu0 0.0
        %3275 = vmatpush2.msra.mxu0 0.0
        %3276 = vmatprep.subr.mxu0 0.0
        %3277 = vmatpush2.msra.mxu0 0.0
        %3278 = vmatprep.subr.mxu0 0.0
        %3279 = vmatpush2.msra.mxu0 0.0
        %3280 = vmatprep.subr.mxu0 0.0
        %3281 = vmatpush2.msra.mxu0 0.0
        %3282 = vmatprep.subr.mxu0 0.0
        %3283 = vmatpush2.msra.mxu0 0.0
        %3284 = vmatprep.subr.mxu0 0.0
        %3285 = vmatpush2.msra.mxu0 0.0
        %3286 = vmatprep.subr.mxu0 0.0
        %3287 = vmatpush2.msra.mxu0 0.0
        %3288 = vmatprep.subr.mxu0 0.0
        %3289 = vmatpush2.msra.mxu0 0.0
        %3290 = vmatprep.subr.mxu0 0.0
        %3291 = vmatpush2.msra.mxu0 0.0
        %3292 = vmatprep.mubr.f32.mxu0 0.0
        %v3293 = vand.u32 %v2337, 4294901760
        %3294 = vmatmul.mubr.f32.gmra.mxu0 %v3293
        %v3295 = vpop.f32.mrf.mxu0
        %v3296 = vadd.f32 %v3211, %v3295
        %v3297 = vpop.f32.mrf.mxu0
        %3298 = vmatprep.mubr.f32.mxu0 0.0
        %v3299 = vand.u32 %v2340, 4294901760
        %3300 = vmatmul.mubr.f32.gmra.mxu0 %v3299
        %v3301 = vpop.f32.mrf.mxu0
        %v3302 = vadd.f32 %v3219, %v3301
        %v3303 = vpop.f32.mrf.mxu0
        %3304 = vdwg.mxu0
        %3305 = vmatprep.subr.mxu0 0.0
        %3306 = vmatpush1.msra.mxu0 0.0
        %3307 = vmatprep.subr.mxu0 0.0
        %3308 = vmatpush1.msra.mxu0 0.0
        %3309 = vmatprep.subr.mxu0 0.0
        %3310 = vmatpush1.msra.mxu0 0.0
        %3311 = vmatprep.subr.mxu0 0.0
        %3312 = vmatpush1.msra.mxu0 0.0
        %3313 = vmatprep.subr.mxu0 0.0
        %3314 = vmatpush1.msra.mxu0 0.0
        %3315 = vmatprep.subr.mxu0 0.0
        %3316 = vmatpush1.msra.mxu0 0.0
        %3317 = vmatprep.subr.mxu0 0.0
        %3318 = vmatpush1.msra.mxu0 0.0
        %3319 = vmatprep.subr.mxu0 0.0
        %3320 = vmatpush1.msra.mxu0 0.0
        %3321 = vmatprep.subr.mxu0 0.0
        %3322 = vmatpush1.msra.mxu0 0.0
        %3323 = vmatprep.subr.mxu0 0.0
        %3324 = vmatpush1.msra.mxu0 0.0
        %3325 = vmatprep.subr.mxu0 0.0
        %3326 = vmatpush1.msra.mxu0 0.0
        %3327 = vmatprep.subr.mxu0 0.0
        %3328 = vmatpush1.msra.mxu0 0.0
        %3329 = vmatprep.subr.mxu0 0.0
        %3330 = vmatpush1.msra.mxu0 0.0
        %3331 = vmatprep.subr.mxu0 0.0
        %3332 = vmatpush1.msra.mxu0 0.0
        %3333 = vmatprep.subr.mxu0 0.0
        %v3334 = vand.u32 %v2335, 4294901760
        %3335 = vmatpush1.msra.mxu0 %v3334
        %3336 = vmatprep.subr.mxu0 0.0
        %v3337 = vand.u32 %v2332, 4294901760
        %3338 = vmatpush1.msra.mxu0 %v3337
        %3339 = vmatprep.subr.mxu0 0.0
        %3340 = vmatpush2.msra.mxu0 0.0
        %3341 = vmatprep.subr.mxu0 0.0
        %3342 = vmatpush2.msra.mxu0 0.0
        %3343 = vmatprep.subr.mxu0 0.0
        %3344 = vmatpush2.msra.mxu0 0.0
        %3345 = vmatprep.subr.mxu0 0.0
        %3346 = vmatpush2.msra.mxu0 0.0
        %3347 = vmatprep.subr.mxu0 0.0
        %3348 = vmatpush2.msra.mxu0 0.0
        %3349 = vmatprep.subr.mxu0 0.0
        %3350 = vmatpush2.msra.mxu0 0.0
        %3351 = vmatprep.subr.mxu0 0.0
        %3352 = vmatpush2.msra.mxu0 0.0
        %3353 = vmatprep.subr.mxu0 0.0
        %3354 = vmatpush2.msra.mxu0 0.0
        %3355 = vmatprep.subr.mxu0 0.0
        %3356 = vmatpush2.msra.mxu0 0.0
        %3357 = vmatprep.subr.mxu0 0.0
        %3358 = vmatpush2.msra.mxu0 0.0
        %3359 = vmatprep.subr.mxu0 0.0
        %3360 = vmatpush2.msra.mxu0 0.0
        %3361 = vmatprep.subr.mxu0 0.0
        %3362 = vmatpush2.msra.mxu0 0.0
        %3363 = vmatprep.subr.mxu0 0.0
        %3364 = vmatpush2.msra.mxu0 0.0
        %3365 = vmatprep.subr.mxu0 0.0
        %3366 = vmatpush2.msra.mxu0 0.0
        %3367 = vmatprep.subr.mxu0 0.0
        %3368 = vmatpush2.msra.mxu0 0.0
        %3369 = vmatprep.subr.mxu0 0.0
        %3370 = vmatpush2.msra.mxu0 0.0
        %3371 = vmatprep.mubr.f32.mxu0 0.0
        %v3372 = vand.u32 %v2337, 4294901760
        %3373 = vmatmul.mubr.f32.gmra.mxu0 %v3372
        %v3374 = vpop.f32.mrf.mxu0
        %v3375 = vadd.f32 %v3296, %v3374
        %v3376 = vpop.f32.mrf.mxu0
        %3377 = vmatprep.mubr.f32.mxu0 0.0
        %v3378 = vand.u32 %v2340, 4294901760
        %3379 = vmatmul.mubr.f32.gmra.mxu0 %v3378
        %v3380 = vpop.f32.mrf.mxu0
        %v3381 = vadd.f32 %v3302, %v3380
        %v3382 = vpop.f32.mrf.mxu0
        %3383 = vdwg.mxu0
        %v3384 = vadd.f32 %v1813, %v2871
        %v3385 = vadd.f32 %v1815, %v2873
        %v3386 = vadd.f32 %v2317, %v3375
        %v3387 = vadd.f32 %v1820, %v2878
        %v3388 = vadd.f32 %v1822, %v2880
        %v3389 = vadd.f32 %v2323, %v3381
        %s3390 = scalar_lea.vmem %s210, 48
        %v3391 = vld [vmem:[%s3390] sm:$0xff]
        %v3392 = vld [vmem:[%s3390 + $0x8] sm:$0xff]
        %s3393 = scalar_lea.vmem [#allocation2], 144
        %v3394 = vld [vmem:[%s3393] sm:$0xff]
        %v3395 = vld [vmem:[%s3393 + $0x8] sm:$0xff]
        %v3396 = vld [vmem:[%s3393 + $0x10] sm:$0xff]
        %v3397 = vld [vmem:[%s3393 + $0x18] sm:$0xff]
        %v3398 = vld [vmem:[%s3393 + $0x20] sm:$0xff]
        %v3399 = vld [vmem:[%s3393 + $0x28] sm:$0xff]
        %v3401 = vsel %vm229, %v3391, 0
        %v3404 = vsel %vm229, %v3392, 0
        %3406 = vmatprep.subr.mxu0 0.0
        %3407 = vmatpush1.msra.mxu0 0.0
        %3408 = vmatprep.subr.mxu0 0.0
        %3409 = vmatpush1.msra.mxu0 0.0
        %3410 = vmatprep.subr.mxu0 0.0
        %3411 = vmatpush1.msra.mxu0 0.0
        %3412 = vmatprep.subr.mxu0 0.0
        %3413 = vmatpush1.msra.mxu0 0.0
        %3414 = vmatprep.subr.mxu0 0.0
        %3415 = vmatpush1.msra.mxu0 0.0
        %3416 = vmatprep.subr.mxu0 0.0
        %3417 = vmatpush1.msra.mxu0 0.0
        %3418 = vmatprep.subr.mxu0 0.0
        %3419 = vmatpush1.msra.mxu0 0.0
        %3420 = vmatprep.subr.mxu0 0.0
        %3421 = vmatpush1.msra.mxu0 0.0
        %3422 = vmatprep.subr.mxu0 0.0
        %3423 = vmatpush1.msra.mxu0 0.0
        %3424 = vmatprep.subr.mxu0 0.0
        %3425 = vmatpush1.msra.mxu0 0.0
        %3426 = vmatprep.subr.mxu0 0.0
        %3427 = vmatpush1.msra.mxu0 0.0
        %3428 = vmatprep.subr.mxu0 0.0
        %3429 = vmatpush1.msra.mxu0 0.0
        %3430 = vmatprep.subr.mxu0 0.0
        %3431 = vmatpush1.msra.mxu0 0.0
        %3432 = vmatprep.subr.mxu0 0.0
        %3433 = vmatpush1.msra.mxu0 0.0
        %v3434 = vand.u32 %v3398, 4294901760
        %3435 = vmatprep.subr.mxu0 %v3434
        %v3436 = vand.u32 %v3397, 4294901760
        %3437 = vmatpush1.msra.mxu0 %v3436
        %v3438 = vand.u32 %v3395, 4294901760
        %3439 = vmatprep.subr.mxu0 %v3438
        %v3440 = vand.u32 %v3394, 4294901760
        %3441 = vmatpush1.msra.mxu0 %v3440
        %3442 = vmatprep.subr.mxu0 0.0
        %3443 = vmatpush2.msra.mxu0 0.0
        %3444 = vmatprep.subr.mxu0 0.0
        %3445 = vmatpush2.msra.mxu0 0.0
        %3446 = vmatprep.subr.mxu0 0.0
        %3447 = vmatpush2.msra.mxu0 0.0
        %3448 = vmatprep.subr.mxu0 0.0
        %3449 = vmatpush2.msra.mxu0 0.0
        %3450 = vmatprep.subr.mxu0 0.0
        %3451 = vmatpush2.msra.mxu0 0.0
        %3452 = vmatprep.subr.mxu0 0.0
        %3453 = vmatpush2.msra.mxu0 0.0
        %3454 = vmatprep.subr.mxu0 0.0
        %3455 = vmatpush2.msra.mxu0 0.0
        %3456 = vmatprep.subr.mxu0 0.0
        %3457 = vmatpush2.msra.mxu0 0.0
        %3458 = vmatprep.subr.mxu0 0.0
        %3459 = vmatpush2.msra.mxu0 0.0
        %3460 = vmatprep.subr.mxu0 0.0
        %3461 = vmatpush2.msra.mxu0 0.0
        %3462 = vmatprep.subr.mxu0 0.0
        %3463 = vmatpush2.msra.mxu0 0.0
        %3464 = vmatprep.subr.mxu0 0.0
        %3465 = vmatpush2.msra.mxu0 0.0
        %3466 = vmatprep.subr.mxu0 0.0
        %3467 = vmatpush2.msra.mxu0 0.0
        %3468 = vmatprep.subr.mxu0 0.0
        %3469 = vmatpush2.msra.mxu0 0.0
        %3470 = vmatprep.subr.mxu0 0.0
        %3471 = vmatpush2.msra.mxu0 0.0
        %3472 = vmatprep.subr.mxu0 0.0
        %3473 = vmatpush2.msra.mxu0 0.0
        %3474 = vmatprep.mubr.f32.mxu0 0.0
        %v3475 = vand.u32 %v3401, 4294901760
        %v3476 = vsub.f32 %v3401, %v3475
        %v3477 = vand.u32 %v3476, 4294901760
        %v3478 = vsub.f32 %v3476, %v3477
        %v3479 = vand.u32 %v3478, 4294901760
        %3480 = vmatmul.mubr.f32.gmra.mxu0 %v3479
        %v3481 = vpop.f32.mrf.mxu0
        %v3482 = vadd.f32 0.0, %v3481
        %v3483 = vpop.f32.mrf.mxu0
        %v3484 = vadd.f32 0.0, %v3483
        %3485 = vmatprep.mubr.f32.mxu0 0.0
        %v3486 = vand.u32 %v3404, 4294901760
        %v3487 = vsub.f32 %v3404, %v3486
        %v3488 = vand.u32 %v3487, 4294901760
        %v3489 = vsub.f32 %v3487, %v3488
        %v3490 = vand.u32 %v3489, 4294901760
        %3491 = vmatmul.mubr.f32.gmra.mxu0 %v3490
        %v3492 = vpop.f32.mrf.mxu0
        %v3493 = vadd.f32 0.0, %v3492
        %v3494 = vpop.f32.mrf.mxu0
        %v3495 = vadd.f32 0.0, %v3494
        %3496 = vdwg.mxu0
        %3497 = vmatprep.subr.mxu0 0.0
        %3498 = vmatpush1.msra.mxu0 0.0
        %3499 = vmatprep.subr.mxu0 0.0
        %3500 = vmatpush1.msra.mxu0 0.0
        %3501 = vmatprep.subr.mxu0 0.0
        %3502 = vmatpush1.msra.mxu0 0.0
        %3503 = vmatprep.subr.mxu0 0.0
        %3504 = vmatpush1.msra.mxu0 0.0
        %3505 = vmatprep.subr.mxu0 0.0
        %3506 = vmatpush1.msra.mxu0 0.0
        %3507 = vmatprep.subr.mxu0 0.0
        %3508 = vmatpush1.msra.mxu0 0.0
        %3509 = vmatprep.subr.mxu0 0.0
        %3510 = vmatpush1.msra.mxu0 0.0
        %3511 = vmatprep.subr.mxu0 0.0
        %3512 = vmatpush1.msra.mxu0 0.0
        %3513 = vmatprep.subr.mxu0 0.0
        %3514 = vmatpush1.msra.mxu0 0.0
        %3515 = vmatprep.subr.mxu0 0.0
        %3516 = vmatpush1.msra.mxu0 0.0
        %3517 = vmatprep.subr.mxu0 0.0
        %3518 = vmatpush1.msra.mxu0 0.0
        %3519 = vmatprep.subr.mxu0 0.0
        %3520 = vmatpush1.msra.mxu0 0.0
        %3521 = vmatprep.subr.mxu0 0.0
        %3522 = vmatpush1.msra.mxu0 0.0
        %3523 = vmatprep.subr.mxu0 0.0
        %3524 = vmatpush1.msra.mxu0 0.0
        %v3525 = vand.u32 %v3398, 4294901760
        %v3526 = vsub.f32 %v3398, %v3525
        %v3527 = vand.u32 %v3526, 4294901760
        %v3528 = vsub.f32 %v3526, %v3527
        %v3529 = vand.u32 %v3528, 4294901760
        %3530 = vmatprep.subr.mxu0 %v3529
        %v3531 = vand.u32 %v3397, 4294901760
        %v3532 = vsub.f32 %v3397, %v3531
        %v3533 = vand.u32 %v3532, 4294901760
        %v3534 = vsub.f32 %v3532, %v3533
        %v3535 = vand.u32 %v3534, 4294901760
        %3536 = vmatpush1.msra.mxu0 %v3535
        %v3537 = vand.u32 %v3395, 4294901760
        %v3538 = vsub.f32 %v3395, %v3537
        %v3539 = vand.u32 %v3538, 4294901760
        %v3540 = vsub.f32 %v3538, %v3539
        %v3541 = vand.u32 %v3540, 4294901760
        %3542 = vmatprep.subr.mxu0 %v3541
        %v3543 = vand.u32 %v3394, 4294901760
        %v3544 = vsub.f32 %v3394, %v3543
        %v3545 = vand.u32 %v3544, 4294901760
        %v3546 = vsub.f32 %v3544, %v3545
        %v3547 = vand.u32 %v3546, 4294901760
        %3548 = vmatpush1.msra.mxu0 %v3547
        %3549 = vmatprep.subr.mxu0 0.0
        %3550 = vmatpush2.msra.mxu0 0.0
        %3551 = vmatprep.subr.mxu0 0.0
        %3552 = vmatpush2.msra.mxu0 0.0
        %3553 = vmatprep.subr.mxu0 0.0
        %3554 = vmatpush2.msra.mxu0 0.0
        %3555 = vmatprep.subr.mxu0 0.0
        %3556 = vmatpush2.msra.mxu0 0.0
        %3557 = vmatprep.subr.mxu0 0.0
        %3558 = vmatpush2.msra.mxu0 0.0
        %3559 = vmatprep.subr.mxu0 0.0
        %3560 = vmatpush2.msra.mxu0 0.0
        %3561 = vmatprep.subr.mxu0 0.0
        %3562 = vmatpush2.msra.mxu0 0.0
        %3563 = vmatprep.subr.mxu0 0.0
        %3564 = vmatpush2.msra.mxu0 0.0
        %3565 = vmatprep.subr.mxu0 0.0
        %3566 = vmatpush2.msra.mxu0 0.0
        %3567 = vmatprep.subr.mxu0 0.0
        %3568 = vmatpush2.msra.mxu0 0.0
        %3569 = vmatprep.subr.mxu0 0.0
        %3570 = vmatpush2.msra.mxu0 0.0
        %3571 = vmatprep.subr.mxu0 0.0
        %3572 = vmatpush2.msra.mxu0 0.0
        %3573 = vmatprep.subr.mxu0 0.0
        %3574 = vmatpush2.msra.mxu0 0.0
        %3575 = vmatprep.subr.mxu0 0.0
        %3576 = vmatpush2.msra.mxu0 0.0
        %3577 = vmatprep.subr.mxu0 0.0
        %3578 = vmatpush2.msra.mxu0 0.0
        %3579 = vmatprep.subr.mxu0 0.0
        %3580 = vmatpush2.msra.mxu0 0.0
        %3581 = vmatprep.mubr.f32.mxu0 0.0
        %v3582 = vand.u32 %v3401, 4294901760
        %3583 = vmatmul.mubr.f32.gmra.mxu0 %v3582
        %v3584 = vpop.f32.mrf.mxu0
        %v3585 = vadd.f32 %v3482, %v3584
        %v3586 = vpop.f32.mrf.mxu0
        %v3587 = vadd.f32 %v3484, %v3586
        %3588 = vmatprep.mubr.f32.mxu0 0.0
        %v3589 = vand.u32 %v3404, 4294901760
        %3590 = vmatmul.mubr.f32.gmra.mxu0 %v3589
        %v3591 = vpop.f32.mrf.mxu0
        %v3592 = vadd.f32 %v3493, %v3591
        %v3593 = vpop.f32.mrf.mxu0
        %v3594 = vadd.f32 %v3495, %v3593
        %3595 = vdwg.mxu0
        %3596 = vmatprep.subr.mxu0 0.0
        %3597 = vmatpush1.msra.mxu0 0.0
        %3598 = vmatprep.subr.mxu0 0.0
        %3599 = vmatpush1.msra.mxu0 0.0
        %3600 = vmatprep.subr.mxu0 0.0
        %3601 = vmatpush1.msra.mxu0 0.0
        %3602 = vmatprep.subr.mxu0 0.0
        %3603 = vmatpush1.msra.mxu0 0.0
        %3604 = vmatprep.subr.mxu0 0.0
        %3605 = vmatpush1.msra.mxu0 0.0
        %3606 = vmatprep.subr.mxu0 0.0
        %3607 = vmatpush1.msra.mxu0 0.0
        %3608 = vmatprep.subr.mxu0 0.0
        %3609 = vmatpush1.msra.mxu0 0.0
        %3610 = vmatprep.subr.mxu0 0.0
        %3611 = vmatpush1.msra.mxu0 0.0
        %3612 = vmatprep.subr.mxu0 0.0
        %3613 = vmatpush1.msra.mxu0 0.0
        %3614 = vmatprep.subr.mxu0 0.0
        %3615 = vmatpush1.msra.mxu0 0.0
        %3616 = vmatprep.subr.mxu0 0.0
        %3617 = vmatpush1.msra.mxu0 0.0
        %3618 = vmatprep.subr.mxu0 0.0
        %3619 = vmatpush1.msra.mxu0 0.0
        %3620 = vmatprep.subr.mxu0 0.0
        %3621 = vmatpush1.msra.mxu0 0.0
        %3622 = vmatprep.subr.mxu0 0.0
        %3623 = vmatpush1.msra.mxu0 0.0
        %v3624 = vand.u32 %v3398, 4294901760
        %v3625 = vsub.f32 %v3398, %v3624
        %3626 = vmatprep.subr.mxu0 %v3625
        %v3627 = vand.u32 %v3397, 4294901760
        %v3628 = vsub.f32 %v3397, %v3627
        %3629 = vmatpush1.msra.mxu0 %v3628
        %v3630 = vand.u32 %v3395, 4294901760
        %v3631 = vsub.f32 %v3395, %v3630
        %3632 = vmatprep.subr.mxu0 %v3631
        %v3633 = vand.u32 %v3394, 4294901760
        %v3634 = vsub.f32 %v3394, %v3633
        %3635 = vmatpush1.msra.mxu0 %v3634
        %3636 = vmatprep.subr.mxu0 0.0
        %3637 = vmatpush2.msra.mxu0 0.0
        %3638 = vmatprep.subr.mxu0 0.0
        %3639 = vmatpush2.msra.mxu0 0.0
        %3640 = vmatprep.subr.mxu0 0.0
        %3641 = vmatpush2.msra.mxu0 0.0
        %3642 = vmatprep.subr.mxu0 0.0
        %3643 = vmatpush2.msra.mxu0 0.0
        %3644 = vmatprep.subr.mxu0 0.0
        %3645 = vmatpush2.msra.mxu0 0.0
        %3646 = vmatprep.subr.mxu0 0.0
        %3647 = vmatpush2.msra.mxu0 0.0
        %3648 = vmatprep.subr.mxu0 0.0
        %3649 = vmatpush2.msra.mxu0 0.0
        %3650 = vmatprep.subr.mxu0 0.0
        %3651 = vmatpush2.msra.mxu0 0.0
        %3652 = vmatprep.subr.mxu0 0.0
        %3653 = vmatpush2.msra.mxu0 0.0
        %3654 = vmatprep.subr.mxu0 0.0
        %3655 = vmatpush2.msra.mxu0 0.0
        %3656 = vmatprep.subr.mxu0 0.0
        %3657 = vmatpush2.msra.mxu0 0.0
        %3658 = vmatprep.subr.mxu0 0.0
        %3659 = vmatpush2.msra.mxu0 0.0
        %3660 = vmatprep.subr.mxu0 0.0
        %3661 = vmatpush2.msra.mxu0 0.0
        %3662 = vmatprep.subr.mxu0 0.0
        %3663 = vmatpush2.msra.mxu0 0.0
        %3664 = vmatprep.subr.mxu0 0.0
        %3665 = vmatpush2.msra.mxu0 0.0
        %3666 = vmatprep.subr.mxu0 0.0
        %3667 = vmatpush2.msra.mxu0 0.0
        %3668 = vmatprep.mubr.f32.mxu0 0.0
        %v3669 = vand.u32 %v3401, 4294901760
        %v3670 = vsub.f32 %v3401, %v3669
        %3671 = vmatmul.mubr.f32.gmra.mxu0 %v3670
        %v3672 = vpop.f32.mrf.mxu0
        %v3673 = vadd.f32 %v3585, %v3672
        %v3674 = vpop.f32.mrf.mxu0
        %v3675 = vadd.f32 %v3587, %v3674
        %3676 = vmatprep.mubr.f32.mxu0 0.0
        %v3677 = vand.u32 %v3404, 4294901760
        %v3678 = vsub.f32 %v3404, %v3677
        %3679 = vmatmul.mubr.f32.gmra.mxu0 %v3678
        %v3680 = vpop.f32.mrf.mxu0
        %v3681 = vadd.f32 %v3592, %v3680
        %v3682 = vpop.f32.mrf.mxu0
        %v3683 = vadd.f32 %v3594, %v3682
        %3684 = vdwg.mxu0
        %3685 = vmatprep.subr.mxu0 0.0
        %3686 = vmatpush1.msra.mxu0 0.0
        %3687 = vmatprep.subr.mxu0 0.0
        %3688 = vmatpush1.msra.mxu0 0.0
        %3689 = vmatprep.subr.mxu0 0.0
        %3690 = vmatpush1.msra.mxu0 0.0
        %3691 = vmatprep.subr.mxu0 0.0
        %3692 = vmatpush1.msra.mxu0 0.0
        %3693 = vmatprep.subr.mxu0 0.0
        %3694 = vmatpush1.msra.mxu0 0.0
        %3695 = vmatprep.subr.mxu0 0.0
        %3696 = vmatpush1.msra.mxu0 0.0
        %3697 = vmatprep.subr.mxu0 0.0
        %3698 = vmatpush1.msra.mxu0 0.0
        %3699 = vmatprep.subr.mxu0 0.0
        %3700 = vmatpush1.msra.mxu0 0.0
        %3701 = vmatprep.subr.mxu0 0.0
        %3702 = vmatpush1.msra.mxu0 0.0
        %3703 = vmatprep.subr.mxu0 0.0
        %3704 = vmatpush1.msra.mxu0 0.0
        %3705 = vmatprep.subr.mxu0 0.0
        %3706 = vmatpush1.msra.mxu0 0.0
        %3707 = vmatprep.subr.mxu0 0.0
        %3708 = vmatpush1.msra.mxu0 0.0
        %3709 = vmatprep.subr.mxu0 0.0
        %3710 = vmatpush1.msra.mxu0 0.0
        %3711 = vmatprep.subr.mxu0 0.0
        %3712 = vmatpush1.msra.mxu0 0.0
        %v3713 = vand.u32 %v3398, 4294901760
        %3714 = vmatprep.subr.mxu0 %v3713
        %v3715 = vand.u32 %v3397, 4294901760
        %3716 = vmatpush1.msra.mxu0 %v3715
        %v3717 = vand.u32 %v3395, 4294901760
        %3718 = vmatprep.subr.mxu0 %v3717
        %v3719 = vand.u32 %v3394, 4294901760
        %3720 = vmatpush1.msra.mxu0 %v3719
        %3721 = vmatprep.subr.mxu0 0.0
        %3722 = vmatpush2.msra.mxu0 0.0
        %3723 = vmatprep.subr.mxu0 0.0
        %3724 = vmatpush2.msra.mxu0 0.0
        %3725 = vmatprep.subr.mxu0 0.0
        %3726 = vmatpush2.msra.mxu0 0.0
        %3727 = vmatprep.subr.mxu0 0.0
        %3728 = vmatpush2.msra.mxu0 0.0
        %3729 = vmatprep.subr.mxu0 0.0
        %3730 = vmatpush2.msra.mxu0 0.0
        %3731 = vmatprep.subr.mxu0 0.0
        %3732 = vmatpush2.msra.mxu0 0.0
        %3733 = vmatprep.subr.mxu0 0.0
        %3734 = vmatpush2.msra.mxu0 0.0
        %3735 = vmatprep.subr.mxu0 0.0
        %3736 = vmatpush2.msra.mxu0 0.0
        %3737 = vmatprep.subr.mxu0 0.0
        %3738 = vmatpush2.msra.mxu0 0.0
        %3739 = vmatprep.subr.mxu0 0.0
        %3740 = vmatpush2.msra.mxu0 0.0
        %3741 = vmatprep.subr.mxu0 0.0
        %3742 = vmatpush2.msra.mxu0 0.0
        %3743 = vmatprep.subr.mxu0 0.0
        %3744 = vmatpush2.msra.mxu0 0.0
        %3745 = vmatprep.subr.mxu0 0.0
        %3746 = vmatpush2.msra.mxu0 0.0
        %3747 = vmatprep.subr.mxu0 0.0
        %3748 = vmatpush2.msra.mxu0 0.0
        %3749 = vmatprep.subr.mxu0 0.0
        %3750 = vmatpush2.msra.mxu0 0.0
        %3751 = vmatprep.subr.mxu0 0.0
        %3752 = vmatpush2.msra.mxu0 0.0
        %3753 = vmatprep.mubr.f32.mxu0 0.0
        %v3754 = vand.u32 %v3401, 4294901760
        %v3755 = vsub.f32 %v3401, %v3754
        %v3756 = vand.u32 %v3755, 4294901760
        %3757 = vmatmul.mubr.f32.gmra.mxu0 %v3756
        %v3758 = vpop.f32.mrf.mxu0
        %v3759 = vadd.f32 %v3673, %v3758
        %v3760 = vpop.f32.mrf.mxu0
        %v3761 = vadd.f32 %v3675, %v3760
        %3762 = vmatprep.mubr.f32.mxu0 0.0
        %v3763 = vand.u32 %v3404, 4294901760
        %v3764 = vsub.f32 %v3404, %v3763
        %v3765 = vand.u32 %v3764, 4294901760
        %3766 = vmatmul.mubr.f32.gmra.mxu0 %v3765
        %v3767 = vpop.f32.mrf.mxu0
        %v3768 = vadd.f32 %v3681, %v3767
        %v3769 = vpop.f32.mrf.mxu0
        %v3770 = vadd.f32 %v3683, %v3769
        %3771 = vdwg.mxu0
        %3772 = vmatprep.subr.mxu0 0.0
        %3773 = vmatpush1.msra.mxu0 0.0
        %3774 = vmatprep.subr.mxu0 0.0
        %3775 = vmatpush1.msra.mxu0 0.0
        %3776 = vmatprep.subr.mxu0 0.0
        %3777 = vmatpush1.msra.mxu0 0.0
        %3778 = vmatprep.subr.mxu0 0.0
        %3779 = vmatpush1.msra.mxu0 0.0
        %3780 = vmatprep.subr.mxu0 0.0
        %3781 = vmatpush1.msra.mxu0 0.0
        %3782 = vmatprep.subr.mxu0 0.0
        %3783 = vmatpush1.msra.mxu0 0.0
        %3784 = vmatprep.subr.mxu0 0.0
        %3785 = vmatpush1.msra.mxu0 0.0
        %3786 = vmatprep.subr.mxu0 0.0
        %3787 = vmatpush1.msra.mxu0 0.0
        %3788 = vmatprep.subr.mxu0 0.0
        %3789 = vmatpush1.msra.mxu0 0.0
        %3790 = vmatprep.subr.mxu0 0.0
        %3791 = vmatpush1.msra.mxu0 0.0
        %3792 = vmatprep.subr.mxu0 0.0
        %3793 = vmatpush1.msra.mxu0 0.0
        %3794 = vmatprep.subr.mxu0 0.0
        %3795 = vmatpush1.msra.mxu0 0.0
        %3796 = vmatprep.subr.mxu0 0.0
        %3797 = vmatpush1.msra.mxu0 0.0
        %3798 = vmatprep.subr.mxu0 0.0
        %3799 = vmatpush1.msra.mxu0 0.0
        %v3800 = vand.u32 %v3398, 4294901760
        %v3801 = vsub.f32 %v3398, %v3800
        %v3802 = vand.u32 %v3801, 4294901760
        %3803 = vmatprep.subr.mxu0 %v3802
        %v3804 = vand.u32 %v3397, 4294901760
        %v3805 = vsub.f32 %v3397, %v3804
        %v3806 = vand.u32 %v3805, 4294901760
        %3807 = vmatpush1.msra.mxu0 %v3806
        %v3808 = vand.u32 %v3395, 4294901760
        %v3809 = vsub.f32 %v3395, %v3808
        %v3810 = vand.u32 %v3809, 4294901760
        %3811 = vmatprep.subr.mxu0 %v3810
        %v3812 = vand.u32 %v3394, 4294901760
        %v3813 = vsub.f32 %v3394, %v3812
        %v3814 = vand.u32 %v3813, 4294901760
        %3815 = vmatpush1.msra.mxu0 %v3814
        %3816 = vmatprep.subr.mxu0 0.0
        %3817 = vmatpush2.msra.mxu0 0.0
        %3818 = vmatprep.subr.mxu0 0.0
        %3819 = vmatpush2.msra.mxu0 0.0
        %3820 = vmatprep.subr.mxu0 0.0
        %3821 = vmatpush2.msra.mxu0 0.0
        %3822 = vmatprep.subr.mxu0 0.0
        %3823 = vmatpush2.msra.mxu0 0.0
        %3824 = vmatprep.subr.mxu0 0.0
        %3825 = vmatpush2.msra.mxu0 0.0
        %3826 = vmatprep.subr.mxu0 0.0
        %3827 = vmatpush2.msra.mxu0 0.0
        %3828 = vmatprep.subr.mxu0 0.0
        %3829 = vmatpush2.msra.mxu0 0.0
        %3830 = vmatprep.subr.mxu0 0.0
        %3831 = vmatpush2.msra.mxu0 0.0
        %3832 = vmatprep.subr.mxu0 0.0
        %3833 = vmatpush2.msra.mxu0 0.0
        %3834 = vmatprep.subr.mxu0 0.0
        %3835 = vmatpush2.msra.mxu0 0.0
        %3836 = vmatprep.subr.mxu0 0.0
        %3837 = vmatpush2.msra.mxu0 0.0
        %3838 = vmatprep.subr.mxu0 0.0
        %3839 = vmatpush2.msra.mxu0 0.0
        %3840 = vmatprep.subr.mxu0 0.0
        %3841 = vmatpush2.msra.mxu0 0.0
        %3842 = vmatprep.subr.mxu0 0.0
        %3843 = vmatpush2.msra.mxu0 0.0
        %3844 = vmatprep.subr.mxu0 0.0
        %3845 = vmatpush2.msra.mxu0 0.0
        %3846 = vmatprep.subr.mxu0 0.0
        %3847 = vmatpush2.msra.mxu0 0.0
        %3848 = vmatprep.mubr.f32.mxu0 0.0
        %v3849 = vand.u32 %v3401, 4294901760
        %3850 = vmatmul.mubr.f32.gmra.mxu0 %v3849
        %v3851 = vpop.f32.mrf.mxu0
        %v3852 = vadd.f32 %v3759, %v3851
        %v3853 = vpop.f32.mrf.mxu0
        %v3854 = vadd.f32 %v3761, %v3853
        %3855 = vmatprep.mubr.f32.mxu0 0.0
        %v3856 = vand.u32 %v3404, 4294901760
        %3857 = vmatmul.mubr.f32.gmra.mxu0 %v3856
        %v3858 = vpop.f32.mrf.mxu0
        %v3859 = vadd.f32 %v3768, %v3858
        %v3860 = vpop.f32.mrf.mxu0
        %v3861 = vadd.f32 %v3770, %v3860
        %3862 = vdwg.mxu0
        %3863 = vmatprep.subr.mxu0 0.0
        %3864 = vmatpush1.msra.mxu0 0.0
        %3865 = vmatprep.subr.mxu0 0.0
        %3866 = vmatpush1.msra.mxu0 0.0
        %3867 = vmatprep.subr.mxu0 0.0
        %3868 = vmatpush1.msra.mxu0 0.0
        %3869 = vmatprep.subr.mxu0 0.0
        %3870 = vmatpush1.msra.mxu0 0.0
        %3871 = vmatprep.subr.mxu0 0.0
        %3872 = vmatpush1.msra.mxu0 0.0
        %3873 = vmatprep.subr.mxu0 0.0
        %3874 = vmatpush1.msra.mxu0 0.0
        %3875 = vmatprep.subr.mxu0 0.0
        %3876 = vmatpush1.msra.mxu0 0.0
        %3877 = vmatprep.subr.mxu0 0.0
        %3878 = vmatpush1.msra.mxu0 0.0
        %3879 = vmatprep.subr.mxu0 0.0
        %3880 = vmatpush1.msra.mxu0 0.0
        %3881 = vmatprep.subr.mxu0 0.0
        %3882 = vmatpush1.msra.mxu0 0.0
        %3883 = vmatprep.subr.mxu0 0.0
        %3884 = vmatpush1.msra.mxu0 0.0
        %3885 = vmatprep.subr.mxu0 0.0
        %3886 = vmatpush1.msra.mxu0 0.0
        %3887 = vmatprep.subr.mxu0 0.0
        %3888 = vmatpush1.msra.mxu0 0.0
        %3889 = vmatprep.subr.mxu0 0.0
        %3890 = vmatpush1.msra.mxu0 0.0
        %v3891 = vand.u32 %v3398, 4294901760
        %3892 = vmatprep.subr.mxu0 %v3891
        %v3893 = vand.u32 %v3397, 4294901760
        %3894 = vmatpush1.msra.mxu0 %v3893
        %v3895 = vand.u32 %v3395, 4294901760
        %3896 = vmatprep.subr.mxu0 %v3895
        %v3897 = vand.u32 %v3394, 4294901760
        %3898 = vmatpush1.msra.mxu0 %v3897
        %3899 = vmatprep.subr.mxu0 0.0
        %3900 = vmatpush2.msra.mxu0 0.0
        %3901 = vmatprep.subr.mxu0 0.0
        %3902 = vmatpush2.msra.mxu0 0.0
        %3903 = vmatprep.subr.mxu0 0.0
        %3904 = vmatpush2.msra.mxu0 0.0
        %3905 = vmatprep.subr.mxu0 0.0
        %3906 = vmatpush2.msra.mxu0 0.0
        %3907 = vmatprep.subr.mxu0 0.0
        %3908 = vmatpush2.msra.mxu0 0.0
        %3909 = vmatprep.subr.mxu0 0.0
        %3910 = vmatpush2.msra.mxu0 0.0
        %3911 = vmatprep.subr.mxu0 0.0
        %3912 = vmatpush2.msra.mxu0 0.0
        %3913 = vmatprep.subr.mxu0 0.0
        %3914 = vmatpush2.msra.mxu0 0.0
        %3915 = vmatprep.subr.mxu0 0.0
        %3916 = vmatpush2.msra.mxu0 0.0
        %3917 = vmatprep.subr.mxu0 0.0
        %3918 = vmatpush2.msra.mxu0 0.0
        %3919 = vmatprep.subr.mxu0 0.0
        %3920 = vmatpush2.msra.mxu0 0.0
        %3921 = vmatprep.subr.mxu0 0.0
        %3922 = vmatpush2.msra.mxu0 0.0
        %3923 = vmatprep.subr.mxu0 0.0
        %3924 = vmatpush2.msra.mxu0 0.0
        %3925 = vmatprep.subr.mxu0 0.0
        %3926 = vmatpush2.msra.mxu0 0.0
        %3927 = vmatprep.subr.mxu0 0.0
        %3928 = vmatpush2.msra.mxu0 0.0
        %3929 = vmatprep.subr.mxu0 0.0
        %3930 = vmatpush2.msra.mxu0 0.0
        %3931 = vmatprep.mubr.f32.mxu0 0.0
        %v3932 = vand.u32 %v3401, 4294901760
        %3933 = vmatmul.mubr.f32.gmra.mxu0 %v3932
        %v3934 = vpop.f32.mrf.mxu0
        %v3935 = vadd.f32 %v3852, %v3934
        %v3936 = vpop.f32.mrf.mxu0
        %v3937 = vadd.f32 %v3854, %v3936
        %3938 = vmatprep.mubr.f32.mxu0 0.0
        %v3939 = vand.u32 %v3404, 4294901760
        %3940 = vmatmul.mubr.f32.gmra.mxu0 %v3939
        %v3941 = vpop.f32.mrf.mxu0
        %v3942 = vadd.f32 %v3859, %v3941
        %v3943 = vpop.f32.mrf.mxu0
        %v3944 = vadd.f32 %v3861, %v3943
        %3945 = vdwg.mxu0
        %3946 = vmatprep.subr.mxu0 0.0
        %3947 = vmatpush1.msra.mxu0 0.0
        %3948 = vmatprep.subr.mxu0 0.0
        %3949 = vmatpush1.msra.mxu0 0.0
        %3950 = vmatprep.subr.mxu0 0.0
        %3951 = vmatpush1.msra.mxu0 0.0
        %3952 = vmatprep.subr.mxu0 0.0
        %3953 = vmatpush1.msra.mxu0 0.0
        %3954 = vmatprep.subr.mxu0 0.0
        %3955 = vmatpush1.msra.mxu0 0.0
        %3956 = vmatprep.subr.mxu0 0.0
        %3957 = vmatpush1.msra.mxu0 0.0
        %3958 = vmatprep.subr.mxu0 0.0
        %3959 = vmatpush1.msra.mxu0 0.0
        %3960 = vmatprep.subr.mxu0 0.0
        %3961 = vmatpush1.msra.mxu0 0.0
        %3962 = vmatprep.subr.mxu0 0.0
        %3963 = vmatpush1.msra.mxu0 0.0
        %3964 = vmatprep.subr.mxu0 0.0
        %3965 = vmatpush1.msra.mxu0 0.0
        %3966 = vmatprep.subr.mxu0 0.0
        %3967 = vmatpush1.msra.mxu0 0.0
        %3968 = vmatprep.subr.mxu0 0.0
        %3969 = vmatpush1.msra.mxu0 0.0
        %3970 = vmatprep.subr.mxu0 0.0
        %3971 = vmatpush1.msra.mxu0 0.0
        %3972 = vmatprep.subr.mxu0 0.0
        %3973 = vmatpush1.msra.mxu0 0.0
        %3974 = vmatprep.subr.mxu0 0.0
        %v3975 = vand.u32 %v3399, 4294901760
        %3976 = vmatpush1.msra.mxu0 %v3975
        %3977 = vmatprep.subr.mxu0 0.0
        %v3978 = vand.u32 %v3396, 4294901760
        %3979 = vmatpush1.msra.mxu0 %v3978
        %3980 = vmatprep.subr.mxu0 0.0
        %3981 = vmatpush2.msra.mxu0 0.0
        %3982 = vmatprep.subr.mxu0 0.0
        %3983 = vmatpush2.msra.mxu0 0.0
        %3984 = vmatprep.subr.mxu0 0.0
        %3985 = vmatpush2.msra.mxu0 0.0
        %3986 = vmatprep.subr.mxu0 0.0
        %3987 = vmatpush2.msra.mxu0 0.0
        %3988 = vmatprep.subr.mxu0 0.0
        %3989 = vmatpush2.msra.mxu0 0.0
        %3990 = vmatprep.subr.mxu0 0.0
        %3991 = vmatpush2.msra.mxu0 0.0
        %3992 = vmatprep.subr.mxu0 0.0
        %3993 = vmatpush2.msra.mxu0 0.0
        %3994 = vmatprep.subr.mxu0 0.0
        %3995 = vmatpush2.msra.mxu0 0.0
        %3996 = vmatprep.subr.mxu0 0.0
        %3997 = vmatpush2.msra.mxu0 0.0
        %3998 = vmatprep.subr.mxu0 0.0
        %3999 = vmatpush2.msra.mxu0 0.0
        %4000 = vmatprep.subr.mxu0 0.0
        %4001 = vmatpush2.msra.mxu0 0.0
        %4002 = vmatprep.subr.mxu0 0.0
        %4003 = vmatpush2.msra.mxu0 0.0
        %4004 = vmatprep.subr.mxu0 0.0
        %4005 = vmatpush2.msra.mxu0 0.0
        %4006 = vmatprep.subr.mxu0 0.0
        %4007 = vmatpush2.msra.mxu0 0.0
        %4008 = vmatprep.subr.mxu0 0.0
        %4009 = vmatpush2.msra.mxu0 0.0
        %4010 = vmatprep.subr.mxu0 0.0
        %4011 = vmatpush2.msra.mxu0 0.0
        %4012 = vmatprep.mubr.f32.mxu0 0.0
        %v4013 = vand.u32 %v3401, 4294901760
        %v4014 = vsub.f32 %v3401, %v4013
        %v4015 = vand.u32 %v4014, 4294901760
        %v4016 = vsub.f32 %v4014, %v4015
        %v4017 = vand.u32 %v4016, 4294901760
        %4018 = vmatmul.mubr.f32.gmra.mxu0 %v4017
        %v4019 = vpop.f32.mrf.mxu0
        %v4020 = vadd.f32 0.0, %v4019
        %v4021 = vpop.f32.mrf.mxu0
        %4022 = vmatprep.mubr.f32.mxu0 0.0
        %v4023 = vand.u32 %v3404, 4294901760
        %v4024 = vsub.f32 %v3404, %v4023
        %v4025 = vand.u32 %v4024, 4294901760
        %v4026 = vsub.f32 %v4024, %v4025
        %v4027 = vand.u32 %v4026, 4294901760
        %4028 = vmatmul.mubr.f32.gmra.mxu0 %v4027
        %v4029 = vpop.f32.mrf.mxu0
        %v4030 = vadd.f32 0.0, %v4029
        %v4031 = vpop.f32.mrf.mxu0
        %4032 = vdwg.mxu0
        %4033 = vmatprep.subr.mxu0 0.0
        %4034 = vmatpush1.msra.mxu0 0.0
        %4035 = vmatprep.subr.mxu0 0.0
        %4036 = vmatpush1.msra.mxu0 0.0
        %4037 = vmatprep.subr.mxu0 0.0
        %4038 = vmatpush1.msra.mxu0 0.0
        %4039 = vmatprep.subr.mxu0 0.0
        %4040 = vmatpush1.msra.mxu0 0.0
        %4041 = vmatprep.subr.mxu0 0.0
        %4042 = vmatpush1.msra.mxu0 0.0
        %4043 = vmatprep.subr.mxu0 0.0
        %4044 = vmatpush1.msra.mxu0 0.0
        %4045 = vmatprep.subr.mxu0 0.0
        %4046 = vmatpush1.msra.mxu0 0.0
        %4047 = vmatprep.subr.mxu0 0.0
        %4048 = vmatpush1.msra.mxu0 0.0
        %4049 = vmatprep.subr.mxu0 0.0
        %4050 = vmatpush1.msra.mxu0 0.0
        %4051 = vmatprep.subr.mxu0 0.0
        %4052 = vmatpush1.msra.mxu0 0.0
        %4053 = vmatprep.subr.mxu0 0.0
        %4054 = vmatpush1.msra.mxu0 0.0
        %4055 = vmatprep.subr.mxu0 0.0
        %4056 = vmatpush1.msra.mxu0 0.0
        %4057 = vmatprep.subr.mxu0 0.0
        %4058 = vmatpush1.msra.mxu0 0.0
        %4059 = vmatprep.subr.mxu0 0.0
        %4060 = vmatpush1.msra.mxu0 0.0
        %4061 = vmatprep.subr.mxu0 0.0
        %v4062 = vand.u32 %v3399, 4294901760
        %v4063 = vsub.f32 %v3399, %v4062
        %v4064 = vand.u32 %v4063, 4294901760
        %v4065 = vsub.f32 %v4063, %v4064
        %v4066 = vand.u32 %v4065, 4294901760
        %4067 = vmatpush1.msra.mxu0 %v4066
        %4068 = vmatprep.subr.mxu0 0.0
        %v4069 = vand.u32 %v3396, 4294901760
        %v4070 = vsub.f32 %v3396, %v4069
        %v4071 = vand.u32 %v4070, 4294901760
        %v4072 = vsub.f32 %v4070, %v4071
        %v4073 = vand.u32 %v4072, 4294901760
        %4074 = vmatpush1.msra.mxu0 %v4073
        %4075 = vmatprep.subr.mxu0 0.0
        %4076 = vmatpush2.msra.mxu0 0.0
        %4077 = vmatprep.subr.mxu0 0.0
        %4078 = vmatpush2.msra.mxu0 0.0
        %4079 = vmatprep.subr.mxu0 0.0
        %4080 = vmatpush2.msra.mxu0 0.0
        %4081 = vmatprep.subr.mxu0 0.0
        %4082 = vmatpush2.msra.mxu0 0.0
        %4083 = vmatprep.subr.mxu0 0.0
        %4084 = vmatpush2.msra.mxu0 0.0
        %4085 = vmatprep.subr.mxu0 0.0
        %4086 = vmatpush2.msra.mxu0 0.0
        %4087 = vmatprep.subr.mxu0 0.0
        %4088 = vmatpush2.msra.mxu0 0.0
        %4089 = vmatprep.subr.mxu0 0.0
        %4090 = vmatpush2.msra.mxu0 0.0
        %4091 = vmatprep.subr.mxu0 0.0
        %4092 = vmatpush2.msra.mxu0 0.0
        %4093 = vmatprep.subr.mxu0 0.0
        %4094 = vmatpush2.msra.mxu0 0.0
        %4095 = vmatprep.subr.mxu0 0.0
        %4096 = vmatpush2.msra.mxu0 0.0
        %4097 = vmatprep.subr.mxu0 0.0
        %4098 = vmatpush2.msra.mxu0 0.0
        %4099 = vmatprep.subr.mxu0 0.0
        %4100 = vmatpush2.msra.mxu0 0.0
        %4101 = vmatprep.subr.mxu0 0.0
        %4102 = vmatpush2.msra.mxu0 0.0
        %4103 = vmatprep.subr.mxu0 0.0
        %4104 = vmatpush2.msra.mxu0 0.0
        %4105 = vmatprep.subr.mxu0 0.0
        %4106 = vmatpush2.msra.mxu0 0.0
        %4107 = vmatprep.mubr.f32.mxu0 0.0
        %v4108 = vand.u32 %v3401, 4294901760
        %4109 = vmatmul.mubr.f32.gmra.mxu0 %v4108
        %v4110 = vpop.f32.mrf.mxu0
        %v4111 = vadd.f32 %v4020, %v4110
        %v4112 = vpop.f32.mrf.mxu0
        %4113 = vmatprep.mubr.f32.mxu0 0.0
        %v4114 = vand.u32 %v3404, 4294901760
        %4115 = vmatmul.mubr.f32.gmra.mxu0 %v4114
        %v4116 = vpop.f32.mrf.mxu0
        %v4117 = vadd.f32 %v4030, %v4116
        %v4118 = vpop.f32.mrf.mxu0
        %4119 = vdwg.mxu0
        %4120 = vmatprep.subr.mxu0 0.0
        %4121 = vmatpush1.msra.mxu0 0.0
        %4122 = vmatprep.subr.mxu0 0.0
        %4123 = vmatpush1.msra.mxu0 0.0
        %4124 = vmatprep.subr.mxu0 0.0
        %4125 = vmatpush1.msra.mxu0 0.0
        %4126 = vmatprep.subr.mxu0 0.0
        %4127 = vmatpush1.msra.mxu0 0.0
        %4128 = vmatprep.subr.mxu0 0.0
        %4129 = vmatpush1.msra.mxu0 0.0
        %4130 = vmatprep.subr.mxu0 0.0
        %4131 = vmatpush1.msra.mxu0 0.0
        %4132 = vmatprep.subr.mxu0 0.0
        %4133 = vmatpush1.msra.mxu0 0.0
        %4134 = vmatprep.subr.mxu0 0.0
        %4135 = vmatpush1.msra.mxu0 0.0
        %4136 = vmatprep.subr.mxu0 0.0
        %4137 = vmatpush1.msra.mxu0 0.0
        %4138 = vmatprep.subr.mxu0 0.0
        %4139 = vmatpush1.msra.mxu0 0.0
        %4140 = vmatprep.subr.mxu0 0.0
        %4141 = vmatpush1.msra.mxu0 0.0
        %4142 = vmatprep.subr.mxu0 0.0
        %4143 = vmatpush1.msra.mxu0 0.0
        %4144 = vmatprep.subr.mxu0 0.0
        %4145 = vmatpush1.msra.mxu0 0.0
        %4146 = vmatprep.subr.mxu0 0.0
        %4147 = vmatpush1.msra.mxu0 0.0
        %4148 = vmatprep.subr.mxu0 0.0
        %v4149 = vand.u32 %v3399, 4294901760
        %v4150 = vsub.f32 %v3399, %v4149
        %4151 = vmatpush1.msra.mxu0 %v4150
        %4152 = vmatprep.subr.mxu0 0.0
        %v4153 = vand.u32 %v3396, 4294901760
        %v4154 = vsub.f32 %v3396, %v4153
        %4155 = vmatpush1.msra.mxu0 %v4154
        %4156 = vmatprep.subr.mxu0 0.0
        %4157 = vmatpush2.msra.mxu0 0.0
        %4158 = vmatprep.subr.mxu0 0.0
        %4159 = vmatpush2.msra.mxu0 0.0
        %4160 = vmatprep.subr.mxu0 0.0
        %4161 = vmatpush2.msra.mxu0 0.0
        %4162 = vmatprep.subr.mxu0 0.0
        %4163 = vmatpush2.msra.mxu0 0.0
        %4164 = vmatprep.subr.mxu0 0.0
        %4165 = vmatpush2.msra.mxu0 0.0
        %4166 = vmatprep.subr.mxu0 0.0
        %4167 = vmatpush2.msra.mxu0 0.0
        %4168 = vmatprep.subr.mxu0 0.0
        %4169 = vmatpush2.msra.mxu0 0.0
        %4170 = vmatprep.subr.mxu0 0.0
        %4171 = vmatpush2.msra.mxu0 0.0
        %4172 = vmatprep.subr.mxu0 0.0
        %4173 = vmatpush2.msra.mxu0 0.0
        %4174 = vmatprep.subr.mxu0 0.0
        %4175 = vmatpush2.msra.mxu0 0.0
        %4176 = vmatprep.subr.mxu0 0.0
        %4177 = vmatpush2.msra.mxu0 0.0
        %4178 = vmatprep.subr.mxu0 0.0
        %4179 = vmatpush2.msra.mxu0 0.0
        %4180 = vmatprep.subr.mxu0 0.0
        %4181 = vmatpush2.msra.mxu0 0.0
        %4182 = vmatprep.subr.mxu0 0.0
        %4183 = vmatpush2.msra.mxu0 0.0
        %4184 = vmatprep.subr.mxu0 0.0
        %4185 = vmatpush2.msra.mxu0 0.0
        %4186 = vmatprep.subr.mxu0 0.0
        %4187 = vmatpush2.msra.mxu0 0.0
        %4188 = vmatprep.mubr.f32.mxu0 0.0
        %v4189 = vand.u32 %v3401, 4294901760
        %v4190 = vsub.f32 %v3401, %v4189
        %4191 = vmatmul.mubr.f32.gmra.mxu0 %v4190
        %v4192 = vpop.f32.mrf.mxu0
        %v4193 = vadd.f32 %v4111, %v4192
        %v4194 = vpop.f32.mrf.mxu0
        %4195 = vmatprep.mubr.f32.mxu0 0.0
        %v4196 = vand.u32 %v3404, 4294901760
        %v4197 = vsub.f32 %v3404, %v4196
        %4198 = vmatmul.mubr.f32.gmra.mxu0 %v4197
        %v4199 = vpop.f32.mrf.mxu0
        %v4200 = vadd.f32 %v4117, %v4199
        %v4201 = vpop.f32.mrf.mxu0
        %4202 = vdwg.mxu0
        %4203 = vmatprep.subr.mxu0 0.0
        %4204 = vmatpush1.msra.mxu0 0.0
        %4205 = vmatprep.subr.mxu0 0.0
        %4206 = vmatpush1.msra.mxu0 0.0
        %4207 = vmatprep.subr.mxu0 0.0
        %4208 = vmatpush1.msra.mxu0 0.0
        %4209 = vmatprep.subr.mxu0 0.0
        %4210 = vmatpush1.msra.mxu0 0.0
        %4211 = vmatprep.subr.mxu0 0.0
        %4212 = vmatpush1.msra.mxu0 0.0
        %4213 = vmatprep.subr.mxu0 0.0
        %4214 = vmatpush1.msra.mxu0 0.0
        %4215 = vmatprep.subr.mxu0 0.0
        %4216 = vmatpush1.msra.mxu0 0.0
        %4217 = vmatprep.subr.mxu0 0.0
        %4218 = vmatpush1.msra.mxu0 0.0
        %4219 = vmatprep.subr.mxu0 0.0
        %4220 = vmatpush1.msra.mxu0 0.0
        %4221 = vmatprep.subr.mxu0 0.0
        %4222 = vmatpush1.msra.mxu0 0.0
        %4223 = vmatprep.subr.mxu0 0.0
        %4224 = vmatpush1.msra.mxu0 0.0
        %4225 = vmatprep.subr.mxu0 0.0
        %4226 = vmatpush1.msra.mxu0 0.0
        %4227 = vmatprep.subr.mxu0 0.0
        %4228 = vmatpush1.msra.mxu0 0.0
        %4229 = vmatprep.subr.mxu0 0.0
        %4230 = vmatpush1.msra.mxu0 0.0
        %4231 = vmatprep.subr.mxu0 0.0
        %v4232 = vand.u32 %v3399, 4294901760
        %4233 = vmatpush1.msra.mxu0 %v4232
        %4234 = vmatprep.subr.mxu0 0.0
        %v4235 = vand.u32 %v3396, 4294901760
        %4236 = vmatpush1.msra.mxu0 %v4235
        %4237 = vmatprep.subr.mxu0 0.0
        %4238 = vmatpush2.msra.mxu0 0.0
        %4239 = vmatprep.subr.mxu0 0.0
        %4240 = vmatpush2.msra.mxu0 0.0
        %4241 = vmatprep.subr.mxu0 0.0
        %4242 = vmatpush2.msra.mxu0 0.0
        %4243 = vmatprep.subr.mxu0 0.0
        %4244 = vmatpush2.msra.mxu0 0.0
        %4245 = vmatprep.subr.mxu0 0.0
        %4246 = vmatpush2.msra.mxu0 0.0
        %4247 = vmatprep.subr.mxu0 0.0
        %4248 = vmatpush2.msra.mxu0 0.0
        %4249 = vmatprep.subr.mxu0 0.0
        %4250 = vmatpush2.msra.mxu0 0.0
        %4251 = vmatprep.subr.mxu0 0.0
        %4252 = vmatpush2.msra.mxu0 0.0
        %4253 = vmatprep.subr.mxu0 0.0
        %4254 = vmatpush2.msra.mxu0 0.0
        %4255 = vmatprep.subr.mxu0 0.0
        %4256 = vmatpush2.msra.mxu0 0.0
        %4257 = vmatprep.subr.mxu0 0.0
        %4258 = vmatpush2.msra.mxu0 0.0
        %4259 = vmatprep.subr.mxu0 0.0
        %4260 = vmatpush2.msra.mxu0 0.0
        %4261 = vmatprep.subr.mxu0 0.0
        %4262 = vmatpush2.msra.mxu0 0.0
        %4263 = vmatprep.subr.mxu0 0.0
        %4264 = vmatpush2.msra.mxu0 0.0
        %4265 = vmatprep.subr.mxu0 0.0
        %4266 = vmatpush2.msra.mxu0 0.0
        %4267 = vmatprep.subr.mxu0 0.0
        %4268 = vmatpush2.msra.mxu0 0.0
        %4269 = vmatprep.mubr.f32.mxu0 0.0
        %v4270 = vand.u32 %v3401, 4294901760
        %v4271 = vsub.f32 %v3401, %v4270
        %v4272 = vand.u32 %v4271, 4294901760
        %4273 = vmatmul.mubr.f32.gmra.mxu0 %v4272
        %v4274 = vpop.f32.mrf.mxu0
        %v4275 = vadd.f32 %v4193, %v4274
        %v4276 = vpop.f32.mrf.mxu0
        %4277 = vmatprep.mubr.f32.mxu0 0.0
        %v4278 = vand.u32 %v3404, 4294901760
        %v4279 = vsub.f32 %v3404, %v4278
        %v4280 = vand.u32 %v4279, 4294901760
        %4281 = vmatmul.mubr.f32.gmra.mxu0 %v4280
        %v4282 = vpop.f32.mrf.mxu0
        %v4283 = vadd.f32 %v4200, %v4282
        %v4284 = vpop.f32.mrf.mxu0
        %4285 = vdwg.mxu0
        %4286 = vmatprep.subr.mxu0 0.0
        %4287 = vmatpush1.msra.mxu0 0.0
        %4288 = vmatprep.subr.mxu0 0.0
        %4289 = vmatpush1.msra.mxu0 0.0
        %4290 = vmatprep.subr.mxu0 0.0
        %4291 = vmatpush1.msra.mxu0 0.0
        %4292 = vmatprep.subr.mxu0 0.0
        %4293 = vmatpush1.msra.mxu0 0.0
        %4294 = vmatprep.subr.mxu0 0.0
        %4295 = vmatpush1.msra.mxu0 0.0
        %4296 = vmatprep.subr.mxu0 0.0
        %4297 = vmatpush1.msra.mxu0 0.0
        %4298 = vmatprep.subr.mxu0 0.0
        %4299 = vmatpush1.msra.mxu0 0.0
        %4300 = vmatprep.subr.mxu0 0.0
        %4301 = vmatpush1.msra.mxu0 0.0
        %4302 = vmatprep.subr.mxu0 0.0
        %4303 = vmatpush1.msra.mxu0 0.0
        %4304 = vmatprep.subr.mxu0 0.0
        %4305 = vmatpush1.msra.mxu0 0.0
        %4306 = vmatprep.subr.mxu0 0.0
        %4307 = vmatpush1.msra.mxu0 0.0
        %4308 = vmatprep.subr.mxu0 0.0
        %4309 = vmatpush1.msra.mxu0 0.0
        %4310 = vmatprep.subr.mxu0 0.0
        %4311 = vmatpush1.msra.mxu0 0.0
        %4312 = vmatprep.subr.mxu0 0.0
        %4313 = vmatpush1.msra.mxu0 0.0
        %4314 = vmatprep.subr.mxu0 0.0
        %v4315 = vand.u32 %v3399, 4294901760
        %v4316 = vsub.f32 %v3399, %v4315
        %v4317 = vand.u32 %v4316, 4294901760
        %4318 = vmatpush1.msra.mxu0 %v4317
        %4319 = vmatprep.subr.mxu0 0.0
        %v4320 = vand.u32 %v3396, 4294901760
        %v4321 = vsub.f32 %v3396, %v4320
        %v4322 = vand.u32 %v4321, 4294901760
        %4323 = vmatpush1.msra.mxu0 %v4322
        %4324 = vmatprep.subr.mxu0 0.0
        %4325 = vmatpush2.msra.mxu0 0.0
        %4326 = vmatprep.subr.mxu0 0.0
        %4327 = vmatpush2.msra.mxu0 0.0
        %4328 = vmatprep.subr.mxu0 0.0
        %4329 = vmatpush2.msra.mxu0 0.0
        %4330 = vmatprep.subr.mxu0 0.0
        %4331 = vmatpush2.msra.mxu0 0.0
        %4332 = vmatprep.subr.mxu0 0.0
        %4333 = vmatpush2.msra.mxu0 0.0
        %4334 = vmatprep.subr.mxu0 0.0
        %4335 = vmatpush2.msra.mxu0 0.0
        %4336 = vmatprep.subr.mxu0 0.0
        %4337 = vmatpush2.msra.mxu0 0.0
        %4338 = vmatprep.subr.mxu0 0.0
        %4339 = vmatpush2.msra.mxu0 0.0
        %4340 = vmatprep.subr.mxu0 0.0
        %4341 = vmatpush2.msra.mxu0 0.0
        %4342 = vmatprep.subr.mxu0 0.0
        %4343 = vmatpush2.msra.mxu0 0.0
        %4344 = vmatprep.subr.mxu0 0.0
        %4345 = vmatpush2.msra.mxu0 0.0
        %4346 = vmatprep.subr.mxu0 0.0
        %4347 = vmatpush2.msra.mxu0 0.0
        %4348 = vmatprep.subr.mxu0 0.0
        %4349 = vmatpush2.msra.mxu0 0.0
        %4350 = vmatprep.subr.mxu0 0.0
        %4351 = vmatpush2.msra.mxu0 0.0
        %4352 = vmatprep.subr.mxu0 0.0
        %4353 = vmatpush2.msra.mxu0 0.0
        %4354 = vmatprep.subr.mxu0 0.0
        %4355 = vmatpush2.msra.mxu0 0.0
        %4356 = vmatprep.mubr.f32.mxu0 0.0
        %v4357 = vand.u32 %v3401, 4294901760
        %4358 = vmatmul.mubr.f32.gmra.mxu0 %v4357
        %v4359 = vpop.f32.mrf.mxu0
        %v4360 = vadd.f32 %v4275, %v4359
        %v4361 = vpop.f32.mrf.mxu0
        %4362 = vmatprep.mubr.f32.mxu0 0.0
        %v4363 = vand.u32 %v3404, 4294901760
        %4364 = vmatmul.mubr.f32.gmra.mxu0 %v4363
        %v4365 = vpop.f32.mrf.mxu0
        %v4366 = vadd.f32 %v4283, %v4365
        %v4367 = vpop.f32.mrf.mxu0
        %4368 = vdwg.mxu0
        %4369 = vmatprep.subr.mxu0 0.0
        %4370 = vmatpush1.msra.mxu0 0.0
        %4371 = vmatprep.subr.mxu0 0.0
        %4372 = vmatpush1.msra.mxu0 0.0
        %4373 = vmatprep.subr.mxu0 0.0
        %4374 = vmatpush1.msra.mxu0 0.0
        %4375 = vmatprep.subr.mxu0 0.0
        %4376 = vmatpush1.msra.mxu0 0.0
        %4377 = vmatprep.subr.mxu0 0.0
        %4378 = vmatpush1.msra.mxu0 0.0
        %4379 = vmatprep.subr.mxu0 0.0
        %4380 = vmatpush1.msra.mxu0 0.0
        %4381 = vmatprep.subr.mxu0 0.0
        %4382 = vmatpush1.msra.mxu0 0.0
        %4383 = vmatprep.subr.mxu0 0.0
        %4384 = vmatpush1.msra.mxu0 0.0
        %4385 = vmatprep.subr.mxu0 0.0
        %4386 = vmatpush1.msra.mxu0 0.0
        %4387 = vmatprep.subr.mxu0 0.0
        %4388 = vmatpush1.msra.mxu0 0.0
        %4389 = vmatprep.subr.mxu0 0.0
        %4390 = vmatpush1.msra.mxu0 0.0
        %4391 = vmatprep.subr.mxu0 0.0
        %4392 = vmatpush1.msra.mxu0 0.0
        %4393 = vmatprep.subr.mxu0 0.0
        %4394 = vmatpush1.msra.mxu0 0.0
        %4395 = vmatprep.subr.mxu0 0.0
        %4396 = vmatpush1.msra.mxu0 0.0
        %4397 = vmatprep.subr.mxu0 0.0
        %v4398 = vand.u32 %v3399, 4294901760
        %4399 = vmatpush1.msra.mxu0 %v4398
        %4400 = vmatprep.subr.mxu0 0.0
        %v4401 = vand.u32 %v3396, 4294901760
        %4402 = vmatpush1.msra.mxu0 %v4401
        %4403 = vmatprep.subr.mxu0 0.0
        %4404 = vmatpush2.msra.mxu0 0.0
        %4405 = vmatprep.subr.mxu0 0.0
        %4406 = vmatpush2.msra.mxu0 0.0
        %4407 = vmatprep.subr.mxu0 0.0
        %4408 = vmatpush2.msra.mxu0 0.0
        %4409 = vmatprep.subr.mxu0 0.0
        %4410 = vmatpush2.msra.mxu0 0.0
        %4411 = vmatprep.subr.mxu0 0.0
        %4412 = vmatpush2.msra.mxu0 0.0
        %4413 = vmatprep.subr.mxu0 0.0
        %4414 = vmatpush2.msra.mxu0 0.0
        %4415 = vmatprep.subr.mxu0 0.0
        %4416 = vmatpush2.msra.mxu0 0.0
        %4417 = vmatprep.subr.mxu0 0.0
        %4418 = vmatpush2.msra.mxu0 0.0
        %4419 = vmatprep.subr.mxu0 0.0
        %4420 = vmatpush2.msra.mxu0 0.0
        %4421 = vmatprep.subr.mxu0 0.0
        %4422 = vmatpush2.msra.mxu0 0.0
        %4423 = vmatprep.subr.mxu0 0.0
        %4424 = vmatpush2.msra.mxu0 0.0
        %4425 = vmatprep.subr.mxu0 0.0
        %4426 = vmatpush2.msra.mxu0 0.0
        %4427 = vmatprep.subr.mxu0 0.0
        %4428 = vmatpush2.msra.mxu0 0.0
        %4429 = vmatprep.subr.mxu0 0.0
        %4430 = vmatpush2.msra.mxu0 0.0
        %4431 = vmatprep.subr.mxu0 0.0
        %4432 = vmatpush2.msra.mxu0 0.0
        %4433 = vmatprep.subr.mxu0 0.0
        %4434 = vmatpush2.msra.mxu0 0.0
        %4435 = vmatprep.mubr.f32.mxu0 0.0
        %v4436 = vand.u32 %v3401, 4294901760
        %4437 = vmatmul.mubr.f32.gmra.mxu0 %v4436
        %v4438 = vpop.f32.mrf.mxu0
        %v4439 = vadd.f32 %v4360, %v4438
        %v4440 = vpop.f32.mrf.mxu0
        %4441 = vmatprep.mubr.f32.mxu0 0.0
        %v4442 = vand.u32 %v3404, 4294901760
        %4443 = vmatmul.mubr.f32.gmra.mxu0 %v4442
        %v4444 = vpop.f32.mrf.mxu0
        %v4445 = vadd.f32 %v4366, %v4444
        %v4446 = vpop.f32.mrf.mxu0
        %4447 = vdwg.mxu0
        %v4448 = vadd.f32 %v3384, %v3935
        %v4449 = vadd.f32 %v3385, %v3937
        %v4450 = vadd.f32 %v3386, %v4439
        %v4451 = vadd.f32 %v3387, %v3942
        %v4452 = vadd.f32 %v3388, %v3944
        %v4453 = vadd.f32 %v3389, %v4445
        %v4454 = vld [vmem:[%s2] sm:$0xff]
        %v4455 = vld [vmem:[%s2 + $0x8] sm:$0xff]
        %v4456 = vld [vmem:[%s2 + $0x10] sm:$0xff]
        %v4457 = vld [vmem:[%s2 + $0x18] sm:$0xff]
        %s4458 = scalar_lea.vmem %s2, 32
        %v4459 = vld [vmem:[%s4458] sm:$0xff]
        %v4460 = vld [vmem:[%s4458 + $0x8] sm:$0xff]
        %v4461 = vld [vmem:[%s4458 + $0x10] sm:$0xff]
        %v4462 = vld [vmem:[%s4458 + $0x18] sm:$0xff]
        %v4464 = vsel %vm229, %v4459, 0
        %v4467 = vsel %vm229, %v4460, 0
        %v4470 = vsel %vm229, %v4461, 0
        %v4473 = vsel %vm229, %v4462, 0
        %4475 = vmatprep.subr.mxu0 0.0
        %4476 = vmatpush1.msra.mxu0 0.0
        %4477 = vmatprep.subr.mxu0 0.0
        %4478 = vmatpush1.msra.mxu0 0.0
        %4479 = vmatprep.subr.mxu0 0.0
        %4480 = vmatpush1.msra.mxu0 0.0
        %4481 = vmatprep.subr.mxu0 0.0
        %4482 = vmatpush1.msra.mxu0 0.0
        %4483 = vmatprep.subr.mxu0 0.0
        %4484 = vmatpush1.msra.mxu0 0.0
        %4485 = vmatprep.subr.mxu0 0.0
        %4486 = vmatpush1.msra.mxu0 0.0
        %4487 = vmatprep.subr.mxu0 0.0
        %4488 = vmatpush1.msra.mxu0 0.0
        %4489 = vmatprep.subr.mxu0 0.0
        %4490 = vmatpush1.msra.mxu0 0.0
        %4491 = vmatprep.subr.mxu0 0.0
        %4492 = vmatpush1.msra.mxu0 0.0
        %4493 = vmatprep.subr.mxu0 0.0
        %4494 = vmatpush1.msra.mxu0 0.0
        %4495 = vmatprep.subr.mxu0 0.0
        %4496 = vmatpush1.msra.mxu0 0.0
        %4497 = vmatprep.subr.mxu0 0.0
        %4498 = vmatpush1.msra.mxu0 0.0
        %4499 = vmatprep.subr.mxu0 0.0
        %4500 = vmatpush1.msra.mxu0 0.0
        %4501 = vmatprep.subr.mxu0 0.0
        %4502 = vmatpush1.msra.mxu0 0.0
        %4503 = vmatprep.subr.mxu0 0.0
        %v4504 = vand.u32 %v4452, 4294901760
        %4505 = vmatpush1.msra.mxu0 %v4504
        %4506 = vmatprep.subr.mxu0 0.0
        %v4507 = vand.u32 %v4449, 4294901760
        %4508 = vmatpush1.msra.mxu0 %v4507
        %4509 = vmatprep.subr.mxu0 0.0
        %4510 = vmatpush2.msra.mxu0 0.0
        %4511 = vmatprep.subr.mxu0 0.0
        %4512 = vmatpush2.msra.mxu0 0.0
        %4513 = vmatprep.subr.mxu0 0.0
        %4514 = vmatpush2.msra.mxu0 0.0
        %4515 = vmatprep.subr.mxu0 0.0
        %4516 = vmatpush2.msra.mxu0 0.0
        %4517 = vmatprep.subr.mxu0 0.0
        %4518 = vmatpush2.msra.mxu0 0.0
        %4519 = vmatprep.subr.mxu0 0.0
        %4520 = vmatpush2.msra.mxu0 0.0
        %4521 = vmatprep.subr.mxu0 0.0
        %4522 = vmatpush2.msra.mxu0 0.0
        %4523 = vmatprep.subr.mxu0 0.0
        %4524 = vmatpush2.msra.mxu0 0.0
        %4525 = vmatprep.subr.mxu0 0.0
        %4526 = vmatpush2.msra.mxu0 0.0
        %4527 = vmatprep.subr.mxu0 0.0
        %4528 = vmatpush2.msra.mxu0 0.0
        %4529 = vmatprep.subr.mxu0 0.0
        %4530 = vmatpush2.msra.mxu0 0.0
        %4531 = vmatprep.subr.mxu0 0.0
        %4532 = vmatpush2.msra.mxu0 0.0
        %4533 = vmatprep.subr.mxu0 0.0
        %4534 = vmatpush2.msra.mxu0 0.0
        %4535 = vmatprep.subr.mxu0 0.0
        %4536 = vmatpush2.msra.mxu0 0.0
        %4537 = vmatprep.subr.mxu0 0.0
        %4538 = vmatpush2.msra.mxu0 0.0
        %4539 = vmatprep.subr.mxu0 0.0
        %4540 = vmatpush2.msra.mxu0 0.0
        %4541 = vmatprep.mubr.f32.mxu0 0.0
        %v4542 = vand.u32 %v4464, 4294901760
        %v4543 = vsub.f32 %v4464, %v4542
        %v4544 = vand.u32 %v4543, 4294901760
        %v4545 = vsub.f32 %v4543, %v4544
        %v4546 = vand.u32 %v4545, 4294901760
        %4547 = vmatmul.mubr.f32.gmra.mxu0 %v4546
        %v4548 = vpop.f32.mrf.mxu0
        %v4549 = vadd.f32 0.0, %v4548
        %v4550 = vpop.f32.mrf.mxu0
        %4551 = vmatprep.mubr.f32.mxu0 0.0
        %v4552 = vand.u32 %v4467, 4294901760
        %v4553 = vsub.f32 %v4467, %v4552
        %v4554 = vand.u32 %v4553, 4294901760
        %v4555 = vsub.f32 %v4553, %v4554
        %v4556 = vand.u32 %v4555, 4294901760
        %4557 = vmatmul.mubr.f32.gmra.mxu0 %v4556
        %v4558 = vpop.f32.mrf.mxu0
        %v4559 = vadd.f32 0.0, %v4558
        %v4560 = vpop.f32.mrf.mxu0
        %4561 = vmatprep.mubr.f32.mxu0 0.0
        %v4562 = vand.u32 %v4470, 4294901760
        %v4563 = vsub.f32 %v4470, %v4562
        %v4564 = vand.u32 %v4563, 4294901760
        %v4565 = vsub.f32 %v4563, %v4564
        %v4566 = vand.u32 %v4565, 4294901760
        %4567 = vmatmul.mubr.f32.gmra.mxu0 %v4566
        %v4568 = vpop.f32.mrf.mxu0
        %v4569 = vadd.f32 0.0, %v4568
        %v4570 = vpop.f32.mrf.mxu0
        %4571 = vmatprep.mubr.f32.mxu0 0.0
        %v4572 = vand.u32 %v4473, 4294901760
        %v4573 = vsub.f32 %v4473, %v4572
        %v4574 = vand.u32 %v4573, 4294901760
        %v4575 = vsub.f32 %v4573, %v4574
        %v4576 = vand.u32 %v4575, 4294901760
        %4577 = vmatmul.mubr.f32.gmra.mxu0 %v4576
        %v4578 = vpop.f32.mrf.mxu0
        %v4579 = vadd.f32 0.0, %v4578
        %v4580 = vpop.f32.mrf.mxu0
        %4581 = vdwg.mxu0
        %4582 = vmatprep.subr.mxu0 0.0
        %4583 = vmatpush1.msra.mxu0 0.0
        %4584 = vmatprep.subr.mxu0 0.0
        %4585 = vmatpush1.msra.mxu0 0.0
        %4586 = vmatprep.subr.mxu0 0.0
        %4587 = vmatpush1.msra.mxu0 0.0
        %4588 = vmatprep.subr.mxu0 0.0
        %4589 = vmatpush1.msra.mxu0 0.0
        %4590 = vmatprep.subr.mxu0 0.0
        %4591 = vmatpush1.msra.mxu0 0.0
        %4592 = vmatprep.subr.mxu0 0.0
        %4593 = vmatpush1.msra.mxu0 0.0
        %4594 = vmatprep.subr.mxu0 0.0
        %4595 = vmatpush1.msra.mxu0 0.0
        %4596 = vmatprep.subr.mxu0 0.0
        %4597 = vmatpush1.msra.mxu0 0.0
        %4598 = vmatprep.subr.mxu0 0.0
        %4599 = vmatpush1.msra.mxu0 0.0
        %4600 = vmatprep.subr.mxu0 0.0
        %4601 = vmatpush1.msra.mxu0 0.0
        %4602 = vmatprep.subr.mxu0 0.0
        %4603 = vmatpush1.msra.mxu0 0.0
        %4604 = vmatprep.subr.mxu0 0.0
        %4605 = vmatpush1.msra.mxu0 0.0
        %4606 = vmatprep.subr.mxu0 0.0
        %4607 = vmatpush1.msra.mxu0 0.0
        %4608 = vmatprep.subr.mxu0 0.0
        %4609 = vmatpush1.msra.mxu0 0.0
        %4610 = vmatprep.subr.mxu0 0.0
        %v4611 = vand.u32 %v4452, 4294901760
        %v4612 = vsub.f32 %v4452, %v4611
        %v4613 = vand.u32 %v4612, 4294901760
        %v4614 = vsub.f32 %v4612, %v4613
        %v4615 = vand.u32 %v4614, 4294901760
        %4616 = vmatpush1.msra.mxu0 %v4615
        %4617 = vmatprep.subr.mxu0 0.0
        %v4618 = vand.u32 %v4449, 4294901760
        %v4619 = vsub.f32 %v4449, %v4618
        %v4620 = vand.u32 %v4619, 4294901760
        %v4621 = vsub.f32 %v4619, %v4620
        %v4622 = vand.u32 %v4621, 4294901760
        %4623 = vmatpush1.msra.mxu0 %v4622
        %4624 = vmatprep.subr.mxu0 0.0
        %4625 = vmatpush2.msra.mxu0 0.0
        %4626 = vmatprep.subr.mxu0 0.0
        %4627 = vmatpush2.msra.mxu0 0.0
        %4628 = vmatprep.subr.mxu0 0.0
        %4629 = vmatpush2.msra.mxu0 0.0
        %4630 = vmatprep.subr.mxu0 0.0
        %4631 = vmatpush2.msra.mxu0 0.0
        %4632 = vmatprep.subr.mxu0 0.0
        %4633 = vmatpush2.msra.mxu0 0.0
        %4634 = vmatprep.subr.mxu0 0.0
        %4635 = vmatpush2.msra.mxu0 0.0
        %4636 = vmatprep.subr.mxu0 0.0
        %4637 = vmatpush2.msra.mxu0 0.0
        %4638 = vmatprep.subr.mxu0 0.0
        %4639 = vmatpush2.msra.mxu0 0.0
        %4640 = vmatprep.subr.mxu0 0.0
        %4641 = vmatpush2.msra.mxu0 0.0
        %4642 = vmatprep.subr.mxu0 0.0
        %4643 = vmatpush2.msra.mxu0 0.0
        %4644 = vmatprep.subr.mxu0 0.0
        %4645 = vmatpush2.msra.mxu0 0.0
        %4646 = vmatprep.subr.mxu0 0.0
        %4647 = vmatpush2.msra.mxu0 0.0
        %4648 = vmatprep.subr.mxu0 0.0
        %4649 = vmatpush2.msra.mxu0 0.0
        %4650 = vmatprep.subr.mxu0 0.0
        %4651 = vmatpush2.msra.mxu0 0.0
        %4652 = vmatprep.subr.mxu0 0.0
        %4653 = vmatpush2.msra.mxu0 0.0
        %4654 = vmatprep.subr.mxu0 0.0
        %4655 = vmatpush2.msra.mxu0 0.0
        %4656 = vmatprep.mubr.f32.mxu0 0.0
        %v4657 = vand.u32 %v4464, 4294901760
        %4658 = vmatmul.mubr.f32.gmra.mxu0 %v4657
        %v4659 = vpop.f32.mrf.mxu0
        %v4660 = vadd.f32 %v4549, %v4659
        %v4661 = vpop.f32.mrf.mxu0
        %4662 = vmatprep.mubr.f32.mxu0 0.0
        %v4663 = vand.u32 %v4467, 4294901760
        %4664 = vmatmul.mubr.f32.gmra.mxu0 %v4663
        %v4665 = vpop.f32.mrf.mxu0
        %v4666 = vadd.f32 %v4559, %v4665
        %v4667 = vpop.f32.mrf.mxu0
        %4668 = vmatprep.mubr.f32.mxu0 0.0
        %v4669 = vand.u32 %v4470, 4294901760
        %4670 = vmatmul.mubr.f32.gmra.mxu0 %v4669
        %v4671 = vpop.f32.mrf.mxu0
        %v4672 = vadd.f32 %v4569, %v4671
        %v4673 = vpop.f32.mrf.mxu0
        %4674 = vmatprep.mubr.f32.mxu0 0.0
        %v4675 = vand.u32 %v4473, 4294901760
        %4676 = vmatmul.mubr.f32.gmra.mxu0 %v4675
        %v4677 = vpop.f32.mrf.mxu0
        %v4678 = vadd.f32 %v4579, %v4677
        %v4679 = vpop.f32.mrf.mxu0
        %4680 = vdwg.mxu0
        %4681 = vmatprep.subr.mxu0 0.0
        %4682 = vmatpush1.msra.mxu0 0.0
        %4683 = vmatprep.subr.mxu0 0.0
        %4684 = vmatpush1.msra.mxu0 0.0
        %4685 = vmatprep.subr.mxu0 0.0
        %4686 = vmatpush1.msra.mxu0 0.0
        %4687 = vmatprep.subr.mxu0 0.0
        %4688 = vmatpush1.msra.mxu0 0.0
        %4689 = vmatprep.subr.mxu0 0.0
        %4690 = vmatpush1.msra.mxu0 0.0
        %4691 = vmatprep.subr.mxu0 0.0
        %4692 = vmatpush1.msra.mxu0 0.0
        %4693 = vmatprep.subr.mxu0 0.0
        %4694 = vmatpush1.msra.mxu0 0.0
        %4695 = vmatprep.subr.mxu0 0.0
        %4696 = vmatpush1.msra.mxu0 0.0
        %4697 = vmatprep.subr.mxu0 0.0
        %4698 = vmatpush1.msra.mxu0 0.0
        %4699 = vmatprep.subr.mxu0 0.0
        %4700 = vmatpush1.msra.mxu0 0.0
        %4701 = vmatprep.subr.mxu0 0.0
        %4702 = vmatpush1.msra.mxu0 0.0
        %4703 = vmatprep.subr.mxu0 0.0
        %4704 = vmatpush1.msra.mxu0 0.0
        %4705 = vmatprep.subr.mxu0 0.0
        %4706 = vmatpush1.msra.mxu0 0.0
        %4707 = vmatprep.subr.mxu0 0.0
        %4708 = vmatpush1.msra.mxu0 0.0
        %4709 = vmatprep.subr.mxu0 0.0
        %v4710 = vand.u32 %v4452, 4294901760
        %v4711 = vsub.f32 %v4452, %v4710
        %4712 = vmatpush1.msra.mxu0 %v4711
        %4713 = vmatprep.subr.mxu0 0.0
        %v4714 = vand.u32 %v4449, 4294901760
        %v4715 = vsub.f32 %v4449, %v4714
        %4716 = vmatpush1.msra.mxu0 %v4715
        %4717 = vmatprep.subr.mxu0 0.0
        %4718 = vmatpush2.msra.mxu0 0.0
        %4719 = vmatprep.subr.mxu0 0.0
        %4720 = vmatpush2.msra.mxu0 0.0
        %4721 = vmatprep.subr.mxu0 0.0
        %4722 = vmatpush2.msra.mxu0 0.0
        %4723 = vmatprep.subr.mxu0 0.0
        %4724 = vmatpush2.msra.mxu0 0.0
        %4725 = vmatprep.subr.mxu0 0.0
        %4726 = vmatpush2.msra.mxu0 0.0
        %4727 = vmatprep.subr.mxu0 0.0
        %4728 = vmatpush2.msra.mxu0 0.0
        %4729 = vmatprep.subr.mxu0 0.0
        %4730 = vmatpush2.msra.mxu0 0.0
        %4731 = vmatprep.subr.mxu0 0.0
        %4732 = vmatpush2.msra.mxu0 0.0
        %4733 = vmatprep.subr.mxu0 0.0
        %4734 = vmatpush2.msra.mxu0 0.0
        %4735 = vmatprep.subr.mxu0 0.0
        %4736 = vmatpush2.msra.mxu0 0.0
        %4737 = vmatprep.subr.mxu0 0.0
        %4738 = vmatpush2.msra.mxu0 0.0
        %4739 = vmatprep.subr.mxu0 0.0
        %4740 = vmatpush2.msra.mxu0 0.0
        %4741 = vmatprep.subr.mxu0 0.0
        %4742 = vmatpush2.msra.mxu0 0.0
        %4743 = vmatprep.subr.mxu0 0.0
        %4744 = vmatpush2.msra.mxu0 0.0
        %4745 = vmatprep.subr.mxu0 0.0
        %4746 = vmatpush2.msra.mxu0 0.0
        %4747 = vmatprep.subr.mxu0 0.0
        %4748 = vmatpush2.msra.mxu0 0.0
        %4749 = vmatprep.mubr.f32.mxu0 0.0
        %v4750 = vand.u32 %v4464, 4294901760
        %v4751 = vsub.f32 %v4464, %v4750
        %4752 = vmatmul.mubr.f32.gmra.mxu0 %v4751
        %v4753 = vpop.f32.mrf.mxu0
        %v4754 = vadd.f32 %v4660, %v4753
        %v4755 = vpop.f32.mrf.mxu0
        %4756 = vmatprep.mubr.f32.mxu0 0.0
        %v4757 = vand.u32 %v4467, 4294901760
        %v4758 = vsub.f32 %v4467, %v4757
        %4759 = vmatmul.mubr.f32.gmra.mxu0 %v4758
        %v4760 = vpop.f32.mrf.mxu0
        %v4761 = vadd.f32 %v4666, %v4760
        %v4762 = vpop.f32.mrf.mxu0
        %4763 = vmatprep.mubr.f32.mxu0 0.0
        %v4764 = vand.u32 %v4470, 4294901760
        %v4765 = vsub.f32 %v4470, %v4764
        %4766 = vmatmul.mubr.f32.gmra.mxu0 %v4765
        %v4767 = vpop.f32.mrf.mxu0
        %v4768 = vadd.f32 %v4672, %v4767
        %v4769 = vpop.f32.mrf.mxu0
        %4770 = vmatprep.mubr.f32.mxu0 0.0
        %v4771 = vand.u32 %v4473, 4294901760
        %v4772 = vsub.f32 %v4473, %v4771
        %4773 = vmatmul.mubr.f32.gmra.mxu0 %v4772
        %v4774 = vpop.f32.mrf.mxu0
        %v4775 = vadd.f32 %v4678, %v4774
        %v4776 = vpop.f32.mrf.mxu0
        %4777 = vdwg.mxu0
        %4778 = vmatprep.subr.mxu0 0.0
        %4779 = vmatpush1.msra.mxu0 0.0
        %4780 = vmatprep.subr.mxu0 0.0
        %4781 = vmatpush1.msra.mxu0 0.0
        %4782 = vmatprep.subr.mxu0 0.0
        %4783 = vmatpush1.msra.mxu0 0.0
        %4784 = vmatprep.subr.mxu0 0.0
        %4785 = vmatpush1.msra.mxu0 0.0
        %4786 = vmatprep.subr.mxu0 0.0
        %4787 = vmatpush1.msra.mxu0 0.0
        %4788 = vmatprep.subr.mxu0 0.0
        %4789 = vmatpush1.msra.mxu0 0.0
        %4790 = vmatprep.subr.mxu0 0.0
        %4791 = vmatpush1.msra.mxu0 0.0
        %4792 = vmatprep.subr.mxu0 0.0
        %4793 = vmatpush1.msra.mxu0 0.0
        %4794 = vmatprep.subr.mxu0 0.0
        %4795 = vmatpush1.msra.mxu0 0.0
        %4796 = vmatprep.subr.mxu0 0.0
        %4797 = vmatpush1.msra.mxu0 0.0
        %4798 = vmatprep.subr.mxu0 0.0
        %4799 = vmatpush1.msra.mxu0 0.0
        %4800 = vmatprep.subr.mxu0 0.0
        %4801 = vmatpush1.msra.mxu0 0.0
        %4802 = vmatprep.subr.mxu0 0.0
        %4803 = vmatpush1.msra.mxu0 0.0
        %4804 = vmatprep.subr.mxu0 0.0
        %4805 = vmatpush1.msra.mxu0 0.0
        %4806 = vmatprep.subr.mxu0 0.0
        %v4807 = vand.u32 %v4452, 4294901760
        %4808 = vmatpush1.msra.mxu0 %v4807
        %4809 = vmatprep.subr.mxu0 0.0
        %v4810 = vand.u32 %v4449, 4294901760
        %4811 = vmatpush1.msra.mxu0 %v4810
        %4812 = vmatprep.subr.mxu0 0.0
        %4813 = vmatpush2.msra.mxu0 0.0
        %4814 = vmatprep.subr.mxu0 0.0
        %4815 = vmatpush2.msra.mxu0 0.0
        %4816 = vmatprep.subr.mxu0 0.0
        %4817 = vmatpush2.msra.mxu0 0.0
        %4818 = vmatprep.subr.mxu0 0.0
        %4819 = vmatpush2.msra.mxu0 0.0
        %4820 = vmatprep.subr.mxu0 0.0
        %4821 = vmatpush2.msra.mxu0 0.0
        %4822 = vmatprep.subr.mxu0 0.0
        %4823 = vmatpush2.msra.mxu0 0.0
        %4824 = vmatprep.subr.mxu0 0.0
        %4825 = vmatpush2.msra.mxu0 0.0
        %4826 = vmatprep.subr.mxu0 0.0
        %4827 = vmatpush2.msra.mxu0 0.0
        %4828 = vmatprep.subr.mxu0 0.0
        %4829 = vmatpush2.msra.mxu0 0.0
        %4830 = vmatprep.subr.mxu0 0.0
        %4831 = vmatpush2.msra.mxu0 0.0
        %4832 = vmatprep.subr.mxu0 0.0
        %4833 = vmatpush2.msra.mxu0 0.0
        %4834 = vmatprep.subr.mxu0 0.0
        %4835 = vmatpush2.msra.mxu0 0.0
        %4836 = vmatprep.subr.mxu0 0.0
        %4837 = vmatpush2.msra.mxu0 0.0
        %4838 = vmatprep.subr.mxu0 0.0
        %4839 = vmatpush2.msra.mxu0 0.0
        %4840 = vmatprep.subr.mxu0 0.0
        %4841 = vmatpush2.msra.mxu0 0.0
        %4842 = vmatprep.subr.mxu0 0.0
        %4843 = vmatpush2.msra.mxu0 0.0
        %4844 = vmatprep.mubr.f32.mxu0 0.0
        %v4845 = vand.u32 %v4464, 4294901760
        %v4846 = vsub.f32 %v4464, %v4845
        %v4847 = vand.u32 %v4846, 4294901760
        %4848 = vmatmul.mubr.f32.gmra.mxu0 %v4847
        %v4849 = vpop.f32.mrf.mxu0
        %v4850 = vadd.f32 %v4754, %v4849
        %v4851 = vpop.f32.mrf.mxu0
        %4852 = vmatprep.mubr.f32.mxu0 0.0
        %v4853 = vand.u32 %v4467, 4294901760
        %v4854 = vsub.f32 %v4467, %v4853
        %v4855 = vand.u32 %v4854, 4294901760
        %4856 = vmatmul.mubr.f32.gmra.mxu0 %v4855
        %v4857 = vpop.f32.mrf.mxu0
        %v4858 = vadd.f32 %v4761, %v4857
        %v4859 = vpop.f32.mrf.mxu0
        %4860 = vmatprep.mubr.f32.mxu0 0.0
        %v4861 = vand.u32 %v4470, 4294901760
        %v4862 = vsub.f32 %v4470, %v4861
        %v4863 = vand.u32 %v4862, 4294901760
        %4864 = vmatmul.mubr.f32.gmra.mxu0 %v4863
        %v4865 = vpop.f32.mrf.mxu0
        %v4866 = vadd.f32 %v4768, %v4865
        %v4867 = vpop.f32.mrf.mxu0
        %4868 = vmatprep.mubr.f32.mxu0 0.0
        %v4869 = vand.u32 %v4473, 4294901760
        %v4870 = vsub.f32 %v4473, %v4869
        %v4871 = vand.u32 %v4870, 4294901760
        %4872 = vmatmul.mubr.f32.gmra.mxu0 %v4871
        %v4873 = vpop.f32.mrf.mxu0
        %v4874 = vadd.f32 %v4775, %v4873
        %v4875 = vpop.f32.mrf.mxu0
        %4876 = vdwg.mxu0
        %4877 = vmatprep.subr.mxu0 0.0
        %4878 = vmatpush1.msra.mxu0 0.0
        %4879 = vmatprep.subr.mxu0 0.0
        %4880 = vmatpush1.msra.mxu0 0.0
        %4881 = vmatprep.subr.mxu0 0.0
        %4882 = vmatpush1.msra.mxu0 0.0
        %4883 = vmatprep.subr.mxu0 0.0
        %4884 = vmatpush1.msra.mxu0 0.0
        %4885 = vmatprep.subr.mxu0 0.0
        %4886 = vmatpush1.msra.mxu0 0.0
        %4887 = vmatprep.subr.mxu0 0.0
        %4888 = vmatpush1.msra.mxu0 0.0
        %4889 = vmatprep.subr.mxu0 0.0
        %4890 = vmatpush1.msra.mxu0 0.0
        %4891 = vmatprep.subr.mxu0 0.0
        %4892 = vmatpush1.msra.mxu0 0.0
        %4893 = vmatprep.subr.mxu0 0.0
        %4894 = vmatpush1.msra.mxu0 0.0
        %4895 = vmatprep.subr.mxu0 0.0
        %4896 = vmatpush1.msra.mxu0 0.0
        %4897 = vmatprep.subr.mxu0 0.0
        %4898 = vmatpush1.msra.mxu0 0.0
        %4899 = vmatprep.subr.mxu0 0.0
        %4900 = vmatpush1.msra.mxu0 0.0
        %4901 = vmatprep.subr.mxu0 0.0
        %4902 = vmatpush1.msra.mxu0 0.0
        %4903 = vmatprep.subr.mxu0 0.0
        %4904 = vmatpush1.msra.mxu0 0.0
        %4905 = vmatprep.subr.mxu0 0.0
        %v4906 = vand.u32 %v4452, 4294901760
        %v4907 = vsub.f32 %v4452, %v4906
        %v4908 = vand.u32 %v4907, 4294901760
        %4909 = vmatpush1.msra.mxu0 %v4908
        %4910 = vmatprep.subr.mxu0 0.0
        %v4911 = vand.u32 %v4449, 4294901760
        %v4912 = vsub.f32 %v4449, %v4911
        %v4913 = vand.u32 %v4912, 4294901760
        %4914 = vmatpush1.msra.mxu0 %v4913
        %4915 = vmatprep.subr.mxu0 0.0
        %4916 = vmatpush2.msra.mxu0 0.0
        %4917 = vmatprep.subr.mxu0 0.0
        %4918 = vmatpush2.msra.mxu0 0.0
        %4919 = vmatprep.subr.mxu0 0.0
        %4920 = vmatpush2.msra.mxu0 0.0
        %4921 = vmatprep.subr.mxu0 0.0
        %4922 = vmatpush2.msra.mxu0 0.0
        %4923 = vmatprep.subr.mxu0 0.0
        %4924 = vmatpush2.msra.mxu0 0.0
        %4925 = vmatprep.subr.mxu0 0.0
        %4926 = vmatpush2.msra.mxu0 0.0
        %4927 = vmatprep.subr.mxu0 0.0
        %4928 = vmatpush2.msra.mxu0 0.0
        %4929 = vmatprep.subr.mxu0 0.0
        %4930 = vmatpush2.msra.mxu0 0.0
        %4931 = vmatprep.subr.mxu0 0.0
        %4932 = vmatpush2.msra.mxu0 0.0
        %4933 = vmatprep.subr.mxu0 0.0
        %4934 = vmatpush2.msra.mxu0 0.0
        %4935 = vmatprep.subr.mxu0 0.0
        %4936 = vmatpush2.msra.mxu0 0.0
        %4937 = vmatprep.subr.mxu0 0.0
        %4938 = vmatpush2.msra.mxu0 0.0
        %4939 = vmatprep.subr.mxu0 0.0
        %4940 = vmatpush2.msra.mxu0 0.0
        %4941 = vmatprep.subr.mxu0 0.0
        %4942 = vmatpush2.msra.mxu0 0.0
        %4943 = vmatprep.subr.mxu0 0.0
        %4944 = vmatpush2.msra.mxu0 0.0
        %4945 = vmatprep.subr.mxu0 0.0
        %4946 = vmatpush2.msra.mxu0 0.0
        %4947 = vmatprep.mubr.f32.mxu0 0.0
        %v4948 = vand.u32 %v4464, 4294901760
        %4949 = vmatmul.mubr.f32.gmra.mxu0 %v4948
        %v4950 = vpop.f32.mrf.mxu0
        %v4951 = vadd.f32 %v4850, %v4950
        %v4952 = vpop.f32.mrf.mxu0
        %4953 = vmatprep.mubr.f32.mxu0 0.0
        %v4954 = vand.u32 %v4467, 4294901760
        %4955 = vmatmul.mubr.f32.gmra.mxu0 %v4954
        %v4956 = vpop.f32.mrf.mxu0
        %v4957 = vadd.f32 %v4858, %v4956
        %v4958 = vpop.f32.mrf.mxu0
        %4959 = vmatprep.mubr.f32.mxu0 0.0
        %v4960 = vand.u32 %v4470, 4294901760
        %4961 = vmatmul.mubr.f32.gmra.mxu0 %v4960
        %v4962 = vpop.f32.mrf.mxu0
        %v4963 = vadd.f32 %v4866, %v4962
        %v4964 = vpop.f32.mrf.mxu0
        %4965 = vmatprep.mubr.f32.mxu0 0.0
        %v4966 = vand.u32 %v4473, 4294901760
        %4967 = vmatmul.mubr.f32.gmra.mxu0 %v4966
        %v4968 = vpop.f32.mrf.mxu0
        %v4969 = vadd.f32 %v4874, %v4968
        %v4970 = vpop.f32.mrf.mxu0
        %4971 = vdwg.mxu0
        %4972 = vmatprep.subr.mxu0 0.0
        %4973 = vmatpush1.msra.mxu0 0.0
        %4974 = vmatprep.subr.mxu0 0.0
        %4975 = vmatpush1.msra.mxu0 0.0
        %4976 = vmatprep.subr.mxu0 0.0
        %4977 = vmatpush1.msra.mxu0 0.0
        %4978 = vmatprep.subr.mxu0 0.0
        %4979 = vmatpush1.msra.mxu0 0.0
        %4980 = vmatprep.subr.mxu0 0.0
        %4981 = vmatpush1.msra.mxu0 0.0
        %4982 = vmatprep.subr.mxu0 0.0
        %4983 = vmatpush1.msra.mxu0 0.0
        %4984 = vmatprep.subr.mxu0 0.0
        %4985 = vmatpush1.msra.mxu0 0.0
        %4986 = vmatprep.subr.mxu0 0.0
        %4987 = vmatpush1.msra.mxu0 0.0
        %4988 = vmatprep.subr.mxu0 0.0
        %4989 = vmatpush1.msra.mxu0 0.0
        %4990 = vmatprep.subr.mxu0 0.0
        %4991 = vmatpush1.msra.mxu0 0.0
        %4992 = vmatprep.subr.mxu0 0.0
        %4993 = vmatpush1.msra.mxu0 0.0
        %4994 = vmatprep.subr.mxu0 0.0
        %4995 = vmatpush1.msra.mxu0 0.0
        %4996 = vmatprep.subr.mxu0 0.0
        %4997 = vmatpush1.msra.mxu0 0.0
        %4998 = vmatprep.subr.mxu0 0.0
        %4999 = vmatpush1.msra.mxu0 0.0
        %5000 = vmatprep.subr.mxu0 0.0
        %v5001 = vand.u32 %v4452, 4294901760
        %5002 = vmatpush1.msra.mxu0 %v5001
        %5003 = vmatprep.subr.mxu0 0.0
        %v5004 = vand.u32 %v4449, 4294901760
        %5005 = vmatpush1.msra.mxu0 %v5004
        %5006 = vmatprep.subr.mxu0 0.0
        %5007 = vmatpush2.msra.mxu0 0.0
        %5008 = vmatprep.subr.mxu0 0.0
        %5009 = vmatpush2.msra.mxu0 0.0
        %5010 = vmatprep.subr.mxu0 0.0
        %5011 = vmatpush2.msra.mxu0 0.0
        %5012 = vmatprep.subr.mxu0 0.0
        %5013 = vmatpush2.msra.mxu0 0.0
        %5014 = vmatprep.subr.mxu0 0.0
        %5015 = vmatpush2.msra.mxu0 0.0
        %5016 = vmatprep.subr.mxu0 0.0
        %5017 = vmatpush2.msra.mxu0 0.0
        %5018 = vmatprep.subr.mxu0 0.0
        %5019 = vmatpush2.msra.mxu0 0.0
        %5020 = vmatprep.subr.mxu0 0.0
        %5021 = vmatpush2.msra.mxu0 0.0
        %5022 = vmatprep.subr.mxu0 0.0
        %5023 = vmatpush2.msra.mxu0 0.0
        %5024 = vmatprep.subr.mxu0 0.0
        %5025 = vmatpush2.msra.mxu0 0.0
        %5026 = vmatprep.subr.mxu0 0.0
        %5027 = vmatpush2.msra.mxu0 0.0
        %5028 = vmatprep.subr.mxu0 0.0
        %5029 = vmatpush2.msra.mxu0 0.0
        %5030 = vmatprep.subr.mxu0 0.0
        %5031 = vmatpush2.msra.mxu0 0.0
        %5032 = vmatprep.subr.mxu0 0.0
        %5033 = vmatpush2.msra.mxu0 0.0
        %5034 = vmatprep.subr.mxu0 0.0
        %5035 = vmatpush2.msra.mxu0 0.0
        %5036 = vmatprep.subr.mxu0 0.0
        %5037 = vmatpush2.msra.mxu0 0.0
        %5038 = vmatprep.mubr.f32.mxu0 0.0
        %v5039 = vand.u32 %v4464, 4294901760
        %5040 = vmatmul.mubr.f32.gmra.mxu0 %v5039
        %v5041 = vpop.f32.mrf.mxu0
        %v5042 = vadd.f32 %v4951, %v5041
        %v5043 = vpop.f32.mrf.mxu0
        %5044 = vmatprep.mubr.f32.mxu0 0.0
        %v5045 = vand.u32 %v4467, 4294901760
        %5046 = vmatmul.mubr.f32.gmra.mxu0 %v5045
        %v5047 = vpop.f32.mrf.mxu0
        %v5048 = vadd.f32 %v4957, %v5047
        %v5049 = vpop.f32.mrf.mxu0
        %5050 = vmatprep.mubr.f32.mxu0 0.0
        %v5051 = vand.u32 %v4470, 4294901760
        %5052 = vmatmul.mubr.f32.gmra.mxu0 %v5051
        %v5053 = vpop.f32.mrf.mxu0
        %v5054 = vadd.f32 %v4963, %v5053
        %v5055 = vpop.f32.mrf.mxu0
        %5056 = vmatprep.mubr.f32.mxu0 0.0
        %v5057 = vand.u32 %v4473, 4294901760
        %5058 = vmatmul.mubr.f32.gmra.mxu0 %v5057
        %v5059 = vpop.f32.mrf.mxu0
        %v5060 = vadd.f32 %v4969, %v5059
        %v5061 = vpop.f32.mrf.mxu0
        %5062 = vdwg.mxu0
        %v5064 = vsel %vm229, %v4454, 0
        %v5067 = vsel %vm229, %v4455, 0
        %v5070 = vsel %vm229, %v4456, 0
        %v5073 = vsel %vm229, %v4457, 0
        %5075 = vmatprep.subr.mxu0 0.0
        %5076 = vmatpush1.msra.mxu0 0.0
        %5077 = vmatprep.subr.mxu0 0.0
        %5078 = vmatpush1.msra.mxu0 0.0
        %5079 = vmatprep.subr.mxu0 0.0
        %5080 = vmatpush1.msra.mxu0 0.0
        %5081 = vmatprep.subr.mxu0 0.0
        %5082 = vmatpush1.msra.mxu0 0.0
        %5083 = vmatprep.subr.mxu0 0.0
        %5084 = vmatpush1.msra.mxu0 0.0
        %5085 = vmatprep.subr.mxu0 0.0
        %5086 = vmatpush1.msra.mxu0 0.0
        %5087 = vmatprep.subr.mxu0 0.0
        %5088 = vmatpush1.msra.mxu0 0.0
        %5089 = vmatprep.subr.mxu0 0.0
        %5090 = vmatpush1.msra.mxu0 0.0
        %5091 = vmatprep.subr.mxu0 0.0
        %5092 = vmatpush1.msra.mxu0 0.0
        %5093 = vmatprep.subr.mxu0 0.0
        %5094 = vmatpush1.msra.mxu0 0.0
        %5095 = vmatprep.subr.mxu0 0.0
        %5096 = vmatpush1.msra.mxu0 0.0
        %5097 = vmatprep.subr.mxu0 0.0
        %5098 = vmatpush1.msra.mxu0 0.0
        %5099 = vmatprep.subr.mxu0 0.0
        %5100 = vmatpush1.msra.mxu0 0.0
        %5101 = vmatprep.subr.mxu0 0.0
        %5102 = vmatpush1.msra.mxu0 0.0
        %5103 = vmatprep.subr.mxu0 0.0
        %v5104 = vand.u32 %v4451, 4294901760
        %5105 = vmatpush1.msra.mxu0 %v5104
        %5106 = vmatprep.subr.mxu0 0.0
        %v5107 = vand.u32 %v4448, 4294901760
        %5108 = vmatpush1.msra.mxu0 %v5107
        %5109 = vmatprep.subr.mxu0 0.0
        %5110 = vmatpush2.msra.mxu0 0.0
        %5111 = vmatprep.subr.mxu0 0.0
        %5112 = vmatpush2.msra.mxu0 0.0
        %5113 = vmatprep.subr.mxu0 0.0
        %5114 = vmatpush2.msra.mxu0 0.0
        %5115 = vmatprep.subr.mxu0 0.0
        %5116 = vmatpush2.msra.mxu0 0.0
        %5117 = vmatprep.subr.mxu0 0.0
        %5118 = vmatpush2.msra.mxu0 0.0
        %5119 = vmatprep.subr.mxu0 0.0
        %5120 = vmatpush2.msra.mxu0 0.0
        %5121 = vmatprep.subr.mxu0 0.0
        %5122 = vmatpush2.msra.mxu0 0.0
        %5123 = vmatprep.subr.mxu0 0.0
        %5124 = vmatpush2.msra.mxu0 0.0
        %5125 = vmatprep.subr.mxu0 0.0
        %5126 = vmatpush2.msra.mxu0 0.0
        %5127 = vmatprep.subr.mxu0 0.0
        %5128 = vmatpush2.msra.mxu0 0.0
        %5129 = vmatprep.subr.mxu0 0.0
        %5130 = vmatpush2.msra.mxu0 0.0
        %5131 = vmatprep.subr.mxu0 0.0
        %5132 = vmatpush2.msra.mxu0 0.0
        %5133 = vmatprep.subr.mxu0 0.0
        %5134 = vmatpush2.msra.mxu0 0.0
        %5135 = vmatprep.subr.mxu0 0.0
        %5136 = vmatpush2.msra.mxu0 0.0
        %5137 = vmatprep.subr.mxu0 0.0
        %5138 = vmatpush2.msra.mxu0 0.0
        %5139 = vmatprep.subr.mxu0 0.0
        %5140 = vmatpush2.msra.mxu0 0.0
        %5141 = vmatprep.mubr.f32.mxu0 0.0
        %v5142 = vand.u32 %v5064, 4294901760
        %v5143 = vsub.f32 %v5064, %v5142
        %v5144 = vand.u32 %v5143, 4294901760
        %v5145 = vsub.f32 %v5143, %v5144
        %v5146 = vand.u32 %v5145, 4294901760
        %5147 = vmatmul.mubr.f32.gmra.mxu0 %v5146
        %v5148 = vpop.f32.mrf.mxu0
        %v5149 = vadd.f32 %v5042, %v5148
        %v5150 = vpop.f32.mrf.mxu0
        %5151 = vmatprep.mubr.f32.mxu0 0.0
        %v5152 = vand.u32 %v5067, 4294901760
        %v5153 = vsub.f32 %v5067, %v5152
        %v5154 = vand.u32 %v5153, 4294901760
        %v5155 = vsub.f32 %v5153, %v5154
        %v5156 = vand.u32 %v5155, 4294901760
        %5157 = vmatmul.mubr.f32.gmra.mxu0 %v5156
        %v5158 = vpop.f32.mrf.mxu0
        %v5159 = vadd.f32 %v5048, %v5158
        %v5160 = vpop.f32.mrf.mxu0
        %5161 = vmatprep.mubr.f32.mxu0 0.0
        %v5162 = vand.u32 %v5070, 4294901760
        %v5163 = vsub.f32 %v5070, %v5162
        %v5164 = vand.u32 %v5163, 4294901760
        %v5165 = vsub.f32 %v5163, %v5164
        %v5166 = vand.u32 %v5165, 4294901760
        %5167 = vmatmul.mubr.f32.gmra.mxu0 %v5166
        %v5168 = vpop.f32.mrf.mxu0
        %v5169 = vadd.f32 %v5054, %v5168
        %v5170 = vpop.f32.mrf.mxu0
        %5171 = vmatprep.mubr.f32.mxu0 0.0
        %v5172 = vand.u32 %v5073, 4294901760
        %v5173 = vsub.f32 %v5073, %v5172
        %v5174 = vand.u32 %v5173, 4294901760
        %v5175 = vsub.f32 %v5173, %v5174
        %v5176 = vand.u32 %v5175, 4294901760
        %5177 = vmatmul.mubr.f32.gmra.mxu0 %v5176
        %v5178 = vpop.f32.mrf.mxu0
        %v5179 = vadd.f32 %v5060, %v5178
        %v5180 = vpop.f32.mrf.mxu0
        %5181 = vdwg.mxu0
        %5182 = vmatprep.subr.mxu0 0.0
        %5183 = vmatpush1.msra.mxu0 0.0
        %5184 = vmatprep.subr.mxu0 0.0
        %5185 = vmatpush1.msra.mxu0 0.0
        %5186 = vmatprep.subr.mxu0 0.0
        %5187 = vmatpush1.msra.mxu0 0.0
        %5188 = vmatprep.subr.mxu0 0.0
        %5189 = vmatpush1.msra.mxu0 0.0
        %5190 = vmatprep.subr.mxu0 0.0
        %5191 = vmatpush1.msra.mxu0 0.0
        %5192 = vmatprep.subr.mxu0 0.0
        %5193 = vmatpush1.msra.mxu0 0.0
        %5194 = vmatprep.subr.mxu0 0.0
        %5195 = vmatpush1.msra.mxu0 0.0
        %5196 = vmatprep.subr.mxu0 0.0
        %5197 = vmatpush1.msra.mxu0 0.0
        %5198 = vmatprep.subr.mxu0 0.0
        %5199 = vmatpush1.msra.mxu0 0.0
        %5200 = vmatprep.subr.mxu0 0.0
        %5201 = vmatpush1.msra.mxu0 0.0
        %5202 = vmatprep.subr.mxu0 0.0
        %5203 = vmatpush1.msra.mxu0 0.0
        %5204 = vmatprep.subr.mxu0 0.0
        %5205 = vmatpush1.msra.mxu0 0.0
        %5206 = vmatprep.subr.mxu0 0.0
        %5207 = vmatpush1.msra.mxu0 0.0
        %5208 = vmatprep.subr.mxu0 0.0
        %5209 = vmatpush1.msra.mxu0 0.0
        %5210 = vmatprep.subr.mxu0 0.0
        %v5211 = vand.u32 %v4451, 4294901760
        %v5212 = vsub.f32 %v4451, %v5211
        %v5213 = vand.u32 %v5212, 4294901760
        %v5214 = vsub.f32 %v5212, %v5213
        %v5215 = vand.u32 %v5214, 4294901760
        %5216 = vmatpush1.msra.mxu0 %v5215
        %5217 = vmatprep.subr.mxu0 0.0
        %v5218 = vand.u32 %v4448, 4294901760
        %v5219 = vsub.f32 %v4448, %v5218
        %v5220 = vand.u32 %v5219, 4294901760
        %v5221 = vsub.f32 %v5219, %v5220
        %v5222 = vand.u32 %v5221, 4294901760
        %5223 = vmatpush1.msra.mxu0 %v5222
        %5224 = vmatprep.subr.mxu0 0.0
        %5225 = vmatpush2.msra.mxu0 0.0
        %5226 = vmatprep.subr.mxu0 0.0
        %5227 = vmatpush2.msra.mxu0 0.0
        %5228 = vmatprep.subr.mxu0 0.0
        %5229 = vmatpush2.msra.mxu0 0.0
        %5230 = vmatprep.subr.mxu0 0.0
        %5231 = vmatpush2.msra.mxu0 0.0
        %5232 = vmatprep.subr.mxu0 0.0
        %5233 = vmatpush2.msra.mxu0 0.0
        %5234 = vmatprep.subr.mxu0 0.0
        %5235 = vmatpush2.msra.mxu0 0.0
        %5236 = vmatprep.subr.mxu0 0.0
        %5237 = vmatpush2.msra.mxu0 0.0
        %5238 = vmatprep.subr.mxu0 0.0
        %5239 = vmatpush2.msra.mxu0 0.0
        %5240 = vmatprep.subr.mxu0 0.0
        %5241 = vmatpush2.msra.mxu0 0.0
        %5242 = vmatprep.subr.mxu0 0.0
        %5243 = vmatpush2.msra.mxu0 0.0
        %5244 = vmatprep.subr.mxu0 0.0
        %5245 = vmatpush2.msra.mxu0 0.0
        %5246 = vmatprep.subr.mxu0 0.0
        %5247 = vmatpush2.msra.mxu0 0.0
        %5248 = vmatprep.subr.mxu0 0.0
        %5249 = vmatpush2.msra.mxu0 0.0
        %5250 = vmatprep.subr.mxu0 0.0
        %5251 = vmatpush2.msra.mxu0 0.0
        %5252 = vmatprep.subr.mxu0 0.0
        %5253 = vmatpush2.msra.mxu0 0.0
        %5254 = vmatprep.subr.mxu0 0.0
        %5255 = vmatpush2.msra.mxu0 0.0
        %5256 = vmatprep.mubr.f32.mxu0 0.0
        %v5257 = vand.u32 %v5064, 4294901760
        %5258 = vmatmul.mubr.f32.gmra.mxu0 %v5257
        %v5259 = vpop.f32.mrf.mxu0
        %v5260 = vadd.f32 %v5149, %v5259
        %v5261 = vpop.f32.mrf.mxu0
        %5262 = vmatprep.mubr.f32.mxu0 0.0
        %v5263 = vand.u32 %v5067, 4294901760
        %5264 = vmatmul.mubr.f32.gmra.mxu0 %v5263
        %v5265 = vpop.f32.mrf.mxu0
        %v5266 = vadd.f32 %v5159, %v5265
        %v5267 = vpop.f32.mrf.mxu0
        %5268 = vmatprep.mubr.f32.mxu0 0.0
        %v5269 = vand.u32 %v5070, 4294901760
        %5270 = vmatmul.mubr.f32.gmra.mxu0 %v5269
        %v5271 = vpop.f32.mrf.mxu0
        %v5272 = vadd.f32 %v5169, %v5271
        %v5273 = vpop.f32.mrf.mxu0
        %5274 = vmatprep.mubr.f32.mxu0 0.0
        %v5275 = vand.u32 %v5073, 4294901760
        %5276 = vmatmul.mubr.f32.gmra.mxu0 %v5275
        %v5277 = vpop.f32.mrf.mxu0
        %v5278 = vadd.f32 %v5179, %v5277
        %v5279 = vpop.f32.mrf.mxu0
        %5280 = vdwg.mxu0
        %5281 = vmatprep.subr.mxu0 0.0
        %5282 = vmatpush1.msra.mxu0 0.0
        %5283 = vmatprep.subr.mxu0 0.0
        %5284 = vmatpush1.msra.mxu0 0.0
        %5285 = vmatprep.subr.mxu0 0.0
        %5286 = vmatpush1.msra.mxu0 0.0
        %5287 = vmatprep.subr.mxu0 0.0
        %5288 = vmatpush1.msra.mxu0 0.0
        %5289 = vmatprep.subr.mxu0 0.0
        %5290 = vmatpush1.msra.mxu0 0.0
        %5291 = vmatprep.subr.mxu0 0.0
        %5292 = vmatpush1.msra.mxu0 0.0
        %5293 = vmatprep.subr.mxu0 0.0
        %5294 = vmatpush1.msra.mxu0 0.0
        %5295 = vmatprep.subr.mxu0 0.0
        %5296 = vmatpush1.msra.mxu0 0.0
        %5297 = vmatprep.subr.mxu0 0.0
        %5298 = vmatpush1.msra.mxu0 0.0
        %5299 = vmatprep.subr.mxu0 0.0
        %5300 = vmatpush1.msra.mxu0 0.0
        %5301 = vmatprep.subr.mxu0 0.0
        %5302 = vmatpush1.msra.mxu0 0.0
        %5303 = vmatprep.subr.mxu0 0.0
        %5304 = vmatpush1.msra.mxu0 0.0
        %5305 = vmatprep.subr.mxu0 0.0
        %5306 = vmatpush1.msra.mxu0 0.0
        %5307 = vmatprep.subr.mxu0 0.0
        %5308 = vmatpush1.msra.mxu0 0.0
        %5309 = vmatprep.subr.mxu0 0.0
        %v5310 = vand.u32 %v4451, 4294901760
        %v5311 = vsub.f32 %v4451, %v5310
        %5312 = vmatpush1.msra.mxu0 %v5311
        %5313 = vmatprep.subr.mxu0 0.0
        %v5314 = vand.u32 %v4448, 4294901760
        %v5315 = vsub.f32 %v4448, %v5314
        %5316 = vmatpush1.msra.mxu0 %v5315
        %5317 = vmatprep.subr.mxu0 0.0
        %5318 = vmatpush2.msra.mxu0 0.0
        %5319 = vmatprep.subr.mxu0 0.0
        %5320 = vmatpush2.msra.mxu0 0.0
        %5321 = vmatprep.subr.mxu0 0.0
        %5322 = vmatpush2.msra.mxu0 0.0
        %5323 = vmatprep.subr.mxu0 0.0
        %5324 = vmatpush2.msra.mxu0 0.0
        %5325 = vmatprep.subr.mxu0 0.0
        %5326 = vmatpush2.msra.mxu0 0.0
        %5327 = vmatprep.subr.mxu0 0.0
        %5328 = vmatpush2.msra.mxu0 0.0
        %5329 = vmatprep.subr.mxu0 0.0
        %5330 = vmatpush2.msra.mxu0 0.0
        %5331 = vmatprep.subr.mxu0 0.0
        %5332 = vmatpush2.msra.mxu0 0.0
        %5333 = vmatprep.subr.mxu0 0.0
        %5334 = vmatpush2.msra.mxu0 0.0
        %5335 = vmatprep.subr.mxu0 0.0
        %5336 = vmatpush2.msra.mxu0 0.0
        %5337 = vmatprep.subr.mxu0 0.0
        %5338 = vmatpush2.msra.mxu0 0.0
        %5339 = vmatprep.subr.mxu0 0.0
        %5340 = vmatpush2.msra.mxu0 0.0
        %5341 = vmatprep.subr.mxu0 0.0
        %5342 = vmatpush2.msra.mxu0 0.0
        %5343 = vmatprep.subr.mxu0 0.0
        %5344 = vmatpush2.msra.mxu0 0.0
        %5345 = vmatprep.subr.mxu0 0.0
        %5346 = vmatpush2.msra.mxu0 0.0
        %5347 = vmatprep.subr.mxu0 0.0
        %5348 = vmatpush2.msra.mxu0 0.0
        %5349 = vmatprep.mubr.f32.mxu0 0.0
        %v5350 = vand.u32 %v5064, 4294901760
        %v5351 = vsub.f32 %v5064, %v5350
        %5352 = vmatmul.mubr.f32.gmra.mxu0 %v5351
        %v5353 = vpop.f32.mrf.mxu0
        %v5354 = vadd.f32 %v5260, %v5353
        %v5355 = vpop.f32.mrf.mxu0
        %5356 = vmatprep.mubr.f32.mxu0 0.0
        %v5357 = vand.u32 %v5067, 4294901760
        %v5358 = vsub.f32 %v5067, %v5357
        %5359 = vmatmul.mubr.f32.gmra.mxu0 %v5358
        %v5360 = vpop.f32.mrf.mxu0
        %v5361 = vadd.f32 %v5266, %v5360
        %v5362 = vpop.f32.mrf.mxu0
        %5363 = vmatprep.mubr.f32.mxu0 0.0
        %v5364 = vand.u32 %v5070, 4294901760
        %v5365 = vsub.f32 %v5070, %v5364
        %5366 = vmatmul.mubr.f32.gmra.mxu0 %v5365
        %v5367 = vpop.f32.mrf.mxu0
        %v5368 = vadd.f32 %v5272, %v5367
        %v5369 = vpop.f32.mrf.mxu0
        %5370 = vmatprep.mubr.f32.mxu0 0.0
        %v5371 = vand.u32 %v5073, 4294901760
        %v5372 = vsub.f32 %v5073, %v5371
        %5373 = vmatmul.mubr.f32.gmra.mxu0 %v5372
        %v5374 = vpop.f32.mrf.mxu0
        %v5375 = vadd.f32 %v5278, %v5374
        %v5376 = vpop.f32.mrf.mxu0
        %5377 = vdwg.mxu0
        %5378 = vmatprep.subr.mxu0 0.0
        %5379 = vmatpush1.msra.mxu0 0.0
        %5380 = vmatprep.subr.mxu0 0.0
        %5381 = vmatpush1.msra.mxu0 0.0
        %5382 = vmatprep.subr.mxu0 0.0
        %5383 = vmatpush1.msra.mxu0 0.0
        %5384 = vmatprep.subr.mxu0 0.0
        %5385 = vmatpush1.msra.mxu0 0.0
        %5386 = vmatprep.subr.mxu0 0.0
        %5387 = vmatpush1.msra.mxu0 0.0
        %5388 = vmatprep.subr.mxu0 0.0
        %5389 = vmatpush1.msra.mxu0 0.0
        %5390 = vmatprep.subr.mxu0 0.0
        %5391 = vmatpush1.msra.mxu0 0.0
        %5392 = vmatprep.subr.mxu0 0.0
        %5393 = vmatpush1.msra.mxu0 0.0
        %5394 = vmatprep.subr.mxu0 0.0
        %5395 = vmatpush1.msra.mxu0 0.0
        %5396 = vmatprep.subr.mxu0 0.0
        %5397 = vmatpush1.msra.mxu0 0.0
        %5398 = vmatprep.subr.mxu0 0.0
        %5399 = vmatpush1.msra.mxu0 0.0
        %5400 = vmatprep.subr.mxu0 0.0
        %5401 = vmatpush1.msra.mxu0 0.0
        %5402 = vmatprep.subr.mxu0 0.0
        %5403 = vmatpush1.msra.mxu0 0.0
        %5404 = vmatprep.subr.mxu0 0.0
        %5405 = vmatpush1.msra.mxu0 0.0
        %5406 = vmatprep.subr.mxu0 0.0
        %v5407 = vand.u32 %v4451, 4294901760
        %5408 = vmatpush1.msra.mxu0 %v5407
        %5409 = vmatprep.subr.mxu0 0.0
        %v5410 = vand.u32 %v4448, 4294901760
        %5411 = vmatpush1.msra.mxu0 %v5410
        %5412 = vmatprep.subr.mxu0 0.0
        %5413 = vmatpush2.msra.mxu0 0.0
        %5414 = vmatprep.subr.mxu0 0.0
        %5415 = vmatpush2.msra.mxu0 0.0
        %5416 = vmatprep.subr.mxu0 0.0
        %5417 = vmatpush2.msra.mxu0 0.0
        %5418 = vmatprep.subr.mxu0 0.0
        %5419 = vmatpush2.msra.mxu0 0.0
        %5420 = vmatprep.subr.mxu0 0.0
        %5421 = vmatpush2.msra.mxu0 0.0
        %5422 = vmatprep.subr.mxu0 0.0
        %5423 = vmatpush2.msra.mxu0 0.0
        %5424 = vmatprep.subr.mxu0 0.0
        %5425 = vmatpush2.msra.mxu0 0.0
        %5426 = vmatprep.subr.mxu0 0.0
        %5427 = vmatpush2.msra.mxu0 0.0
        %5428 = vmatprep.subr.mxu0 0.0
        %5429 = vmatpush2.msra.mxu0 0.0
        %5430 = vmatprep.subr.mxu0 0.0
        %5431 = vmatpush2.msra.mxu0 0.0
        %5432 = vmatprep.subr.mxu0 0.0
        %5433 = vmatpush2.msra.mxu0 0.0
        %5434 = vmatprep.subr.mxu0 0.0
        %5435 = vmatpush2.msra.mxu0 0.0
        %5436 = vmatprep.subr.mxu0 0.0
        %5437 = vmatpush2.msra.mxu0 0.0
        %5438 = vmatprep.subr.mxu0 0.0
        %5439 = vmatpush2.msra.mxu0 0.0
        %5440 = vmatprep.subr.mxu0 0.0
        %5441 = vmatpush2.msra.mxu0 0.0
        %5442 = vmatprep.subr.mxu0 0.0
        %5443 = vmatpush2.msra.mxu0 0.0
        %5444 = vmatprep.mubr.f32.mxu0 0.0
        %v5445 = vand.u32 %v5064, 4294901760
        %v5446 = vsub.f32 %v5064, %v5445
        %v5447 = vand.u32 %v5446, 4294901760
        %5448 = vmatmul.mubr.f32.gmra.mxu0 %v5447
        %v5449 = vpop.f32.mrf.mxu0
        %v5450 = vadd.f32 %v5354, %v5449
        %v5451 = vpop.f32.mrf.mxu0
        %5452 = vmatprep.mubr.f32.mxu0 0.0
        %v5453 = vand.u32 %v5067, 4294901760
        %v5454 = vsub.f32 %v5067, %v5453
        %v5455 = vand.u32 %v5454, 4294901760
        %5456 = vmatmul.mubr.f32.gmra.mxu0 %v5455
        %v5457 = vpop.f32.mrf.mxu0
        %v5458 = vadd.f32 %v5361, %v5457
        %v5459 = vpop.f32.mrf.mxu0
        %5460 = vmatprep.mubr.f32.mxu0 0.0
        %v5461 = vand.u32 %v5070, 4294901760
        %v5462 = vsub.f32 %v5070, %v5461
        %v5463 = vand.u32 %v5462, 4294901760
        %5464 = vmatmul.mubr.f32.gmra.mxu0 %v5463
        %v5465 = vpop.f32.mrf.mxu0
        %v5466 = vadd.f32 %v5368, %v5465
        %v5467 = vpop.f32.mrf.mxu0
        %5468 = vmatprep.mubr.f32.mxu0 0.0
        %v5469 = vand.u32 %v5073, 4294901760
        %v5470 = vsub.f32 %v5073, %v5469
        %v5471 = vand.u32 %v5470, 4294901760
        %5472 = vmatmul.mubr.f32.gmra.mxu0 %v5471
        %v5473 = vpop.f32.mrf.mxu0
        %v5474 = vadd.f32 %v5375, %v5473
        %v5475 = vpop.f32.mrf.mxu0
        %5476 = vdwg.mxu0
        %5477 = vmatprep.subr.mxu0 0.0
        %5478 = vmatpush1.msra.mxu0 0.0
        %5479 = vmatprep.subr.mxu0 0.0
        %5480 = vmatpush1.msra.mxu0 0.0
        %5481 = vmatprep.subr.mxu0 0.0
        %5482 = vmatpush1.msra.mxu0 0.0
        %5483 = vmatprep.subr.mxu0 0.0
        %5484 = vmatpush1.msra.mxu0 0.0
        %5485 = vmatprep.subr.mxu0 0.0
        %5486 = vmatpush1.msra.mxu0 0.0
        %5487 = vmatprep.subr.mxu0 0.0
        %5488 = vmatpush1.msra.mxu0 0.0
        %5489 = vmatprep.subr.mxu0 0.0
        %5490 = vmatpush1.msra.mxu0 0.0
        %5491 = vmatprep.subr.mxu0 0.0
        %5492 = vmatpush1.msra.mxu0 0.0
        %5493 = vmatprep.subr.mxu0 0.0
        %5494 = vmatpush1.msra.mxu0 0.0
        %5495 = vmatprep.subr.mxu0 0.0
        %5496 = vmatpush1.msra.mxu0 0.0
        %5497 = vmatprep.subr.mxu0 0.0
        %5498 = vmatpush1.msra.mxu0 0.0
        %5499 = vmatprep.subr.mxu0 0.0
        %5500 = vmatpush1.msra.mxu0 0.0
        %5501 = vmatprep.subr.mxu0 0.0
        %5502 = vmatpush1.msra.mxu0 0.0
        %5503 = vmatprep.subr.mxu0 0.0
        %5504 = vmatpush1.msra.mxu0 0.0
        %5505 = vmatprep.subr.mxu0 0.0
        %v5506 = vand.u32 %v4451, 4294901760
        %v5507 = vsub.f32 %v4451, %v5506
        %v5508 = vand.u32 %v5507, 4294901760
        %5509 = vmatpush1.msra.mxu0 %v5508
        %5510 = vmatprep.subr.mxu0 0.0
        %v5511 = vand.u32 %v4448, 4294901760
        %v5512 = vsub.f32 %v4448, %v5511
        %v5513 = vand.u32 %v5512, 4294901760
        %5514 = vmatpush1.msra.mxu0 %v5513
        %5515 = vmatprep.subr.mxu0 0.0
        %5516 = vmatpush2.msra.mxu0 0.0
        %5517 = vmatprep.subr.mxu0 0.0
        %5518 = vmatpush2.msra.mxu0 0.0
        %5519 = vmatprep.subr.mxu0 0.0
        %5520 = vmatpush2.msra.mxu0 0.0
        %5521 = vmatprep.subr.mxu0 0.0
        %5522 = vmatpush2.msra.mxu0 0.0
        %5523 = vmatprep.subr.mxu0 0.0
        %5524 = vmatpush2.msra.mxu0 0.0
        %5525 = vmatprep.subr.mxu0 0.0
        %5526 = vmatpush2.msra.mxu0 0.0
        %5527 = vmatprep.subr.mxu0 0.0
        %5528 = vmatpush2.msra.mxu0 0.0
        %5529 = vmatprep.subr.mxu0 0.0
        %5530 = vmatpush2.msra.mxu0 0.0
        %5531 = vmatprep.subr.mxu0 0.0
        %5532 = vmatpush2.msra.mxu0 0.0
        %5533 = vmatprep.subr.mxu0 0.0
        %5534 = vmatpush2.msra.mxu0 0.0
        %5535 = vmatprep.subr.mxu0 0.0
        %5536 = vmatpush2.msra.mxu0 0.0
        %5537 = vmatprep.subr.mxu0 0.0
        %5538 = vmatpush2.msra.mxu0 0.0
        %5539 = vmatprep.subr.mxu0 0.0
        %5540 = vmatpush2.msra.mxu0 0.0
        %5541 = vmatprep.subr.mxu0 0.0
        %5542 = vmatpush2.msra.mxu0 0.0
        %5543 = vmatprep.subr.mxu0 0.0
        %5544 = vmatpush2.msra.mxu0 0.0
        %5545 = vmatprep.subr.mxu0 0.0
        %5546 = vmatpush2.msra.mxu0 0.0
        %5547 = vmatprep.mubr.f32.mxu0 0.0
        %v5548 = vand.u32 %v5064, 4294901760
        %5549 = vmatmul.mubr.f32.gmra.mxu0 %v5548
        %v5550 = vpop.f32.mrf.mxu0
        %v5551 = vadd.f32 %v5450, %v5550
        %v5552 = vpop.f32.mrf.mxu0
        %5553 = vmatprep.mubr.f32.mxu0 0.0
        %v5554 = vand.u32 %v5067, 4294901760
        %5555 = vmatmul.mubr.f32.gmra.mxu0 %v5554
        %v5556 = vpop.f32.mrf.mxu0
        %v5557 = vadd.f32 %v5458, %v5556
        %v5558 = vpop.f32.mrf.mxu0
        %5559 = vmatprep.mubr.f32.mxu0 0.0
        %v5560 = vand.u32 %v5070, 4294901760
        %5561 = vmatmul.mubr.f32.gmra.mxu0 %v5560
        %v5562 = vpop.f32.mrf.mxu0
        %v5563 = vadd.f32 %v5466, %v5562
        %v5564 = vpop.f32.mrf.mxu0
        %5565 = vmatprep.mubr.f32.mxu0 0.0
        %v5566 = vand.u32 %v5073, 4294901760
        %5567 = vmatmul.mubr.f32.gmra.mxu0 %v5566
        %v5568 = vpop.f32.mrf.mxu0
        %v5569 = vadd.f32 %v5474, %v5568
        %v5570 = vpop.f32.mrf.mxu0
        %5571 = vdwg.mxu0
        %5572 = vmatprep.subr.mxu0 0.0
        %5573 = vmatpush1.msra.mxu0 0.0
        %5574 = vmatprep.subr.mxu0 0.0
        %5575 = vmatpush1.msra.mxu0 0.0
        %5576 = vmatprep.subr.mxu0 0.0
        %5577 = vmatpush1.msra.mxu0 0.0
        %5578 = vmatprep.subr.mxu0 0.0
        %5579 = vmatpush1.msra.mxu0 0.0
        %5580 = vmatprep.subr.mxu0 0.0
        %5581 = vmatpush1.msra.mxu0 0.0
        %5582 = vmatprep.subr.mxu0 0.0
        %5583 = vmatpush1.msra.mxu0 0.0
        %5584 = vmatprep.subr.mxu0 0.0
        %5585 = vmatpush1.msra.mxu0 0.0
        %5586 = vmatprep.subr.mxu0 0.0
        %5587 = vmatpush1.msra.mxu0 0.0
        %5588 = vmatprep.subr.mxu0 0.0
        %5589 = vmatpush1.msra.mxu0 0.0
        %5590 = vmatprep.subr.mxu0 0.0
        %5591 = vmatpush1.msra.mxu0 0.0
        %5592 = vmatprep.subr.mxu0 0.0
        %5593 = vmatpush1.msra.mxu0 0.0
        %5594 = vmatprep.subr.mxu0 0.0
        %5595 = vmatpush1.msra.mxu0 0.0
        %5596 = vmatprep.subr.mxu0 0.0
        %5597 = vmatpush1.msra.mxu0 0.0
        %5598 = vmatprep.subr.mxu0 0.0
        %5599 = vmatpush1.msra.mxu0 0.0
        %5600 = vmatprep.subr.mxu0 0.0
        %v5601 = vand.u32 %v4451, 4294901760
        %5602 = vmatpush1.msra.mxu0 %v5601
        %5603 = vmatprep.subr.mxu0 0.0
        %v5604 = vand.u32 %v4448, 4294901760
        %5605 = vmatpush1.msra.mxu0 %v5604
        %5606 = vmatprep.subr.mxu0 0.0
        %5607 = vmatpush2.msra.mxu0 0.0
        %5608 = vmatprep.subr.mxu0 0.0
        %5609 = vmatpush2.msra.mxu0 0.0
        %5610 = vmatprep.subr.mxu0 0.0
        %5611 = vmatpush2.msra.mxu0 0.0
        %5612 = vmatprep.subr.mxu0 0.0
        %5613 = vmatpush2.msra.mxu0 0.0
        %5614 = vmatprep.subr.mxu0 0.0
        %5615 = vmatpush2.msra.mxu0 0.0
        %5616 = vmatprep.subr.mxu0 0.0
        %5617 = vmatpush2.msra.mxu0 0.0
        %5618 = vmatprep.subr.mxu0 0.0
        %5619 = vmatpush2.msra.mxu0 0.0
        %5620 = vmatprep.subr.mxu0 0.0
        %5621 = vmatpush2.msra.mxu0 0.0
        %5622 = vmatprep.subr.mxu0 0.0
        %5623 = vmatpush2.msra.mxu0 0.0
        %5624 = vmatprep.subr.mxu0 0.0
        %5625 = vmatpush2.msra.mxu0 0.0
        %5626 = vmatprep.subr.mxu0 0.0
        %5627 = vmatpush2.msra.mxu0 0.0
        %5628 = vmatprep.subr.mxu0 0.0
        %5629 = vmatpush2.msra.mxu0 0.0
        %5630 = vmatprep.subr.mxu0 0.0
        %5631 = vmatpush2.msra.mxu0 0.0
        %5632 = vmatprep.subr.mxu0 0.0
        %5633 = vmatpush2.msra.mxu0 0.0
        %5634 = vmatprep.subr.mxu0 0.0
        %5635 = vmatpush2.msra.mxu0 0.0
        %5636 = vmatprep.subr.mxu0 0.0
        %5637 = vmatpush2.msra.mxu0 0.0
        %5638 = vmatprep.mubr.f32.mxu0 0.0
        %v5639 = vand.u32 %v5064, 4294901760
        %5640 = vmatmul.mubr.f32.gmra.mxu0 %v5639
        %v5641 = vpop.f32.mrf.mxu0
        %v5642 = vadd.f32 %v5551, %v5641
        %v5643 = vpop.f32.mrf.mxu0
        %5644 = vmatprep.mubr.f32.mxu0 0.0
        %v5645 = vand.u32 %v5067, 4294901760
        %5646 = vmatmul.mubr.f32.gmra.mxu0 %v5645
        %v5647 = vpop.f32.mrf.mxu0
        %v5648 = vadd.f32 %v5557, %v5647
        %v5649 = vpop.f32.mrf.mxu0
        %5650 = vmatprep.mubr.f32.mxu0 0.0
        %v5651 = vand.u32 %v5070, 4294901760
        %5652 = vmatmul.mubr.f32.gmra.mxu0 %v5651
        %v5653 = vpop.f32.mrf.mxu0
        %v5654 = vadd.f32 %v5563, %v5653
        %v5655 = vpop.f32.mrf.mxu0
        %5656 = vmatprep.mubr.f32.mxu0 0.0
        %v5657 = vand.u32 %v5073, 4294901760
        %5658 = vmatmul.mubr.f32.gmra.mxu0 %v5657
        %v5659 = vpop.f32.mrf.mxu0
        %v5660 = vadd.f32 %v5569, %v5659
        %v5661 = vpop.f32.mrf.mxu0
        %5662 = vdwg.mxu0
        %s5663 = scalar_lea.vmem %s2, 64
        %v5664 = vld [vmem:[%s5663] sm:$0xff]
        %v5665 = vld [vmem:[%s5663 + $0x8] sm:$0xff]
        %v5666 = vld [vmem:[%s5663 + $0x10] sm:$0xff]
        %v5667 = vld [vmem:[%s5663 + $0x18] sm:$0xff]
        %v5669 = vsel %vm229, %v5664, 0
        %v5672 = vsel %vm229, %v5665, 0
        %v5675 = vsel %vm229, %v5666, 0
        %v5678 = vsel %vm229, %v5667, 0
        %5680 = vmatprep.subr.mxu0 0.0
        %5681 = vmatpush1.msra.mxu0 0.0
        %5682 = vmatprep.subr.mxu0 0.0
        %5683 = vmatpush1.msra.mxu0 0.0
        %5684 = vmatprep.subr.mxu0 0.0
        %5685 = vmatpush1.msra.mxu0 0.0
        %5686 = vmatprep.subr.mxu0 0.0
        %5687 = vmatpush1.msra.mxu0 0.0
        %5688 = vmatprep.subr.mxu0 0.0
        %5689 = vmatpush1.msra.mxu0 0.0
        %5690 = vmatprep.subr.mxu0 0.0
        %5691 = vmatpush1.msra.mxu0 0.0
        %5692 = vmatprep.subr.mxu0 0.0
        %5693 = vmatpush1.msra.mxu0 0.0
        %5694 = vmatprep.subr.mxu0 0.0
        %5695 = vmatpush1.msra.mxu0 0.0
        %5696 = vmatprep.subr.mxu0 0.0
        %5697 = vmatpush1.msra.mxu0 0.0
        %5698 = vmatprep.subr.mxu0 0.0
        %5699 = vmatpush1.msra.mxu0 0.0
        %5700 = vmatprep.subr.mxu0 0.0
        %5701 = vmatpush1.msra.mxu0 0.0
        %5702 = vmatprep.subr.mxu0 0.0
        %5703 = vmatpush1.msra.mxu0 0.0
        %5704 = vmatprep.subr.mxu0 0.0
        %5705 = vmatpush1.msra.mxu0 0.0
        %5706 = vmatprep.subr.mxu0 0.0
        %5707 = vmatpush1.msra.mxu0 0.0
        %5708 = vmatprep.subr.mxu0 0.0
        %v5709 = vand.u32 %v4453, 4294901760
        %5710 = vmatpush1.msra.mxu0 %v5709
        %5711 = vmatprep.subr.mxu0 0.0
        %v5712 = vand.u32 %v4450, 4294901760
        %5713 = vmatpush1.msra.mxu0 %v5712
        %5714 = vmatprep.subr.mxu0 0.0
        %5715 = vmatpush2.msra.mxu0 0.0
        %5716 = vmatprep.subr.mxu0 0.0
        %5717 = vmatpush2.msra.mxu0 0.0
        %5718 = vmatprep.subr.mxu0 0.0
        %5719 = vmatpush2.msra.mxu0 0.0
        %5720 = vmatprep.subr.mxu0 0.0
        %5721 = vmatpush2.msra.mxu0 0.0
        %5722 = vmatprep.subr.mxu0 0.0
        %5723 = vmatpush2.msra.mxu0 0.0
        %5724 = vmatprep.subr.mxu0 0.0
        %5725 = vmatpush2.msra.mxu0 0.0
        %5726 = vmatprep.subr.mxu0 0.0
        %5727 = vmatpush2.msra.mxu0 0.0
        %5728 = vmatprep.subr.mxu0 0.0
        %5729 = vmatpush2.msra.mxu0 0.0
        %5730 = vmatprep.subr.mxu0 0.0
        %5731 = vmatpush2.msra.mxu0 0.0
        %5732 = vmatprep.subr.mxu0 0.0
        %5733 = vmatpush2.msra.mxu0 0.0
        %5734 = vmatprep.subr.mxu0 0.0
        %5735 = vmatpush2.msra.mxu0 0.0
        %5736 = vmatprep.subr.mxu0 0.0
        %5737 = vmatpush2.msra.mxu0 0.0
        %5738 = vmatprep.subr.mxu0 0.0
        %5739 = vmatpush2.msra.mxu0 0.0
        %5740 = vmatprep.subr.mxu0 0.0
        %5741 = vmatpush2.msra.mxu0 0.0
        %5742 = vmatprep.subr.mxu0 0.0
        %5743 = vmatpush2.msra.mxu0 0.0
        %5744 = vmatprep.subr.mxu0 0.0
        %5745 = vmatpush2.msra.mxu0 0.0
        %5746 = vmatprep.mubr.f32.mxu0 0.0
        %v5747 = vand.u32 %v5669, 4294901760
        %v5748 = vsub.f32 %v5669, %v5747
        %v5749 = vand.u32 %v5748, 4294901760
        %v5750 = vsub.f32 %v5748, %v5749
        %v5751 = vand.u32 %v5750, 4294901760
        %5752 = vmatmul.mubr.f32.gmra.mxu0 %v5751
        %v5753 = vpop.f32.mrf.mxu0
        %v5754 = vadd.f32 0.0, %v5753
        %v5755 = vpop.f32.mrf.mxu0
        %5756 = vmatprep.mubr.f32.mxu0 0.0
        %v5757 = vand.u32 %v5672, 4294901760
        %v5758 = vsub.f32 %v5672, %v5757
        %v5759 = vand.u32 %v5758, 4294901760
        %v5760 = vsub.f32 %v5758, %v5759
        %v5761 = vand.u32 %v5760, 4294901760
        %5762 = vmatmul.mubr.f32.gmra.mxu0 %v5761
        %v5763 = vpop.f32.mrf.mxu0
        %v5764 = vadd.f32 0.0, %v5763
        %v5765 = vpop.f32.mrf.mxu0
        %5766 = vmatprep.mubr.f32.mxu0 0.0
        %v5767 = vand.u32 %v5675, 4294901760
        %v5768 = vsub.f32 %v5675, %v5767
        %v5769 = vand.u32 %v5768, 4294901760
        %v5770 = vsub.f32 %v5768, %v5769
        %v5771 = vand.u32 %v5770, 4294901760
        %5772 = vmatmul.mubr.f32.gmra.mxu0 %v5771
        %v5773 = vpop.f32.mrf.mxu0
        %v5774 = vadd.f32 0.0, %v5773
        %v5775 = vpop.f32.mrf.mxu0
        %5776 = vmatprep.mubr.f32.mxu0 0.0
        %v5777 = vand.u32 %v5678, 4294901760
        %v5778 = vsub.f32 %v5678, %v5777
        %v5779 = vand.u32 %v5778, 4294901760
        %v5780 = vsub.f32 %v5778, %v5779
        %v5781 = vand.u32 %v5780, 4294901760
        %5782 = vmatmul.mubr.f32.gmra.mxu0 %v5781
        %v5783 = vpop.f32.mrf.mxu0
        %v5784 = vadd.f32 0.0, %v5783
        %v5785 = vpop.f32.mrf.mxu0
        %5786 = vdwg.mxu0
        %5787 = vmatprep.subr.mxu0 0.0
        %5788 = vmatpush1.msra.mxu0 0.0
        %5789 = vmatprep.subr.mxu0 0.0
        %5790 = vmatpush1.msra.mxu0 0.0
        %5791 = vmatprep.subr.mxu0 0.0
        %5792 = vmatpush1.msra.mxu0 0.0
        %5793 = vmatprep.subr.mxu0 0.0
        %5794 = vmatpush1.msra.mxu0 0.0
        %5795 = vmatprep.subr.mxu0 0.0
        %5796 = vmatpush1.msra.mxu0 0.0
        %5797 = vmatprep.subr.mxu0 0.0
        %5798 = vmatpush1.msra.mxu0 0.0
        %5799 = vmatprep.subr.mxu0 0.0
        %5800 = vmatpush1.msra.mxu0 0.0
        %5801 = vmatprep.subr.mxu0 0.0
        %5802 = vmatpush1.msra.mxu0 0.0
        %5803 = vmatprep.subr.mxu0 0.0
        %5804 = vmatpush1.msra.mxu0 0.0
        %5805 = vmatprep.subr.mxu0 0.0
        %5806 = vmatpush1.msra.mxu0 0.0
        %5807 = vmatprep.subr.mxu0 0.0
        %5808 = vmatpush1.msra.mxu0 0.0
        %5809 = vmatprep.subr.mxu0 0.0
        %5810 = vmatpush1.msra.mxu0 0.0
        %5811 = vmatprep.subr.mxu0 0.0
        %5812 = vmatpush1.msra.mxu0 0.0
        %5813 = vmatprep.subr.mxu0 0.0
        %5814 = vmatpush1.msra.mxu0 0.0
        %5815 = vmatprep.subr.mxu0 0.0
        %v5816 = vand.u32 %v4453, 4294901760
        %v5817 = vsub.f32 %v4453, %v5816
        %v5818 = vand.u32 %v5817, 4294901760
        %v5819 = vsub.f32 %v5817, %v5818
        %v5820 = vand.u32 %v5819, 4294901760
        %5821 = vmatpush1.msra.mxu0 %v5820
        %5822 = vmatprep.subr.mxu0 0.0
        %v5823 = vand.u32 %v4450, 4294901760
        %v5824 = vsub.f32 %v4450, %v5823
        %v5825 = vand.u32 %v5824, 4294901760
        %v5826 = vsub.f32 %v5824, %v5825
        %v5827 = vand.u32 %v5826, 4294901760
        %5828 = vmatpush1.msra.mxu0 %v5827
        %5829 = vmatprep.subr.mxu0 0.0
        %5830 = vmatpush2.msra.mxu0 0.0
        %5831 = vmatprep.subr.mxu0 0.0
        %5832 = vmatpush2.msra.mxu0 0.0
        %5833 = vmatprep.subr.mxu0 0.0
        %5834 = vmatpush2.msra.mxu0 0.0
        %5835 = vmatprep.subr.mxu0 0.0
        %5836 = vmatpush2.msra.mxu0 0.0
        %5837 = vmatprep.subr.mxu0 0.0
        %5838 = vmatpush2.msra.mxu0 0.0
        %5839 = vmatprep.subr.mxu0 0.0
        %5840 = vmatpush2.msra.mxu0 0.0
        %5841 = vmatprep.subr.mxu0 0.0
        %5842 = vmatpush2.msra.mxu0 0.0
        %5843 = vmatprep.subr.mxu0 0.0
        %5844 = vmatpush2.msra.mxu0 0.0
        %5845 = vmatprep.subr.mxu0 0.0
        %5846 = vmatpush2.msra.mxu0 0.0
        %5847 = vmatprep.subr.mxu0 0.0
        %5848 = vmatpush2.msra.mxu0 0.0
        %5849 = vmatprep.subr.mxu0 0.0
        %5850 = vmatpush2.msra.mxu0 0.0
        %5851 = vmatprep.subr.mxu0 0.0
        %5852 = vmatpush2.msra.mxu0 0.0
        %5853 = vmatprep.subr.mxu0 0.0
        %5854 = vmatpush2.msra.mxu0 0.0
        %5855 = vmatprep.subr.mxu0 0.0
        %5856 = vmatpush2.msra.mxu0 0.0
        %5857 = vmatprep.subr.mxu0 0.0
        %5858 = vmatpush2.msra.mxu0 0.0
        %5859 = vmatprep.subr.mxu0 0.0
        %5860 = vmatpush2.msra.mxu0 0.0
        %5861 = vmatprep.mubr.f32.mxu0 0.0
        %v5862 = vand.u32 %v5669, 4294901760
        %5863 = vmatmul.mubr.f32.gmra.mxu0 %v5862
        %v5864 = vpop.f32.mrf.mxu0
        %v5865 = vadd.f32 %v5754, %v5864
        %v5866 = vpop.f32.mrf.mxu0
        %5867 = vmatprep.mubr.f32.mxu0 0.0
        %v5868 = vand.u32 %v5672, 4294901760
        %5869 = vmatmul.mubr.f32.gmra.mxu0 %v5868
        %v5870 = vpop.f32.mrf.mxu0
        %v5871 = vadd.f32 %v5764, %v5870
        %v5872 = vpop.f32.mrf.mxu0
        %5873 = vmatprep.mubr.f32.mxu0 0.0
        %v5874 = vand.u32 %v5675, 4294901760
        %5875 = vmatmul.mubr.f32.gmra.mxu0 %v5874
        %v5876 = vpop.f32.mrf.mxu0
        %v5877 = vadd.f32 %v5774, %v5876
        %v5878 = vpop.f32.mrf.mxu0
        %5879 = vmatprep.mubr.f32.mxu0 0.0
        %v5880 = vand.u32 %v5678, 4294901760
        %5881 = vmatmul.mubr.f32.gmra.mxu0 %v5880
        %v5882 = vpop.f32.mrf.mxu0
        %v5883 = vadd.f32 %v5784, %v5882
        %v5884 = vpop.f32.mrf.mxu0
        %5885 = vdwg.mxu0
        %5886 = vmatprep.subr.mxu0 0.0
        %5887 = vmatpush1.msra.mxu0 0.0
        %5888 = vmatprep.subr.mxu0 0.0
        %5889 = vmatpush1.msra.mxu0 0.0
        %5890 = vmatprep.subr.mxu0 0.0
        %5891 = vmatpush1.msra.mxu0 0.0
        %5892 = vmatprep.subr.mxu0 0.0
        %5893 = vmatpush1.msra.mxu0 0.0
        %5894 = vmatprep.subr.mxu0 0.0
        %5895 = vmatpush1.msra.mxu0 0.0
        %5896 = vmatprep.subr.mxu0 0.0
        %5897 = vmatpush1.msra.mxu0 0.0
        %5898 = vmatprep.subr.mxu0 0.0
        %5899 = vmatpush1.msra.mxu0 0.0
        %5900 = vmatprep.subr.mxu0 0.0
        %5901 = vmatpush1.msra.mxu0 0.0
        %5902 = vmatprep.subr.mxu0 0.0
        %5903 = vmatpush1.msra.mxu0 0.0
        %5904 = vmatprep.subr.mxu0 0.0
        %5905 = vmatpush1.msra.mxu0 0.0
        %5906 = vmatprep.subr.mxu0 0.0
        %5907 = vmatpush1.msra.mxu0 0.0
        %5908 = vmatprep.subr.mxu0 0.0
        %5909 = vmatpush1.msra.mxu0 0.0
        %5910 = vmatprep.subr.mxu0 0.0
        %5911 = vmatpush1.msra.mxu0 0.0
        %5912 = vmatprep.subr.mxu0 0.0
        %5913 = vmatpush1.msra.mxu0 0.0
        %5914 = vmatprep.subr.mxu0 0.0
        %v5915 = vand.u32 %v4453, 4294901760
        %v5916 = vsub.f32 %v4453, %v5915
        %5917 = vmatpush1.msra.mxu0 %v5916
        %5918 = vmatprep.subr.mxu0 0.0
        %v5919 = vand.u32 %v4450, 4294901760
        %v5920 = vsub.f32 %v4450, %v5919
        %5921 = vmatpush1.msra.mxu0 %v5920
        %5922 = vmatprep.subr.mxu0 0.0
        %5923 = vmatpush2.msra.mxu0 0.0
        %5924 = vmatprep.subr.mxu0 0.0
        %5925 = vmatpush2.msra.mxu0 0.0
        %5926 = vmatprep.subr.mxu0 0.0
        %5927 = vmatpush2.msra.mxu0 0.0
        %5928 = vmatprep.subr.mxu0 0.0
        %5929 = vmatpush2.msra.mxu0 0.0
        %5930 = vmatprep.subr.mxu0 0.0
        %5931 = vmatpush2.msra.mxu0 0.0
        %5932 = vmatprep.subr.mxu0 0.0
        %5933 = vmatpush2.msra.mxu0 0.0
        %5934 = vmatprep.subr.mxu0 0.0
        %5935 = vmatpush2.msra.mxu0 0.0
        %5936 = vmatprep.subr.mxu0 0.0
        %5937 = vmatpush2.msra.mxu0 0.0
        %5938 = vmatprep.subr.mxu0 0.0
        %5939 = vmatpush2.msra.mxu0 0.0
        %5940 = vmatprep.subr.mxu0 0.0
        %5941 = vmatpush2.msra.mxu0 0.0
        %5942 = vmatprep.subr.mxu0 0.0
        %5943 = vmatpush2.msra.mxu0 0.0
        %5944 = vmatprep.subr.mxu0 0.0
        %5945 = vmatpush2.msra.mxu0 0.0
        %5946 = vmatprep.subr.mxu0 0.0
        %5947 = vmatpush2.msra.mxu0 0.0
        %5948 = vmatprep.subr.mxu0 0.0
        %5949 = vmatpush2.msra.mxu0 0.0
        %5950 = vmatprep.subr.mxu0 0.0
        %5951 = vmatpush2.msra.mxu0 0.0
        %5952 = vmatprep.subr.mxu0 0.0
        %5953 = vmatpush2.msra.mxu0 0.0
        %5954 = vmatprep.mubr.f32.mxu0 0.0
        %v5955 = vand.u32 %v5669, 4294901760
        %v5956 = vsub.f32 %v5669, %v5955
        %5957 = vmatmul.mubr.f32.gmra.mxu0 %v5956
        %v5958 = vpop.f32.mrf.mxu0
        %v5959 = vadd.f32 %v5865, %v5958
        %v5960 = vpop.f32.mrf.mxu0
        %5961 = vmatprep.mubr.f32.mxu0 0.0
        %v5962 = vand.u32 %v5672, 4294901760
        %v5963 = vsub.f32 %v5672, %v5962
        %5964 = vmatmul.mubr.f32.gmra.mxu0 %v5963
        %v5965 = vpop.f32.mrf.mxu0
        %v5966 = vadd.f32 %v5871, %v5965
        %v5967 = vpop.f32.mrf.mxu0
        %5968 = vmatprep.mubr.f32.mxu0 0.0
        %v5969 = vand.u32 %v5675, 4294901760
        %v5970 = vsub.f32 %v5675, %v5969
        %5971 = vmatmul.mubr.f32.gmra.mxu0 %v5970
        %v5972 = vpop.f32.mrf.mxu0
        %v5973 = vadd.f32 %v5877, %v5972
        %v5974 = vpop.f32.mrf.mxu0
        %5975 = vmatprep.mubr.f32.mxu0 0.0
        %v5976 = vand.u32 %v5678, 4294901760
        %v5977 = vsub.f32 %v5678, %v5976
        %5978 = vmatmul.mubr.f32.gmra.mxu0 %v5977
        %v5979 = vpop.f32.mrf.mxu0
        %v5980 = vadd.f32 %v5883, %v5979
        %v5981 = vpop.f32.mrf.mxu0
        %5982 = vdwg.mxu0
        %5983 = vmatprep.subr.mxu0 0.0
        %5984 = vmatpush1.msra.mxu0 0.0
        %5985 = vmatprep.subr.mxu0 0.0
        %5986 = vmatpush1.msra.mxu0 0.0
        %5987 = vmatprep.subr.mxu0 0.0
        %5988 = vmatpush1.msra.mxu0 0.0
        %5989 = vmatprep.subr.mxu0 0.0
        %5990 = vmatpush1.msra.mxu0 0.0
        %5991 = vmatprep.subr.mxu0 0.0
        %5992 = vmatpush1.msra.mxu0 0.0
        %5993 = vmatprep.subr.mxu0 0.0
        %5994 = vmatpush1.msra.mxu0 0.0
        %5995 = vmatprep.subr.mxu0 0.0
        %5996 = vmatpush1.msra.mxu0 0.0
        %5997 = vmatprep.subr.mxu0 0.0
        %5998 = vmatpush1.msra.mxu0 0.0
        %5999 = vmatprep.subr.mxu0 0.0
        %6000 = vmatpush1.msra.mxu0 0.0
        %6001 = vmatprep.subr.mxu0 0.0
        %6002 = vmatpush1.msra.mxu0 0.0
        %6003 = vmatprep.subr.mxu0 0.0
        %6004 = vmatpush1.msra.mxu0 0.0
        %6005 = vmatprep.subr.mxu0 0.0
        %6006 = vmatpush1.msra.mxu0 0.0
        %6007 = vmatprep.subr.mxu0 0.0
        %6008 = vmatpush1.msra.mxu0 0.0
        %6009 = vmatprep.subr.mxu0 0.0
        %6010 = vmatpush1.msra.mxu0 0.0
        %6011 = vmatprep.subr.mxu0 0.0
        %v6012 = vand.u32 %v4453, 4294901760
        %6013 = vmatpush1.msra.mxu0 %v6012
        %6014 = vmatprep.subr.mxu0 0.0
        %v6015 = vand.u32 %v4450, 4294901760
        %6016 = vmatpush1.msra.mxu0 %v6015
        %6017 = vmatprep.subr.mxu0 0.0
        %6018 = vmatpush2.msra.mxu0 0.0
        %6019 = vmatprep.subr.mxu0 0.0
        %6020 = vmatpush2.msra.mxu0 0.0
        %6021 = vmatprep.subr.mxu0 0.0
        %6022 = vmatpush2.msra.mxu0 0.0
        %6023 = vmatprep.subr.mxu0 0.0
        %6024 = vmatpush2.msra.mxu0 0.0
        %6025 = vmatprep.subr.mxu0 0.0
        %6026 = vmatpush2.msra.mxu0 0.0
        %6027 = vmatprep.subr.mxu0 0.0
        %6028 = vmatpush2.msra.mxu0 0.0
        %6029 = vmatprep.subr.mxu0 0.0
        %6030 = vmatpush2.msra.mxu0 0.0
        %6031 = vmatprep.subr.mxu0 0.0
        %6032 = vmatpush2.msra.mxu0 0.0
        %6033 = vmatprep.subr.mxu0 0.0
        %6034 = vmatpush2.msra.mxu0 0.0
        %6035 = vmatprep.subr.mxu0 0.0
        %6036 = vmatpush2.msra.mxu0 0.0
        %6037 = vmatprep.subr.mxu0 0.0
        %6038 = vmatpush2.msra.mxu0 0.0
        %6039 = vmatprep.subr.mxu0 0.0
        %6040 = vmatpush2.msra.mxu0 0.0
        %6041 = vmatprep.subr.mxu0 0.0
        %6042 = vmatpush2.msra.mxu0 0.0
        %6043 = vmatprep.subr.mxu0 0.0
        %6044 = vmatpush2.msra.mxu0 0.0
        %6045 = vmatprep.subr.mxu0 0.0
        %6046 = vmatpush2.msra.mxu0 0.0
        %6047 = vmatprep.subr.mxu0 0.0
        %6048 = vmatpush2.msra.mxu0 0.0
        %6049 = vmatprep.mubr.f32.mxu0 0.0
        %v6050 = vand.u32 %v5669, 4294901760
        %v6051 = vsub.f32 %v5669, %v6050
        %v6052 = vand.u32 %v6051, 4294901760
        %6053 = vmatmul.mubr.f32.gmra.mxu0 %v6052
        %v6054 = vpop.f32.mrf.mxu0
        %v6055 = vadd.f32 %v5959, %v6054
        %v6056 = vpop.f32.mrf.mxu0
        %6057 = vmatprep.mubr.f32.mxu0 0.0
        %v6058 = vand.u32 %v5672, 4294901760
        %v6059 = vsub.f32 %v5672, %v6058
        %v6060 = vand.u32 %v6059, 4294901760
        %6061 = vmatmul.mubr.f32.gmra.mxu0 %v6060
        %v6062 = vpop.f32.mrf.mxu0
        %v6063 = vadd.f32 %v5966, %v6062
        %v6064 = vpop.f32.mrf.mxu0
        %6065 = vmatprep.mubr.f32.mxu0 0.0
        %v6066 = vand.u32 %v5675, 4294901760
        %v6067 = vsub.f32 %v5675, %v6066
        %v6068 = vand.u32 %v6067, 4294901760
        %6069 = vmatmul.mubr.f32.gmra.mxu0 %v6068
        %v6070 = vpop.f32.mrf.mxu0
        %v6071 = vadd.f32 %v5973, %v6070
        %v6072 = vpop.f32.mrf.mxu0
        %6073 = vmatprep.mubr.f32.mxu0 0.0
        %v6074 = vand.u32 %v5678, 4294901760
        %v6075 = vsub.f32 %v5678, %v6074
        %v6076 = vand.u32 %v6075, 4294901760
        %6077 = vmatmul.mubr.f32.gmra.mxu0 %v6076
        %v6078 = vpop.f32.mrf.mxu0
        %v6079 = vadd.f32 %v5980, %v6078
        %v6080 = vpop.f32.mrf.mxu0
        %6081 = vdwg.mxu0
        %6082 = vmatprep.subr.mxu0 0.0
        %6083 = vmatpush1.msra.mxu0 0.0
        %6084 = vmatprep.subr.mxu0 0.0
        %6085 = vmatpush1.msra.mxu0 0.0
        %6086 = vmatprep.subr.mxu0 0.0
        %6087 = vmatpush1.msra.mxu0 0.0
        %6088 = vmatprep.subr.mxu0 0.0
        %6089 = vmatpush1.msra.mxu0 0.0
        %6090 = vmatprep.subr.mxu0 0.0
        %6091 = vmatpush1.msra.mxu0 0.0
        %6092 = vmatprep.subr.mxu0 0.0
        %6093 = vmatpush1.msra.mxu0 0.0
        %6094 = vmatprep.subr.mxu0 0.0
        %6095 = vmatpush1.msra.mxu0 0.0
        %6096 = vmatprep.subr.mxu0 0.0
        %6097 = vmatpush1.msra.mxu0 0.0
        %6098 = vmatprep.subr.mxu0 0.0
        %6099 = vmatpush1.msra.mxu0 0.0
        %6100 = vmatprep.subr.mxu0 0.0
        %6101 = vmatpush1.msra.mxu0 0.0
        %6102 = vmatprep.subr.mxu0 0.0
        %6103 = vmatpush1.msra.mxu0 0.0
        %6104 = vmatprep.subr.mxu0 0.0
        %6105 = vmatpush1.msra.mxu0 0.0
        %6106 = vmatprep.subr.mxu0 0.0
        %6107 = vmatpush1.msra.mxu0 0.0
        %6108 = vmatprep.subr.mxu0 0.0
        %6109 = vmatpush1.msra.mxu0 0.0
        %6110 = vmatprep.subr.mxu0 0.0
        %v6111 = vand.u32 %v4453, 4294901760
        %v6112 = vsub.f32 %v4453, %v6111
        %v6113 = vand.u32 %v6112, 4294901760
        %6114 = vmatpush1.msra.mxu0 %v6113
        %6115 = vmatprep.subr.mxu0 0.0
        %v6116 = vand.u32 %v4450, 4294901760
        %v6117 = vsub.f32 %v4450, %v6116
        %v6118 = vand.u32 %v6117, 4294901760
        %6119 = vmatpush1.msra.mxu0 %v6118
        %6120 = vmatprep.subr.mxu0 0.0
        %6121 = vmatpush2.msra.mxu0 0.0
        %6122 = vmatprep.subr.mxu0 0.0
        %6123 = vmatpush2.msra.mxu0 0.0
        %6124 = vmatprep.subr.mxu0 0.0
        %6125 = vmatpush2.msra.mxu0 0.0
        %6126 = vmatprep.subr.mxu0 0.0
        %6127 = vmatpush2.msra.mxu0 0.0
        %6128 = vmatprep.subr.mxu0 0.0
        %6129 = vmatpush2.msra.mxu0 0.0
        %6130 = vmatprep.subr.mxu0 0.0
        %6131 = vmatpush2.msra.mxu0 0.0
        %6132 = vmatprep.subr.mxu0 0.0
        %6133 = vmatpush2.msra.mxu0 0.0
        %6134 = vmatprep.subr.mxu0 0.0
        %6135 = vmatpush2.msra.mxu0 0.0
        %6136 = vmatprep.subr.mxu0 0.0
        %6137 = vmatpush2.msra.mxu0 0.0
        %6138 = vmatprep.subr.mxu0 0.0
        %6139 = vmatpush2.msra.mxu0 0.0
        %6140 = vmatprep.subr.mxu0 0.0
        %6141 = vmatpush2.msra.mxu0 0.0
        %6142 = vmatprep.subr.mxu0 0.0
        %6143 = vmatpush2.msra.mxu0 0.0
        %6144 = vmatprep.subr.mxu0 0.0
        %6145 = vmatpush2.msra.mxu0 0.0
        %6146 = vmatprep.subr.mxu0 0.0
        %6147 = vmatpush2.msra.mxu0 0.0
        %6148 = vmatprep.subr.mxu0 0.0
        %6149 = vmatpush2.msra.mxu0 0.0
        %6150 = vmatprep.subr.mxu0 0.0
        %6151 = vmatpush2.msra.mxu0 0.0
        %6152 = vmatprep.mubr.f32.mxu0 0.0
        %v6153 = vand.u32 %v5669, 4294901760
        %6154 = vmatmul.mubr.f32.gmra.mxu0 %v6153
        %v6155 = vpop.f32.mrf.mxu0
        %v6156 = vadd.f32 %v6055, %v6155
        %v6157 = vpop.f32.mrf.mxu0
        %6158 = vmatprep.mubr.f32.mxu0 0.0
        %v6159 = vand.u32 %v5672, 4294901760
        %6160 = vmatmul.mubr.f32.gmra.mxu0 %v6159
        %v6161 = vpop.f32.mrf.mxu0
        %v6162 = vadd.f32 %v6063, %v6161
        %v6163 = vpop.f32.mrf.mxu0
        %6164 = vmatprep.mubr.f32.mxu0 0.0
        %v6165 = vand.u32 %v5675, 4294901760
        %6166 = vmatmul.mubr.f32.gmra.mxu0 %v6165
        %v6167 = vpop.f32.mrf.mxu0
        %v6168 = vadd.f32 %v6071, %v6167
        %v6169 = vpop.f32.mrf.mxu0
        %6170 = vmatprep.mubr.f32.mxu0 0.0
        %v6171 = vand.u32 %v5678, 4294901760
        %6172 = vmatmul.mubr.f32.gmra.mxu0 %v6171
        %v6173 = vpop.f32.mrf.mxu0
        %v6174 = vadd.f32 %v6079, %v6173
        %v6175 = vpop.f32.mrf.mxu0
        %6176 = vdwg.mxu0
        %6177 = vmatprep.subr.mxu0 0.0
        %6178 = vmatpush1.msra.mxu0 0.0
        %6179 = vmatprep.subr.mxu0 0.0
        %6180 = vmatpush1.msra.mxu0 0.0
        %6181 = vmatprep.subr.mxu0 0.0
        %6182 = vmatpush1.msra.mxu0 0.0
        %6183 = vmatprep.subr.mxu0 0.0
        %6184 = vmatpush1.msra.mxu0 0.0
        %6185 = vmatprep.subr.mxu0 0.0
        %6186 = vmatpush1.msra.mxu0 0.0
        %6187 = vmatprep.subr.mxu0 0.0
        %6188 = vmatpush1.msra.mxu0 0.0
        %6189 = vmatprep.subr.mxu0 0.0
        %6190 = vmatpush1.msra.mxu0 0.0
        %6191 = vmatprep.subr.mxu0 0.0
        %6192 = vmatpush1.msra.mxu0 0.0
        %6193 = vmatprep.subr.mxu0 0.0
        %6194 = vmatpush1.msra.mxu0 0.0
        %6195 = vmatprep.subr.mxu0 0.0
        %6196 = vmatpush1.msra.mxu0 0.0
        %6197 = vmatprep.subr.mxu0 0.0
        %6198 = vmatpush1.msra.mxu0 0.0
        %6199 = vmatprep.subr.mxu0 0.0
        %6200 = vmatpush1.msra.mxu0 0.0
        %6201 = vmatprep.subr.mxu0 0.0
        %6202 = vmatpush1.msra.mxu0 0.0
        %6203 = vmatprep.subr.mxu0 0.0
        %6204 = vmatpush1.msra.mxu0 0.0
        %6205 = vmatprep.subr.mxu0 0.0
        %v6206 = vand.u32 %v4453, 4294901760
        %6207 = vmatpush1.msra.mxu0 %v6206
        %6208 = vmatprep.subr.mxu0 0.0
        %v6209 = vand.u32 %v4450, 4294901760
        %6210 = vmatpush1.msra.mxu0 %v6209
        %6211 = vmatprep.subr.mxu0 0.0
        %6212 = vmatpush2.msra.mxu0 0.0
        %6213 = vmatprep.subr.mxu0 0.0
        %6214 = vmatpush2.msra.mxu0 0.0
        %6215 = vmatprep.subr.mxu0 0.0
        %6216 = vmatpush2.msra.mxu0 0.0
        %6217 = vmatprep.subr.mxu0 0.0
        %6218 = vmatpush2.msra.mxu0 0.0
        %6219 = vmatprep.subr.mxu0 0.0
        %6220 = vmatpush2.msra.mxu0 0.0
        %6221 = vmatprep.subr.mxu0 0.0
        %6222 = vmatpush2.msra.mxu0 0.0
        %6223 = vmatprep.subr.mxu0 0.0
        %6224 = vmatpush2.msra.mxu0 0.0
        %6225 = vmatprep.subr.mxu0 0.0
        %6226 = vmatpush2.msra.mxu0 0.0
        %6227 = vmatprep.subr.mxu0 0.0
        %6228 = vmatpush2.msra.mxu0 0.0
        %6229 = vmatprep.subr.mxu0 0.0
        %6230 = vmatpush2.msra.mxu0 0.0
        %6231 = vmatprep.subr.mxu0 0.0
        %6232 = vmatpush2.msra.mxu0 0.0
        %6233 = vmatprep.subr.mxu0 0.0
        %6234 = vmatpush2.msra.mxu0 0.0
        %6235 = vmatprep.subr.mxu0 0.0
        %6236 = vmatpush2.msra.mxu0 0.0
        %6237 = vmatprep.subr.mxu0 0.0
        %6238 = vmatpush2.msra.mxu0 0.0
        %6239 = vmatprep.subr.mxu0 0.0
        %6240 = vmatpush2.msra.mxu0 0.0
        %6241 = vmatprep.subr.mxu0 0.0
        %6242 = vmatpush2.msra.mxu0 0.0
        %6243 = vmatprep.mubr.f32.mxu0 0.0
        %v6244 = vand.u32 %v5669, 4294901760
        %6245 = vmatmul.mubr.f32.gmra.mxu0 %v6244
        %v6246 = vpop.f32.mrf.mxu0
        %v6247 = vadd.f32 %v6156, %v6246
        %v6248 = vpop.f32.mrf.mxu0
        %6249 = vmatprep.mubr.f32.mxu0 0.0
        %v6250 = vand.u32 %v5672, 4294901760
        %6251 = vmatmul.mubr.f32.gmra.mxu0 %v6250
        %v6252 = vpop.f32.mrf.mxu0
        %v6253 = vadd.f32 %v6162, %v6252
        %v6254 = vpop.f32.mrf.mxu0
        %6255 = vmatprep.mubr.f32.mxu0 0.0
        %v6256 = vand.u32 %v5675, 4294901760
        %6257 = vmatmul.mubr.f32.gmra.mxu0 %v6256
        %v6258 = vpop.f32.mrf.mxu0
        %v6259 = vadd.f32 %v6168, %v6258
        %v6260 = vpop.f32.mrf.mxu0
        %6261 = vmatprep.mubr.f32.mxu0 0.0
        %v6262 = vand.u32 %v5678, 4294901760
        %6263 = vmatmul.mubr.f32.gmra.mxu0 %v6262
        %v6264 = vpop.f32.mrf.mxu0
        %v6265 = vadd.f32 %v6174, %v6264
        %v6266 = vpop.f32.mrf.mxu0
        %6267 = vdwg.mxu0
        %v6268 = vadd.f32 %v5642, %v6247
        %v6269 = vadd.f32 %v5648, %v6253
        %v6270 = vadd.f32 %v5654, %v6259
        %v6271 = vadd.f32 %v5660, %v6265
        %v6272 = vld [vmem:[%s3] sm:$0x1]
        %v6274 = vlaneseq
        %v6275 = vshrl.u32 %v6274, 7
        %v6276 = vsub.s32 0, %v6275
        %v6277 = vrot.slane %v6272, %v6276
        %v6279 = vadd.f32 %v6268, %v6277
        %v6280 = vadd.f32 %v6269, %v6277
        %v6281 = vadd.f32 %v6270, %v6277
        %v6282 = vadd.f32 %v6271, %v6277
        %6283 = vst [vmem:[%s205] sm:$0xff] %v6279
        %6284 = vst [vmem:[%s205 + $0x8] sm:$0xff] %v6280
        %6285 = vst [vmem:[%s205 + $0x10] sm:$0xff] %v6281
        %6286 = vst [vmem:[%s205 + $0x18] sm:$0xff] %v6282
        %s6287 = sand.u32 %s116, 1
        %s6288 = scalar_lea.sflag [#allocation4], %s6287
        %s6289 = sand.u32 %s116, 1
        %s6290 = smul.addr %s6289, 32
        %s6291 = scalar_lea.vmem [#allocation5], %s6290
        // Predicated region
        $region41: #{tpu_custom_call.1} parent=35 // pred_check
          %p6292 = pneg %p126
        $region42: #{tpu_custom_call.1} parent=35 // pred_check_branch
          %6294 = sbr.rel (%p6292) target = $region44
        $region43: #{tpu_custom_call.1} parent=35 // pred_region
          %s6296 = ssub.s32 512, 512
          %6297 = vsyncadd %s6288, %s6296
          %s6298 = smul.addr %s19, 4
          %s6299 = smul.addr %s6298, 128
          %s6300 = scalar_lea.hbm %s4, %s6299
          %s6301 = sshll.u32 %s6291, 4
          %s6302 = int_to_ptr.vmem [resolvable:$true] %s6301
          %6307 = dma.vmem_to_hbm [thread:$0]  %s6302, 512, %s6300, %s6288, 128, 128, 8
        $region44: #{tpu_custom_call.1} parent=35 // pred_fallthru
          _
      $region36: #{tpu_custom_call.1} parent=5 // pred_fallthru
        _
      %p6308 = scmp.le.s32.totalorder 2, %s14
      // Predicated region
      $region45: #{tpu_custom_call.1} parent=5 // pred_check
        %p6309 = pneg %p6308
      $region46: #{tpu_custom_call.1} parent=5 // pred_check_branch
        %6311 = sbr.rel (%p6309) target = $region48
      $region47: #{tpu_custom_call.1} parent=5 // pred_region
        %s6312 = ssub.s32 %s14, 2
        // Predicated region
        $region49: #{tpu_custom_call.1} parent=47 // pred_check
          %p6313 = pneg %p132
        $region50: #{tpu_custom_call.1} parent=47 // pred_check_branch
          %6315 = sbr.rel (%p6313) target = $region52
        $region51: #{tpu_custom_call.1} parent=47 // pred_region
          %s6316 = sand.u32 %s117, 1
          %s6317 = scalar_lea.sflag [#allocation4], %s6316
          %s6318 = sand.u32 %s117, 1
          %s6319 = smul.addr %s6318, 32
          %s6320 = scalar_lea.vmem [#allocation5], %s6319
          %6321 = dma.done %s6317, 512
        $region52: #{tpu_custom_call.1} parent=47 // pred_fallthru
          _
      $region48: #{tpu_custom_call.1} parent=5 // pred_fallthru
        _
    $region6: #{tpu_custom_call.1} parent=1 // loop_footer
      %s18 = sadd.s32 1, %s14
    $region7: #{tpu_custom_call.1} parent=1 // loop_footer_branch
      %13 = sbr.rel target = $region3
    $region8: #{tpu_custom_call.1} parent=1 // loop_exit
      _
    %6322 = vsyncpa [#allocation3], 1
    %s6323 = scalar_lea.sflag [#allocation3], 1
    %6324 = vsyncpa %s6323, 1
    %6325 = vsyncpa [#allocation4], 1
    %s6326 = scalar_lea.sflag [#allocation4], 1
    %6327 = vsyncpa %s6326, 1

</llo_original>
